<compile_context>
chip_gen: v7x
topology: tpu7x:2x2x1
jax: 0.10.0
libtpu: 0.0.40
codegen_flags: <defaults>
</compile_context>

<pallas_src>
import functools

import jax
import jax.numpy as jnp
import numpy as np
from jax.experimental import pallas as pl
from jax.experimental.pallas import tpu as pltpu

LANE = 128
SUBLANE = 8


def _round_up(x, m):
    return (x + m - 1) // m * m


def lstm_fc_kernel(x_ref, wih1_ref, whh1_ref, b1_ref,
                   w2_ref, b2_ref, wfc_ref, bfc_ref,
                   out_ref, xg_ref):
    TB = x_ref.shape[0]        # T * B_pad (time-major)
    Hp = whh1_ref.shape[0]     # padded hidden (multiple of 128)
    Bp = out_ref.shape[0]      # padded batch  (multiple of 8)
    T = TB // Bp

    # ---- Phase 1 (off the serial critical path): layer-0 input projection
    # for ALL timesteps as a single MXU op, bias folded in, kept in VMEM. ----
    xg_ref[...] = (
        jnp.dot(x_ref[...], wih1_ref[...], preferred_element_type=jnp.float32)
        + b1_ref[...])                                        # (T*Bp, 4Hp)

    whh1 = whh1_ref[...]                                      # (Hp, 4Hp)
    w2 = w2_ref[...]                                          # (2Hp, 4Hp) fused
    b2 = jnp.broadcast_to(b2_ref[...], (Bp, 4 * Hp))          # hoisted broadcast

    def gates_to_hc(gates, c):
        # Gate slices are 128-lane aligned (Hp is a multiple of 128).
        i = jax.nn.sigmoid(gates[:, 0 * Hp:1 * Hp])
        f = jax.nn.sigmoid(gates[:, 1 * Hp:2 * Hp])
        g = jnp.tanh(gates[:, 2 * Hp:3 * Hp])
        o = jax.nn.sigmoid(gates[:, 3 * Hp:4 * Hp])
        c_new = f * c + i * g
        h_new = o * jnp.tanh(c_new)
        return h_new, c_new

    def step(t, carry):
        h1, c1, h2, c2 = carry
        row = pl.multiple_of(t * Bp, Bp)
        # Layer 0: only the recurrent matmul remains on the critical path.
        g1 = xg_ref[pl.ds(row, Bp), :] + jnp.dot(
            h1, whh1, preferred_element_type=jnp.float32)
        h1, c1 = gates_to_hc(g1, c1)
        # Layer 1: input + recurrent matmuls fused into one MXU op.
        hh = jnp.concatenate([h1, h2], axis=1)                # (Bp, 2Hp)
        g2 = jnp.dot(hh, w2, preferred_element_type=jnp.float32) + b2
        h2, c2 = gates_to_hc(g2, c2)
        return (h1, c1, h2, c2)

    zeros = jnp.zeros((Bp, Hp), jnp.float32)
    carry = (zeros, zeros, zeros, zeros)          # h0 = c0 = 0 (both layers)
    unroll = True if T <= 16 else 4               # full unroll only for small T
    _, _, h2, _ = jax.lax.fori_loop(0, T, step, carry, unroll=unroll)

    # fc applied to out[:, -1, :] == final hidden state of the top layer.
    # Output is (Bp, Op) with Op a multiple of 128 -> lane-dense store.
    out_ref[...] = (jnp.dot(h2, wfc_ref[...], preferred_element_type=jnp.float32)
                    + bfc_ref[...])


@functools.partial(jax.jit, static_argnames=("output_dim",))
def rnn_forward(x, params, *, output_dim):
    """x: (B, T, D) float32 -> (B, output_dim) float32."""
    B, T, D = x.shape
    Hp = params["whh1"].shape[0]
    Op = params["wfc"].shape[1]
    Bp = _round_up(max(B, SUBLANE), SUBLANE)

    # Pad batch to the 8-sublane tile, lay x out time-major so the kernel can
    # take per-step (Bp, 4Hp) row slabs of the precomputed projection.
    # TODO(synk): for large T*B*D, stream x over a T grid (BlockSpec) instead
    # of a wrapper transpose + fully-resident VMEM block, and on v7x shard a
    # "parallel" batch grid axis across the two TensorCores once Bp >= 16.
    x_p = jnp.pad(x.astype(jnp.float32), ((0, Bp - B), (0, 0), (0, 0)))
    x_tb = jnp.transpose(x_p, (1, 0, 2)).reshape(T * Bp, D)

    vmem = pl.BlockSpec(memory_space=pltpu.MemorySpace.VMEM)
    out = pl.pallas_call(
        lstm_fc_kernel,
        out_shape=jax.ShapeDtypeStruct((Bp, Op), jnp.float32),
        in_specs=[vmem] * 8,
        out_specs=vmem,
        scratch_shapes=[pltpu.VMEM((T * Bp, 4 * Hp), jnp.float32)],
    )(x_tb,
      params["wih1"], params["whh1"], params["b1"],
      params["w2"], params["b2"],
      params["wfc"], params["bfc"])
    return out[:B, :output_dim]


def init_params(key, input_dim, hidden_dim, output_dim):
    """PyTorch-style init U(-1/sqrt(H), 1/sqrt(H)).

    Returns (kernel_params, ref_params): padded/fused layout for the kernel,
    plain transposed layout for the pure-JAX reference.
    """
    D, H, O = input_dim, hidden_dim, output_dim
    k = 1.0 / np.sqrt(H)
    keys = jax.random.split(key, 10)

    def u(kk, shape):
        return jax.random.uniform(kk, shape, jnp.float32, minval=-k, maxval=k)

    H4 = 4 * H
    wih1 = u(keys[0], (H4, D));  whh1 = u(keys[1], (H4, H))
    bih1 = u(keys[2], (H4,));    bhh1 = u(keys[3], (H4,))
    wih2 = u(keys[4], (H4, H));  whh2 = u(keys[5], (H4, H))
    bih2 = u(keys[6], (H4,));    bhh2 = u(keys[7], (H4,))
    wfc = u(keys[8], (O, H));    bfc = u(keys[9], (O,))

    ref_params = {
        "wih1_T": wih1.T, "whh1_T": whh1.T, "b1": (bih1 + bhh1)[None, :],
        "wih2_T": wih2.T, "whh2_T": whh2.T, "b2": (bih2 + bhh2)[None, :],
        "wfc_T": wfc.T, "bfc": bfc[None, :],
    }

    # --- padded / fused kernel layout (built once, at init time) ---
    Hp = _round_up(H, LANE)     # each gate padded to a full 128-lane vreg
    Op = _round_up(O, LANE)     # lane-dense fc output

    def pad_gate_cols(w_T, rows_pad):
        # w_T: (K, 4H) gate-blocked [i|f|g|o] -> (rows_pad, 4Hp), zero padded.
        K = w_T.shape[0]
        out = np.zeros((rows_pad, 4 * Hp), np.float32)
        wt = np.asarray(w_T)
        for g in range(4):
            out[:K, g * Hp:g * Hp + H] = wt[:, g * H:(g + 1) * H]
        return jnp.asarray(out)

    def pad_gate_bias(b):
        out = np.zeros((4 * Hp,), np.float32)
        bn = np.asarray(b)
        for g in range(4):
            out[g * Hp:g * Hp + H] = bn[g * H:(g + 1) * H]
        return jnp.asarray(out)[None, :]

    wih1_p = pad_gate_cols(ref_params["wih1_T"], D)      # (D,  4Hp)
    whh1_p = pad_gate_cols(ref_params["whh1_T"], Hp)     # (Hp, 4Hp)
    wih2_p = pad_gate_cols(ref_params["wih2_T"], Hp)     # (Hp, 4Hp)
    whh2_p = pad_gate_cols(ref_params["whh2_T"], Hp)     # (Hp, 4Hp)
    w2 = jnp.concatenate([wih2_p, whh2_p], axis=0)       # (2Hp, 4Hp), fused

    wfc_p = np.zeros((Hp, Op), np.float32)
    wfc_p[:H, :O] = np.asarray(ref_params["wfc_T"])
    bfc_p = np.zeros((Op,), np.float32)
    bfc_p[:O] = np.asarray(bfc)

    kernel_params = {
        "wih1": wih1_p, "whh1": whh1_p, "b1": pad_gate_bias(bih1 + bhh1),
        "w2": w2, "b2": pad_gate_bias(bih2 + bhh2),
        "wfc": jnp.asarray(wfc_p), "bfc": jnp.asarray(bfc_p)[None, :],
    }
    return kernel_params, ref_params


def rnn_forward_ref(x, params):
    """Pure-JAX reference (same math, unpadded) for correctness checking."""
    B, T, D = x.shape
    H = params["whh1_T"].shape[0]

    def cell(xt, h, c, wih, whh, b):
        gates = xt @ wih + h @ whh + b
        i = jax.nn.sigmoid(gates[:, 0 * H:1 * H])
        f = jax.nn.sigmoid(gates[:, 1 * H:2 * H])
        g = jnp.tanh(gates[:, 2 * H:3 * H])
        o = jax.nn.sigmoid(gates[:, 3 * H:4 * H])
        c_new = f * c + i * g
        return o * jnp.tanh(c_new), c_new

    h1 = c1 = h2 = c2 = jnp.zeros((B, H), jnp.float32)
    for t in range(T):
        xt = x[:, t, :]
        h1, c1 = cell(xt, h1, c1, params["wih1_T"], params["whh1_T"], params["b1"])
        h2, c2 = cell(h1, h2, c2, params["wih2_T"], params["whh2_T"], params["b2"])
    return h2 @ params["wfc_T"] + params["bfc"]


if __name__ == "__main__":
    B, T, D, H, O = 2, 8, 16, 32, 8
    key = jax.random.PRNGKey(0)
    kx, kp = jax.random.split(key)
    x = jax.random.normal(kx, (B, T, D), jnp.float32)
    kernel_params, ref_params = init_params(kp, D, H, O)

    out = rnn_forward(x, kernel_params, output_dim=O)
    out = jax.block_until_ready(out)

    ref = rnn_forward_ref(x, ref_params)
    np.testing.assert_allclose(np.asarray(out), np.asarray(ref),
                               rtol=1e-5, atol=1e-5)
    print("KERNEL_OK")
</pallas_src>

<mosaic_0001>
module attributes {stable_mosaic.version = 11 : i64} {
  func.func @lstm_fc_kernel(%arg0: memref<64x16xf32, #tpu.memory_space<vmem>>, %arg1: memref<16x512xf32, #tpu.memory_space<vmem>>, %arg2: memref<128x512xf32, #tpu.memory_space<vmem>>, %arg3: memref<1x512xf32, #tpu.memory_space<vmem>>, %arg4: memref<256x512xf32, #tpu.memory_space<vmem>>, %arg5: memref<1x512xf32, #tpu.memory_space<vmem>>, %arg6: memref<128x128xf32, #tpu.memory_space<vmem>>, %arg7: memref<1x128xf32, #tpu.memory_space<vmem>>, %arg8: memref<8x128xf32, #tpu.memory_space<vmem>>, %arg9: memref<64x512xf32, #tpu.memory_space<vmem>>) attributes {dimension_semantics = [], scalar_prefetch = 0 : i64, scratch_operands = 1 : i64, tpu.core_type = #tpu.core_type<tc>} {
    %c0 = arith.constant 0 : index
    %c0_0 = arith.constant 0 : index
    %0 = vector.load %arg0[%c0, %c0_0] : memref<64x16xf32, #tpu.memory_space<vmem>>, vector<64x16xf32>
    %c0_1 = arith.constant 0 : index
    %c0_2 = arith.constant 0 : index
    %1 = vector.load %arg1[%c0_1, %c0_2] : memref<16x512xf32, #tpu.memory_space<vmem>>, vector<16x512xf32>
    %cst = arith.constant dense<0.000000e+00> : vector<64x512xf32>
    %2 = tpu.matmul %0, %1, %cst {dimension_numbers = #tpu.dot_dimension_numbers<[1], [0], [0], [1], [0, 0, 1, 1], [], []>} : vector<64x16xf32>, vector<16x512xf32>, vector<64x512xf32> -> vector<64x512xf32>
    %c0_3 = arith.constant 0 : index
    %c0_4 = arith.constant 0 : index
    %3 = vector.load %arg3[%c0_3, %c0_4] : memref<1x512xf32, #tpu.memory_space<vmem>>, vector<1x512xf32>
    %4 = vector.broadcast %3 : vector<1x512xf32> to vector<64x512xf32>
    %5 = arith.addf %2, %4 : vector<64x512xf32>
    %c0_5 = arith.constant 0 : index
    %c0_6 = arith.constant 0 : index
    %6 = vector.load %arg9[%c0_5, %c0_6] : memref<64x512xf32, #tpu.memory_space<vmem>>, vector<64x512xf32>
    tpu.vector_store %arg9[%c0_5, %c0_6], %5 {strides = array<i32>} : memref<64x512xf32, #tpu.memory_space<vmem>>, vector<64x512xf32>,
    %c0_7 = arith.constant 0 : index
    %c0_8 = arith.constant 0 : index
    %7 = vector.load %arg2[%c0_7, %c0_8] : memref<128x512xf32, #tpu.memory_space<vmem>>, vector<128x512xf32>
    %c0_9 = arith.constant 0 : index
    %c0_10 = arith.constant 0 : index
    %8 = vector.load %arg4[%c0_9, %c0_10] : memref<256x512xf32, #tpu.memory_space<vmem>>, vector<256x512xf32>
    %c0_11 = arith.constant 0 : index
    %c0_12 = arith.constant 0 : index
    %9 = vector.load %arg5[%c0_11, %c0_12] : memref<1x512xf32, #tpu.memory_space<vmem>>, vector<1x512xf32>
    %10 = vector.shape_cast %9 : vector<1x512xf32> to vector<1x512xf32>
    %11 = vector.broadcast %10 : vector<1x512xf32> to vector<8x512xf32>
    %cst_13 = arith.constant 0.000000e+00 : f32
    %12 = vector.broadcast %cst_13 : f32 to vector<8x128xf32>
    %c0_i32 = arith.constant 0 : i32
    %c8_i32 = arith.constant 8 : i32
    %13 = arith.muli %c0_i32, %c8_i32 : i32
    %14 = tpu.assume_multiple %13, 8 : i32
    %15 = arith.index_cast %14 : i32 to index
    %c0_14 = arith.constant 0 : index
    %16 = vector.load %arg9[%15, %c0_14] : memref<64x512xf32, #tpu.memory_space<vmem>>, vector<8x512xf32>
    %cst_15 = arith.constant dense<0.000000e+00> : vector<8x512xf32>
    %17 = tpu.matmul %12, %7, %cst_15 {dimension_numbers = #tpu.dot_dimension_numbers<[1], [0], [0], [1], [0, 0, 1, 1], [], []>} : vector<8x128xf32>, vector<128x512xf32>, vector<8x512xf32> -> vector<8x512xf32>
    %18 = arith.addf %16, %17 : vector<8x512xf32>
    %19 = vector.extract_strided_slice %18 {offsets = [0, 0], sizes = [8, 128], strides = [1, 1]} : vector<8x512xf32> to vector<8x128xf32>
    %20 = arith.negf %19 : vector<8x128xf32>
    %21 = math.exp %20 : vector<8x128xf32>
    %cst_16 = arith.constant 1.000000e+00 : f32
    %22 = vector.broadcast %cst_16 : f32 to vector<8x128xf32>
    %23 = arith.addf %22, %21 : vector<8x128xf32>
    %24 = arith.divf %22, %23 : vector<8x128xf32>
    %25 = vector.extract_strided_slice %18 {offsets = [0, 128], sizes = [8, 128], strides = [1, 1]} : vector<8x512xf32> to vector<8x128xf32>
    %26 = arith.negf %25 : vector<8x128xf32>
    %27 = math.exp %26 : vector<8x128xf32>
    %cst_17 = arith.constant 1.000000e+00 : f32
    %28 = vector.broadcast %cst_17 : f32 to vector<8x128xf32>
    %29 = arith.addf %28, %27 : vector<8x128xf32>
    %30 = arith.divf %28, %29 : vector<8x128xf32>
    %31 = vector.extract_strided_slice %18 {offsets = [0, 256], sizes = [8, 128], strides = [1, 1]} : vector<8x512xf32> to vector<8x128xf32>
    %32 = math.tanh %31 : vector<8x128xf32>
    %33 = vector.extract_strided_slice %18 {offsets = [0, 384], sizes = [8, 128], strides = [1, 1]} : vector<8x512xf32> to vector<8x128xf32>
    %34 = arith.negf %33 : vector<8x128xf32>
    %35 = math.exp %34 : vector<8x128xf32>
    %cst_18 = arith.constant 1.000000e+00 : f32
    %36 = vector.broadcast %cst_18 : f32 to vector<8x128xf32>
    %37 = arith.addf %36, %35 : vector<8x128xf32>
    %38 = arith.divf %36, %37 : vector<8x128xf32>
    %39 = arith.mulf %30, %12 : vector<8x128xf32>
    %40 = arith.mulf %24, %32 : vector<8x128xf32>
    %41 = arith.addf %39, %40 : vector<8x128xf32>
    %42 = math.tanh %41 : vector<8x128xf32>
    %43 = arith.mulf %38, %42 : vector<8x128xf32>
    %44 = tpu.concatenate %43, %12 in 1 : vector<8x128xf32>, vector<8x128xf32> -> vector<8x256xf32>
    %cst_19 = arith.constant dense<0.000000e+00> : vector<8x512xf32>
    %45 = tpu.matmul %44, %8, %cst_19 {dimension_numbers = #tpu.dot_dimension_numbers<[1], [0], [0], [1], [0, 0, 1, 1], [], []>} : vector<8x256xf32>, vector<256x512xf32>, vector<8x512xf32> -> vector<8x512xf32>
    %46 = arith.addf %45, %11 : vector<8x512xf32>
    %47 = vector.extract_strided_slice %46 {offsets = [0, 0], sizes = [8, 128], strides = [1, 1]} : vector<8x512xf32> to vector<8x128xf32>
    %48 = arith.negf %47 : vector<8x128xf32>
    %49 = math.exp %48 : vector<8x128xf32>
    %cst_20 = arith.constant 1.000000e+00 : f32
    %50 = vector.broadcast %cst_20 : f32 to vector<8x128xf32>
    %51 = arith.addf %50, %49 : vector<8x128xf32>
    %52 = arith.divf %50, %51 : vector<8x128xf32>
    %53 = vector.extract_strided_slice %46 {offsets = [0, 128], sizes = [8, 128], strides = [1, 1]} : vector<8x512xf32> to vector<8x128xf32>
    %54 = arith.negf %53 : vector<8x128xf32>
    %55 = math.exp %54 : vector<8x128xf32>
    %cst_21 = arith.constant 1.000000e+00 : f32
    %56 = vector.broadcast %cst_21 : f32 to vector<8x128xf32>
    %57 = arith.addf %56, %55 : vector<8x128xf32>
    %58 = arith.divf %56, %57 : vector<8x128xf32>
    %59 = vector.extract_strided_slice %46 {offsets = [0, 256], sizes = [8, 128], strides = [1, 1]} : vector<8x512xf32> to vector<8x128xf32>
    %60 = math.tanh %59 : vector<8x128xf32>
    %61 = vector.extract_strided_slice %46 {offsets = [0, 384], sizes = [8, 128], strides = [1, 1]} : vector<8x512xf32> to vector<8x128xf32>
    %62 = arith.negf %61 : vector<8x128xf32>
    %63 = math.exp %62 : vector<8x128xf32>
    %cst_22 = arith.constant 1.000000e+00 : f32
    %64 = vector.broadcast %cst_22 : f32 to vector<8x128xf32>
    %65 = arith.addf %64, %63 : vector<8x128xf32>
    %66 = arith.divf %64, %65 : vector<8x128xf32>
    %67 = arith.mulf %58, %12 : vector<8x128xf32>
    %68 = arith.mulf %52, %60 : vector<8x128xf32>
    %69 = arith.addf %67, %68 : vector<8x128xf32>
    %70 = math.tanh %69 : vector<8x128xf32>
    %71 = arith.mulf %66, %70 : vector<8x128xf32>
    %c1_i32 = arith.constant 1 : i32
    %c8_i32_23 = arith.constant 8 : i32
    %72 = arith.muli %c1_i32, %c8_i32_23 : i32
    %73 = tpu.assume_multiple %72, 8 : i32
    %74 = arith.index_cast %73 : i32 to index
    %c0_24 = arith.constant 0 : index
    %75 = vector.load %arg9[%74, %c0_24] : memref<64x512xf32, #tpu.memory_space<vmem>>, vector<8x512xf32>
    %cst_25 = arith.constant dense<0.000000e+00> : vector<8x512xf32>
    %76 = tpu.matmul %43, %7, %cst_25 {dimension_numbers = #tpu.dot_dimension_numbers<[1], [0], [0], [1], [0, 0, 1, 1], [], []>} : vector<8x128xf32>, vector<128x512xf32>, vector<8x512xf32> -> vector<8x512xf32>
    %77 = arith.addf %75, %76 : vector<8x512xf32>
    %78 = vector.extract_strided_slice %77 {offsets = [0, 0], sizes = [8, 128], strides = [1, 1]} : vector<8x512xf32> to vector<8x128xf32>
    %79 = arith.negf %78 : vector<8x128xf32>
    %80 = math.exp %79 : vector<8x128xf32>
    %cst_26 = arith.constant 1.000000e+00 : f32
    %81 = vector.broadcast %cst_26 : f32 to vector<8x128xf32>
    %82 = arith.addf %81, %80 : vector<8x128xf32>
    %83 = arith.divf %81, %82 : vector<8x128xf32>
    %84 = vector.extract_strided_slice %77 {offsets = [0, 128], sizes = [8, 128], strides = [1, 1]} : vector<8x512xf32> to vector<8x128xf32>
    %85 = arith.negf %84 : vector<8x128xf32>
    %86 = math.exp %85 : vector<8x128xf32>
    %cst_27 = arith.constant 1.000000e+00 : f32
    %87 = vector.broadcast %cst_27 : f32 to vector<8x128xf32>
    %88 = arith.addf %87, %86 : vector<8x128xf32>
    %89 = arith.divf %87, %88 : vector<8x128xf32>
    %90 = vector.extract_strided_slice %77 {offsets = [0, 256], sizes = [8, 128], strides = [1, 1]} : vector<8x512xf32> to vector<8x128xf32>
    %91 = math.tanh %90 : vector<8x128xf32>
    %92 = vector.extract_strided_slice %77 {offsets = [0, 384], sizes = [8, 128], strides = [1, 1]} : vector<8x512xf32> to vector<8x128xf32>
    %93 = arith.negf %92 : vector<8x128xf32>
    %94 = math.exp %93 : vector<8x128xf32>
    %cst_28 = arith.constant 1.000000e+00 : f32
    %95 = vector.broadcast %cst_28 : f32 to vector<8x128xf32>
    %96 = arith.addf %95, %94 : vector<8x128xf32>
    %97 = arith.divf %95, %96 : vector<8x128xf32>
    %98 = arith.mulf %89, %41 : vector<8x128xf32>
    %99 = arith.mulf %83, %91 : vector<8x128xf32>
    %100 = arith.addf %98, %99 : vector<8x128xf32>
    %101 = math.tanh %100 : vector<8x128xf32>
    %102 = arith.mulf %97, %101 : vector<8x128xf32>
    %103 = tpu.concatenate %102, %71 in 1 : vector<8x128xf32>, vector<8x128xf32> -> vector<8x256xf32>
    %cst_29 = arith.constant dense<0.000000e+00> : vector<8x512xf32>
    %104 = tpu.matmul %103, %8, %cst_29 {dimension_numbers = #tpu.dot_dimension_numbers<[1], [0], [0], [1], [0, 0, 1, 1], [], []>} : vector<8x256xf32>, vector<256x512xf32>, vector<8x512xf32> -> vector<8x512xf32>
    %105 = arith.addf %104, %11 : vector<8x512xf32>
    %106 = vector.extract_strided_slice %105 {offsets = [0, 0], sizes = [8, 128], strides = [1, 1]} : vector<8x512xf32> to vector<8x128xf32>
    %107 = arith.negf %106 : vector<8x128xf32>
    %108 = math.exp %107 : vector<8x128xf32>
    %cst_30 = arith.constant 1.000000e+00 : f32
    %109 = vector.broadcast %cst_30 : f32 to vector<8x128xf32>
    %110 = arith.addf %109, %108 : vector<8x128xf32>
    %111 = arith.divf %109, %110 : vector<8x128xf32>
    %112 = vector.extract_strided_slice %105 {offsets = [0, 128], sizes = [8, 128], strides = [1, 1]} : vector<8x512xf32> to vector<8x128xf32>
    %113 = arith.negf %112 : vector<8x128xf32>
    %114 = math.exp %113 : vector<8x128xf32>
    %cst_31 = arith.constant 1.000000e+00 : f32
    %115 = vector.broadcast %cst_31 : f32 to vector<8x128xf32>
    %116 = arith.addf %115, %114 : vector<8x128xf32>
    %117 = arith.divf %115, %116 : vector<8x128xf32>
    %118 = vector.extract_strided_slice %105 {offsets = [0, 256], sizes = [8, 128], strides = [1, 1]} : vector<8x512xf32> to vector<8x128xf32>
    %119 = math.tanh %118 : vector<8x128xf32>
    %120 = vector.extract_strided_slice %105 {offsets = [0, 384], sizes = [8, 128], strides = [1, 1]} : vector<8x512xf32> to vector<8x128xf32>
    %121 = arith.negf %120 : vector<8x128xf32>
    %122 = math.exp %121 : vector<8x128xf32>
    %cst_32 = arith.constant 1.000000e+00 : f32
    %123 = vector.broadcast %cst_32 : f32 to vector<8x128xf32>
    %124 = arith.addf %123, %122 : vector<8x128xf32>
    %125 = arith.divf %123, %124 : vector<8x128xf32>
    %126 = arith.mulf %117, %69 : vector<8x128xf32>
    %127 = arith.mulf %111, %119 : vector<8x128xf32>
    %128 = arith.addf %126, %127 : vector<8x128xf32>
    %129 = math.tanh %128 : vector<8x128xf32>
    %130 = arith.mulf %125, %129 : vector<8x128xf32>
    %c2_i32 = arith.constant 2 : i32
    %c8_i32_33 = arith.constant 8 : i32
    %131 = arith.muli %c2_i32, %c8_i32_33 : i32
    %132 = tpu.assume_multiple %131, 8 : i32
    %133 = arith.index_cast %132 : i32 to index
    %c0_34 = arith.constant 0 : index
    %134 = vector.load %arg9[%133, %c0_34] : memref<64x512xf32, #tpu.memory_space<vmem>>, vector<8x512xf32>
    %cst_35 = arith.constant dense<0.000000e+00> : vector<8x512xf32>
    %135 = tpu.matmul %102, %7, %cst_35 {dimension_numbers = #tpu.dot_dimension_numbers<[1], [0], [0], [1], [0, 0, 1, 1], [], []>} : vector<8x128xf32>, vector<128x512xf32>, vector<8x512xf32> -> vector<8x512xf32>
    %136 = arith.addf %134, %135 : vector<8x512xf32>
    %137 = vector.extract_strided_slice %136 {offsets = [0, 0], sizes = [8, 128], strides = [1, 1]} : vector<8x512xf32> to vector<8x128xf32>
    %138 = arith.negf %137 : vector<8x128xf32>
    %139 = math.exp %138 : vector<8x128xf32>
    %cst_36 = arith.constant 1.000000e+00 : f32
    %140 = vector.broadcast %cst_36 : f32 to vector<8x128xf32>
    %141 = arith.addf %140, %139 : vector<8x128xf32>
    %142 = arith.divf %140, %141 : vector<8x128xf32>
    %143 = vector.extract_strided_slice %136 {offsets = [0, 128], sizes = [8, 128], strides = [1, 1]} : vector<8x512xf32> to vector<8x128xf32>
    %144 = arith.negf %143 : vector<8x128xf32>
    %145 = math.exp %144 : vector<8x128xf32>
    %cst_37 = arith.constant 1.000000e+00 : f32
    %146 = vector.broadcast %cst_37 : f32 to vector<8x128xf32>
    %147 = arith.addf %146, %145 : vector<8x128xf32>
    %148 = arith.divf %146, %147 : vector<8x128xf32>
    %149 = vector.extract_strided_slice %136 {offsets = [0, 256], sizes = [8, 128], strides = [1, 1]} : vector<8x512xf32> to vector<8x128xf32>
    %150 = math.tanh %149 : vector<8x128xf32>
    %151 = vector.extract_strided_slice %136 {offsets = [0, 384], sizes = [8, 128], strides = [1, 1]} : vector<8x512xf32> to vector<8x128xf32>
    %152 = arith.negf %151 : vector<8x128xf32>
    %153 = math.exp %152 : vector<8x128xf32>
    %cst_38 = arith.constant 1.000000e+00 : f32
    %154 = vector.broadcast %cst_38 : f32 to vector<8x128xf32>
    %155 = arith.addf %154, %153 : vector<8x128xf32>
    %156 = arith.divf %154, %155 : vector<8x128xf32>
    %157 = arith.mulf %148, %100 : vector<8x128xf32>
    %158 = arith.mulf %142, %150 : vector<8x128xf32>
    %159 = arith.addf %157, %158 : vector<8x128xf32>
    %160 = math.tanh %159 : vector<8x128xf32>
    %161 = arith.mulf %156, %160 : vector<8x128xf32>
    %162 = tpu.concatenate %161, %130 in 1 : vector<8x128xf32>, vector<8x128xf32> -> vector<8x256xf32>
    %cst_39 = arith.constant dense<0.000000e+00> : vector<8x512xf32>
    %163 = tpu.matmul %162, %8, %cst_39 {dimension_numbers = #tpu.dot_dimension_numbers<[1], [0], [0], [1], [0, 0, 1, 1], [], []>} : vector<8x256xf32>, vector<256x512xf32>, vector<8x512xf32> -> vector<8x512xf32>
    %164 = arith.addf %163, %11 : vector<8x512xf32>
    %165 = vector.extract_strided_slice %164 {offsets = [0, 0], sizes = [8, 128], strides = [1, 1]} : vector<8x512xf32> to vector<8x128xf32>
    %166 = arith.negf %165 : vector<8x128xf32>
    %167 = math.exp %166 : vector<8x128xf32>
    %cst_40 = arith.constant 1.000000e+00 : f32
    %168 = vector.broadcast %cst_40 : f32 to vector<8x128xf32>
    %169 = arith.addf %168, %167 : vector<8x128xf32>
    %170 = arith.divf %168, %169 : vector<8x128xf32>
    %171 = vector.extract_strided_slice %164 {offsets = [0, 128], sizes = [8, 128], strides = [1, 1]} : vector<8x512xf32> to vector<8x128xf32>
    %172 = arith.negf %171 : vector<8x128xf32>
    %173 = math.exp %172 : vector<8x128xf32>
    %cst_41 = arith.constant 1.000000e+00 : f32
    %174 = vector.broadcast %cst_41 : f32 to vector<8x128xf32>
    %175 = arith.addf %174, %173 : vector<8x128xf32>
    %176 = arith.divf %174, %175 : vector<8x128xf32>
    %177 = vector.extract_strided_slice %164 {offsets = [0, 256], sizes = [8, 128], strides = [1, 1]} : vector<8x512xf32> to vector<8x128xf32>
    %178 = math.tanh %177 : vector<8x128xf32>
    %179 = vector.extract_strided_slice %164 {offsets = [0, 384], sizes = [8, 128], strides = [1, 1]} : vector<8x512xf32> to vector<8x128xf32>
    %180 = arith.negf %179 : vector<8x128xf32>
    %181 = math.exp %180 : vector<8x128xf32>
    %cst_42 = arith.constant 1.000000e+00 : f32
    %182 = vector.broadcast %cst_42 : f32 to vector<8x128xf32>
    %183 = arith.addf %182, %181 : vector<8x128xf32>
    %184 = arith.divf %182, %183 : vector<8x128xf32>
    %185 = arith.mulf %176, %128 : vector<8x128xf32>
    %186 = arith.mulf %170, %178 : vector<8x128xf32>
    %187 = arith.addf %185, %186 : vector<8x128xf32>
    %188 = math.tanh %187 : vector<8x128xf32>
    %189 = arith.mulf %184, %188 : vector<8x128xf32>
    %c3_i32 = arith.constant 3 : i32
    %c8_i32_43 = arith.constant 8 : i32
    %190 = arith.muli %c3_i32, %c8_i32_43 : i32
    %191 = tpu.assume_multiple %190, 8 : i32
    %192 = arith.index_cast %191 : i32 to index
    %c0_44 = arith.constant 0 : index
    %193 = vector.load %arg9[%192, %c0_44] : memref<64x512xf32, #tpu.memory_space<vmem>>, vector<8x512xf32>
    %cst_45 = arith.constant dense<0.000000e+00> : vector<8x512xf32>
    %194 = tpu.matmul %161, %7, %cst_45 {dimension_numbers = #tpu.dot_dimension_numbers<[1], [0], [0], [1], [0, 0, 1, 1], [], []>} : vector<8x128xf32>, vector<128x512xf32>, vector<8x512xf32> -> vector<8x512xf32>
    %195 = arith.addf %193, %194 : vector<8x512xf32>
    %196 = vector.extract_strided_slice %195 {offsets = [0, 0], sizes = [8, 128], strides = [1, 1]} : vector<8x512xf32> to vector<8x128xf32>
    %197 = arith.negf %196 : vector<8x128xf32>
    %198 = math.exp %197 : vector<8x128xf32>
    %cst_46 = arith.constant 1.000000e+00 : f32
    %199 = vector.broadcast %cst_46 : f32 to vector<8x128xf32>
    %200 = arith.addf %199, %198 : vector<8x128xf32>
    %201 = arith.divf %199, %200 : vector<8x128xf32>
    %202 = vector.extract_strided_slice %195 {offsets = [0, 128], sizes = [8, 128], strides = [1, 1]} : vector<8x512xf32> to vector<8x128xf32>
    %203 = arith.negf %202 : vector<8x128xf32>
    %204 = math.exp %203 : vector<8x128xf32>
    %cst_47 = arith.constant 1.000000e+00 : f32
    %205 = vector.broadcast %cst_47 : f32 to vector<8x128xf32>
    %206 = arith.addf %205, %204 : vector<8x128xf32>
    %207 = arith.divf %205, %206 : vector<8x128xf32>
    %208 = vector.extract_strided_slice %195 {offsets = [0, 256], sizes = [8, 128], strides = [1, 1]} : vector<8x512xf32> to vector<8x128xf32>
    %209 = math.tanh %208 : vector<8x128xf32>
    %210 = vector.extract_strided_slice %195 {offsets = [0, 384], sizes = [8, 128], strides = [1, 1]} : vector<8x512xf32> to vector<8x128xf32>
    %211 = arith.negf %210 : vector<8x128xf32>
    %212 = math.exp %211 : vector<8x128xf32>
    %cst_48 = arith.constant 1.000000e+00 : f32
    %213 = vector.broadcast %cst_48 : f32 to vector<8x128xf32>
    %214 = arith.addf %213, %212 : vector<8x128xf32>
    %215 = arith.divf %213, %214 : vector<8x128xf32>
    %216 = arith.mulf %207, %159 : vector<8x128xf32>
    %217 = arith.mulf %201, %209 : vector<8x128xf32>
    %218 = arith.addf %216, %217 : vector<8x128xf32>
    %219 = math.tanh %218 : vector<8x128xf32>
    %220 = arith.mulf %215, %219 : vector<8x128xf32>
    %221 = tpu.concatenate %220, %189 in 1 : vector<8x128xf32>, vector<8x128xf32> -> vector<8x256xf32>
    %cst_49 = arith.constant dense<0.000000e+00> : vector<8x512xf32>
    %222 = tpu.matmul %221, %8, %cst_49 {dimension_numbers = #tpu.dot_dimension_numbers<[1], [0], [0], [1], [0, 0, 1, 1], [], []>} : vector<8x256xf32>, vector<256x512xf32>, vector<8x512xf32> -> vector<8x512xf32>
    %223 = arith.addf %222, %11 : vector<8x512xf32>
    %224 = vector.extract_strided_slice %223 {offsets = [0, 0], sizes = [8, 128], strides = [1, 1]} : vector<8x512xf32> to vector<8x128xf32>
    %225 = arith.negf %224 : vector<8x128xf32>
    %226 = math.exp %225 : vector<8x128xf32>
    %cst_50 = arith.constant 1.000000e+00 : f32
    %227 = vector.broadcast %cst_50 : f32 to vector<8x128xf32>
    %228 = arith.addf %227, %226 : vector<8x128xf32>
    %229 = arith.divf %227, %228 : vector<8x128xf32>
    %230 = vector.extract_strided_slice %223 {offsets = [0, 128], sizes = [8, 128], strides = [1, 1]} : vector<8x512xf32> to vector<8x128xf32>
    %231 = arith.negf %230 : vector<8x128xf32>
    %232 = math.exp %231 : vector<8x128xf32>
    %cst_51 = arith.constant 1.000000e+00 : f32
    %233 = vector.broadcast %cst_51 : f32 to vector<8x128xf32>
    %234 = arith.addf %233, %232 : vector<8x128xf32>
    %235 = arith.divf %233, %234 : vector<8x128xf32>
    %236 = vector.extract_strided_slice %223 {offsets = [0, 256], sizes = [8, 128], strides = [1, 1]} : vector<8x512xf32> to vector<8x128xf32>
    %237 = math.tanh %236 : vector<8x128xf32>
    %238 = vector.extract_strided_slice %223 {offsets = [0, 384], sizes = [8, 128], strides = [1, 1]} : vector<8x512xf32> to vector<8x128xf32>
    %239 = arith.negf %238 : vector<8x128xf32>
    %240 = math.exp %239 : vector<8x128xf32>
    %cst_52 = arith.constant 1.000000e+00 : f32
    %241 = vector.broadcast %cst_52 : f32 to vector<8x128xf32>
    %242 = arith.addf %241, %240 : vector<8x128xf32>
    %243 = arith.divf %241, %242 : vector<8x128xf32>
    %244 = arith.mulf %235, %187 : vector<8x128xf32>
    %245 = arith.mulf %229, %237 : vector<8x128xf32>
    %246 = arith.addf %244, %245 : vector<8x128xf32>
    %247 = math.tanh %246 : vector<8x128xf32>
    %248 = arith.mulf %243, %247 : vector<8x128xf32>
    %c4_i32 = arith.constant 4 : i32
    %c8_i32_53 = arith.constant 8 : i32
    %249 = arith.muli %c4_i32, %c8_i32_53 : i32
    %250 = tpu.assume_multiple %249, 8 : i32
    %251 = arith.index_cast %250 : i32 to index
    %c0_54 = arith.constant 0 : index
    %252 = vector.load %arg9[%251, %c0_54] : memref<64x512xf32, #tpu.memory_space<vmem>>, vector<8x512xf32>
    %cst_55 = arith.constant dense<0.000000e+00> : vector<8x512xf32>
    %253 = tpu.matmul %220, %7, %cst_55 {dimension_numbers = #tpu.dot_dimension_numbers<[1], [0], [0], [1], [0, 0, 1, 1], [], []>} : vector<8x128xf32>, vector<128x512xf32>, vector<8x512xf32> -> vector<8x512xf32>
    %254 = arith.addf %252, %253 : vector<8x512xf32>
    %255 = vector.extract_strided_slice %254 {offsets = [0, 0], sizes = [8, 128], strides = [1, 1]} : vector<8x512xf32> to vector<8x128xf32>
    %256 = arith.negf %255 : vector<8x128xf32>
    %257 = math.exp %256 : vector<8x128xf32>
    %cst_56 = arith.constant 1.000000e+00 : f32
    %258 = vector.broadcast %cst_56 : f32 to vector<8x128xf32>
    %259 = arith.addf %258, %257 : vector<8x128xf32>
    %260 = arith.divf %258, %259 : vector<8x128xf32>
    %261 = vector.extract_strided_slice %254 {offsets = [0, 128], sizes = [8, 128], strides = [1, 1]} : vector<8x512xf32> to vector<8x128xf32>
    %262 = arith.negf %261 : vector<8x128xf32>
    %263 = math.exp %262 : vector<8x128xf32>
    %cst_57 = arith.constant 1.000000e+00 : f32
    %264 = vector.broadcast %cst_57 : f32 to vector<8x128xf32>
    %265 = arith.addf %264, %263 : vector<8x128xf32>
    %266 = arith.divf %264, %265 : vector<8x128xf32>
    %267 = vector.extract_strided_slice %254 {offsets = [0, 256], sizes = [8, 128], strides = [1, 1]} : vector<8x512xf32> to vector<8x128xf32>
    %268 = math.tanh %267 : vector<8x128xf32>
    %269 = vector.extract_strided_slice %254 {offsets = [0, 384], sizes = [8, 128], strides = [1, 1]} : vector<8x512xf32> to vector<8x128xf32>
    %270 = arith.negf %269 : vector<8x128xf32>
    %271 = math.exp %270 : vector<8x128xf32>
    %cst_58 = arith.constant 1.000000e+00 : f32
    %272 = vector.broadcast %cst_58 : f32 to vector<8x128xf32>
    %273 = arith.addf %272, %271 : vector<8x128xf32>
    %274 = arith.divf %272, %273 : vector<8x128xf32>
    %275 = arith.mulf %266, %218 : vector<8x128xf32>
    %276 = arith.mulf %260, %268 : vector<8x128xf32>
    %277 = arith.addf %275, %276 : vector<8x128xf32>
    %278 = math.tanh %277 : vector<8x128xf32>
    %279 = arith.mulf %274, %278 : vector<8x128xf32>
    %280 = tpu.concatenate %279, %248 in 1 : vector<8x128xf32>, vector<8x128xf32> -> vector<8x256xf32>
    %cst_59 = arith.constant dense<0.000000e+00> : vector<8x512xf32>
    %281 = tpu.matmul %280, %8, %cst_59 {dimension_numbers = #tpu.dot_dimension_numbers<[1], [0], [0], [1], [0, 0, 1, 1], [], []>} : vector<8x256xf32>, vector<256x512xf32>, vector<8x512xf32> -> vector<8x512xf32>
    %282 = arith.addf %281, %11 : vector<8x512xf32>
    %283 = vector.extract_strided_slice %282 {offsets = [0, 0], sizes = [8, 128], strides = [1, 1]} : vector<8x512xf32> to vector<8x128xf32>
    %284 = arith.negf %283 : vector<8x128xf32>
    %285 = math.exp %284 : vector<8x128xf32>
    %cst_60 = arith.constant 1.000000e+00 : f32
    %286 = vector.broadcast %cst_60 : f32 to vector<8x128xf32>
    %287 = arith.addf %286, %285 : vector<8x128xf32>
    %288 = arith.divf %286, %287 : vector<8x128xf32>
    %289 = vector.extract_strided_slice %282 {offsets = [0, 128], sizes = [8, 128], strides = [1, 1]} : vector<8x512xf32> to vector<8x128xf32>
    %290 = arith.negf %289 : vector<8x128xf32>
    %291 = math.exp %290 : vector<8x128xf32>
    %cst_61 = arith.constant 1.000000e+00 : f32
    %292 = vector.broadcast %cst_61 : f32 to vector<8x128xf32>
    %293 = arith.addf %292, %291 : vector<8x128xf32>
    %294 = arith.divf %292, %293 : vector<8x128xf32>
    %295 = vector.extract_strided_slice %282 {offsets = [0, 256], sizes = [8, 128], strides = [1, 1]} : vector<8x512xf32> to vector<8x128xf32>
    %296 = math.tanh %295 : vector<8x128xf32>
    %297 = vector.extract_strided_slice %282 {offsets = [0, 384], sizes = [8, 128], strides = [1, 1]} : vector<8x512xf32> to vector<8x128xf32>
    %298 = arith.negf %297 : vector<8x128xf32>
    %299 = math.exp %298 : vector<8x128xf32>
    %cst_62 = arith.constant 1.000000e+00 : f32
    %300 = vector.broadcast %cst_62 : f32 to vector<8x128xf32>
    %301 = arith.addf %300, %299 : vector<8x128xf32>
    %302 = arith.divf %300, %301 : vector<8x128xf32>
    %303 = arith.mulf %294, %246 : vector<8x128xf32>
    %304 = arith.mulf %288, %296 : vector<8x128xf32>
    %305 = arith.addf %303, %304 : vector<8x128xf32>
    %306 = math.tanh %305 : vector<8x128xf32>
    %307 = arith.mulf %302, %306 : vector<8x128xf32>
    %c5_i32 = arith.constant 5 : i32
    %c8_i32_63 = arith.constant 8 : i32
    %308 = arith.muli %c5_i32, %c8_i32_63 : i32
    %309 = tpu.assume_multiple %308, 8 : i32
    %310 = arith.index_cast %309 : i32 to index
    %c0_64 = arith.constant 0 : index
    %311 = vector.load %arg9[%310, %c0_64] : memref<64x512xf32, #tpu.memory_space<vmem>>, vector<8x512xf32>
    %cst_65 = arith.constant dense<0.000000e+00> : vector<8x512xf32>
    %312 = tpu.matmul %279, %7, %cst_65 {dimension_numbers = #tpu.dot_dimension_numbers<[1], [0], [0], [1], [0, 0, 1, 1], [], []>} : vector<8x128xf32>, vector<128x512xf32>, vector<8x512xf32> -> vector<8x512xf32>
    %313 = arith.addf %311, %312 : vector<8x512xf32>
    %314 = vector.extract_strided_slice %313 {offsets = [0, 0], sizes = [8, 128], strides = [1, 1]} : vector<8x512xf32> to vector<8x128xf32>
    %315 = arith.negf %314 : vector<8x128xf32>
    %316 = math.exp %315 : vector<8x128xf32>
    %cst_66 = arith.constant 1.000000e+00 : f32
    %317 = vector.broadcast %cst_66 : f32 to vector<8x128xf32>
    %318 = arith.addf %317, %316 : vector<8x128xf32>
    %319 = arith.divf %317, %318 : vector<8x128xf32>
    %320 = vector.extract_strided_slice %313 {offsets = [0, 128], sizes = [8, 128], strides = [1, 1]} : vector<8x512xf32> to vector<8x128xf32>
    %321 = arith.negf %320 : vector<8x128xf32>
    %322 = math.exp %321 : vector<8x128xf32>
    %cst_67 = arith.constant 1.000000e+00 : f32
    %323 = vector.broadcast %cst_67 : f32 to vector<8x128xf32>
    %324 = arith.addf %323, %322 : vector<8x128xf32>
    %325 = arith.divf %323, %324 : vector<8x128xf32>
    %326 = vector.extract_strided_slice %313 {offsets = [0, 256], sizes = [8, 128], strides = [1, 1]} : vector<8x512xf32> to vector<8x128xf32>
    %327 = math.tanh %326 : vector<8x128xf32>
    %328 = vector.extract_strided_slice %313 {offsets = [0, 384], sizes = [8, 128], strides = [1, 1]} : vector<8x512xf32> to vector<8x128xf32>
    %329 = arith.negf %328 : vector<8x128xf32>
    %330 = math.exp %329 : vector<8x128xf32>
    %cst_68 = arith.constant 1.000000e+00 : f32
    %331 = vector.broadcast %cst_68 : f32 to vector<8x128xf32>
    %332 = arith.addf %331, %330 : vector<8x128xf32>
    %333 = arith.divf %331, %332 : vector<8x128xf32>
    %334 = arith.mulf %325, %277 : vector<8x128xf32>
    %335 = arith.mulf %319, %327 : vector<8x128xf32>
    %336 = arith.addf %334, %335 : vector<8x128xf32>
    %337 = math.tanh %336 : vector<8x128xf32>
    %338 = arith.mulf %333, %337 : vector<8x128xf32>
    %339 = tpu.concatenate %338, %307 in 1 : vector<8x128xf32>, vector<8x128xf32> -> vector<8x256xf32>
    %cst_69 = arith.constant dense<0.000000e+00> : vector<8x512xf32>
    %340 = tpu.matmul %339, %8, %cst_69 {dimension_numbers = #tpu.dot_dimension_numbers<[1], [0], [0], [1], [0, 0, 1, 1], [], []>} : vector<8x256xf32>, vector<256x512xf32>, vector<8x512xf32> -> vector<8x512xf32>
    %341 = arith.addf %340, %11 : vector<8x512xf32>
    %342 = vector.extract_strided_slice %341 {offsets = [0, 0], sizes = [8, 128], strides = [1, 1]} : vector<8x512xf32> to vector<8x128xf32>
    %343 = arith.negf %342 : vector<8x128xf32>
    %344 = math.exp %343 : vector<8x128xf32>
    %cst_70 = arith.constant 1.000000e+00 : f32
    %345 = vector.broadcast %cst_70 : f32 to vector<8x128xf32>
    %346 = arith.addf %345, %344 : vector<8x128xf32>
    %347 = arith.divf %345, %346 : vector<8x128xf32>
    %348 = vector.extract_strided_slice %341 {offsets = [0, 128], sizes = [8, 128], strides = [1, 1]} : vector<8x512xf32> to vector<8x128xf32>
    %349 = arith.negf %348 : vector<8x128xf32>
    %350 = math.exp %349 : vector<8x128xf32>
    %cst_71 = arith.constant 1.000000e+00 : f32
    %351 = vector.broadcast %cst_71 : f32 to vector<8x128xf32>
    %352 = arith.addf %351, %350 : vector<8x128xf32>
    %353 = arith.divf %351, %352 : vector<8x128xf32>
    %354 = vector.extract_strided_slice %341 {offsets = [0, 256], sizes = [8, 128], strides = [1, 1]} : vector<8x512xf32> to vector<8x128xf32>
    %355 = math.tanh %354 : vector<8x128xf32>
    %356 = vector.extract_strided_slice %341 {offsets = [0, 384], sizes = [8, 128], strides = [1, 1]} : vector<8x512xf32> to vector<8x128xf32>
    %357 = arith.negf %356 : vector<8x128xf32>
    %358 = math.exp %357 : vector<8x128xf32>
    %cst_72 = arith.constant 1.000000e+00 : f32
    %359 = vector.broadcast %cst_72 : f32 to vector<8x128xf32>
    %360 = arith.addf %359, %358 : vector<8x128xf32>
    %361 = arith.divf %359, %360 : vector<8x128xf32>
    %362 = arith.mulf %353, %305 : vector<8x128xf32>
    %363 = arith.mulf %347, %355 : vector<8x128xf32>
    %364 = arith.addf %362, %363 : vector<8x128xf32>
    %365 = math.tanh %364 : vector<8x128xf32>
    %366 = arith.mulf %361, %365 : vector<8x128xf32>
    %c6_i32 = arith.constant 6 : i32
    %c8_i32_73 = arith.constant 8 : i32
    %367 = arith.muli %c6_i32, %c8_i32_73 : i32
    %368 = tpu.assume_multiple %367, 8 : i32
    %369 = arith.index_cast %368 : i32 to index
    %c0_74 = arith.constant 0 : index
    %370 = vector.load %arg9[%369, %c0_74] : memref<64x512xf32, #tpu.memory_space<vmem>>, vector<8x512xf32>
    %cst_75 = arith.constant dense<0.000000e+00> : vector<8x512xf32>
    %371 = tpu.matmul %338, %7, %cst_75 {dimension_numbers = #tpu.dot_dimension_numbers<[1], [0], [0], [1], [0, 0, 1, 1], [], []>} : vector<8x128xf32>, vector<128x512xf32>, vector<8x512xf32> -> vector<8x512xf32>
    %372 = arith.addf %370, %371 : vector<8x512xf32>
    %373 = vector.extract_strided_slice %372 {offsets = [0, 0], sizes = [8, 128], strides = [1, 1]} : vector<8x512xf32> to vector<8x128xf32>
    %374 = arith.negf %373 : vector<8x128xf32>
    %375 = math.exp %374 : vector<8x128xf32>
    %cst_76 = arith.constant 1.000000e+00 : f32
    %376 = vector.broadcast %cst_76 : f32 to vector<8x128xf32>
    %377 = arith.addf %376, %375 : vector<8x128xf32>
    %378 = arith.divf %376, %377 : vector<8x128xf32>
    %379 = vector.extract_strided_slice %372 {offsets = [0, 128], sizes = [8, 128], strides = [1, 1]} : vector<8x512xf32> to vector<8x128xf32>
    %380 = arith.negf %379 : vector<8x128xf32>
    %381 = math.exp %380 : vector<8x128xf32>
    %cst_77 = arith.constant 1.000000e+00 : f32
    %382 = vector.broadcast %cst_77 : f32 to vector<8x128xf32>
    %383 = arith.addf %382, %381 : vector<8x128xf32>
    %384 = arith.divf %382, %383 : vector<8x128xf32>
    %385 = vector.extract_strided_slice %372 {offsets = [0, 256], sizes = [8, 128], strides = [1, 1]} : vector<8x512xf32> to vector<8x128xf32>
    %386 = math.tanh %385 : vector<8x128xf32>
    %387 = vector.extract_strided_slice %372 {offsets = [0, 384], sizes = [8, 128], strides = [1, 1]} : vector<8x512xf32> to vector<8x128xf32>
    %388 = arith.negf %387 : vector<8x128xf32>
    %389 = math.exp %388 : vector<8x128xf32>
    %cst_78 = arith.constant 1.000000e+00 : f32
    %390 = vector.broadcast %cst_78 : f32 to vector<8x128xf32>
    %391 = arith.addf %390, %389 : vector<8x128xf32>
    %392 = arith.divf %390, %391 : vector<8x128xf32>
    %393 = arith.mulf %384, %336 : vector<8x128xf32>
    %394 = arith.mulf %378, %386 : vector<8x128xf32>
    %395 = arith.addf %393, %394 : vector<8x128xf32>
    %396 = math.tanh %395 : vector<8x128xf32>
    %397 = arith.mulf %392, %396 : vector<8x128xf32>
    %398 = tpu.concatenate %397, %366 in 1 : vector<8x128xf32>, vector<8x128xf32> -> vector<8x256xf32>
    %cst_79 = arith.constant dense<0.000000e+00> : vector<8x512xf32>
    %399 = tpu.matmul %398, %8, %cst_79 {dimension_numbers = #tpu.dot_dimension_numbers<[1], [0], [0], [1], [0, 0, 1, 1], [], []>} : vector<8x256xf32>, vector<256x512xf32>, vector<8x512xf32> -> vector<8x512xf32>
    %400 = arith.addf %399, %11 : vector<8x512xf32>
    %401 = vector.extract_strided_slice %400 {offsets = [0, 0], sizes = [8, 128], strides = [1, 1]} : vector<8x512xf32> to vector<8x128xf32>
    %402 = arith.negf %401 : vector<8x128xf32>
    %403 = math.exp %402 : vector<8x128xf32>
    %cst_80 = arith.constant 1.000000e+00 : f32
    %404 = vector.broadcast %cst_80 : f32 to vector<8x128xf32>
    %405 = arith.addf %404, %403 : vector<8x128xf32>
    %406 = arith.divf %404, %405 : vector<8x128xf32>
    %407 = vector.extract_strided_slice %400 {offsets = [0, 128], sizes = [8, 128], strides = [1, 1]} : vector<8x512xf32> to vector<8x128xf32>
    %408 = arith.negf %407 : vector<8x128xf32>
    %409 = math.exp %408 : vector<8x128xf32>
    %cst_81 = arith.constant 1.000000e+00 : f32
    %410 = vector.broadcast %cst_81 : f32 to vector<8x128xf32>
    %411 = arith.addf %410, %409 : vector<8x128xf32>
    %412 = arith.divf %410, %411 : vector<8x128xf32>
    %413 = vector.extract_strided_slice %400 {offsets = [0, 256], sizes = [8, 128], strides = [1, 1]} : vector<8x512xf32> to vector<8x128xf32>
    %414 = math.tanh %413 : vector<8x128xf32>
    %415 = vector.extract_strided_slice %400 {offsets = [0, 384], sizes = [8, 128], strides = [1, 1]} : vector<8x512xf32> to vector<8x128xf32>
    %416 = arith.negf %415 : vector<8x128xf32>
    %417 = math.exp %416 : vector<8x128xf32>
    %cst_82 = arith.constant 1.000000e+00 : f32
    %418 = vector.broadcast %cst_82 : f32 to vector<8x128xf32>
    %419 = arith.addf %418, %417 : vector<8x128xf32>
    %420 = arith.divf %418, %419 : vector<8x128xf32>
    %421 = arith.mulf %412, %364 : vector<8x128xf32>
    %422 = arith.mulf %406, %414 : vector<8x128xf32>
    %423 = arith.addf %421, %422 : vector<8x128xf32>
    %424 = math.tanh %423 : vector<8x128xf32>
    %425 = arith.mulf %420, %424 : vector<8x128xf32>
    %c7_i32 = arith.constant 7 : i32
    %c8_i32_83 = arith.constant 8 : i32
    %426 = arith.muli %c7_i32, %c8_i32_83 : i32
    %427 = tpu.assume_multiple %426, 8 : i32
    %428 = arith.index_cast %427 : i32 to index
    %c0_84 = arith.constant 0 : index
    %429 = vector.load %arg9[%428, %c0_84] : memref<64x512xf32, #tpu.memory_space<vmem>>, vector<8x512xf32>
    %cst_85 = arith.constant dense<0.000000e+00> : vector<8x512xf32>
    %430 = tpu.matmul %397, %7, %cst_85 {dimension_numbers = #tpu.dot_dimension_numbers<[1], [0], [0], [1], [0, 0, 1, 1], [], []>} : vector<8x128xf32>, vector<128x512xf32>, vector<8x512xf32> -> vector<8x512xf32>
    %431 = arith.addf %429, %430 : vector<8x512xf32>
    %432 = vector.extract_strided_slice %431 {offsets = [0, 0], sizes = [8, 128], strides = [1, 1]} : vector<8x512xf32> to vector<8x128xf32>
    %433 = arith.negf %432 : vector<8x128xf32>
    %434 = math.exp %433 : vector<8x128xf32>
    %cst_86 = arith.constant 1.000000e+00 : f32
    %435 = vector.broadcast %cst_86 : f32 to vector<8x128xf32>
    %436 = arith.addf %435, %434 : vector<8x128xf32>
    %437 = arith.divf %435, %436 : vector<8x128xf32>
    %438 = vector.extract_strided_slice %431 {offsets = [0, 128], sizes = [8, 128], strides = [1, 1]} : vector<8x512xf32> to vector<8x128xf32>
    %439 = arith.negf %438 : vector<8x128xf32>
    %440 = math.exp %439 : vector<8x128xf32>
    %cst_87 = arith.constant 1.000000e+00 : f32
    %441 = vector.broadcast %cst_87 : f32 to vector<8x128xf32>
    %442 = arith.addf %441, %440 : vector<8x128xf32>
    %443 = arith.divf %441, %442 : vector<8x128xf32>
    %444 = vector.extract_strided_slice %431 {offsets = [0, 256], sizes = [8, 128], strides = [1, 1]} : vector<8x512xf32> to vector<8x128xf32>
    %445 = math.tanh %444 : vector<8x128xf32>
    %446 = vector.extract_strided_slice %431 {offsets = [0, 384], sizes = [8, 128], strides = [1, 1]} : vector<8x512xf32> to vector<8x128xf32>
    %447 = arith.negf %446 : vector<8x128xf32>
    %448 = math.exp %447 : vector<8x128xf32>
    %cst_88 = arith.constant 1.000000e+00 : f32
    %449 = vector.broadcast %cst_88 : f32 to vector<8x128xf32>
    %450 = arith.addf %449, %448 : vector<8x128xf32>
    %451 = arith.divf %449, %450 : vector<8x128xf32>
    %452 = arith.mulf %443, %395 : vector<8x128xf32>
    %453 = arith.mulf %437, %445 : vector<8x128xf32>
    %454 = arith.addf %452, %453 : vector<8x128xf32>
    %455 = math.tanh %454 : vector<8x128xf32>
    %456 = arith.mulf %451, %455 : vector<8x128xf32>
    %457 = tpu.concatenate %456, %425 in 1 : vector<8x128xf32>, vector<8x128xf32> -> vector<8x256xf32>
    %cst_89 = arith.constant dense<0.000000e+00> : vector<8x512xf32>
    %458 = tpu.matmul %457, %8, %cst_89 {dimension_numbers = #tpu.dot_dimension_numbers<[1], [0], [0], [1], [0, 0, 1, 1], [], []>} : vector<8x256xf32>, vector<256x512xf32>, vector<8x512xf32> -> vector<8x512xf32>
    %459 = arith.addf %458, %11 : vector<8x512xf32>
    %460 = vector.extract_strided_slice %459 {offsets = [0, 0], sizes = [8, 128], strides = [1, 1]} : vector<8x512xf32> to vector<8x128xf32>
    %461 = arith.negf %460 : vector<8x128xf32>
    %462 = math.exp %461 : vector<8x128xf32>
    %cst_90 = arith.constant 1.000000e+00 : f32
    %463 = vector.broadcast %cst_90 : f32 to vector<8x128xf32>
    %464 = arith.addf %463, %462 : vector<8x128xf32>
    %465 = arith.divf %463, %464 : vector<8x128xf32>
    %466 = vector.extract_strided_slice %459 {offsets = [0, 128], sizes = [8, 128], strides = [1, 1]} : vector<8x512xf32> to vector<8x128xf32>
    %467 = arith.negf %466 : vector<8x128xf32>
    %468 = math.exp %467 : vector<8x128xf32>
    %cst_91 = arith.constant 1.000000e+00 : f32
    %469 = vector.broadcast %cst_91 : f32 to vector<8x128xf32>
    %470 = arith.addf %469, %468 : vector<8x128xf32>
    %471 = arith.divf %469, %470 : vector<8x128xf32>
    %472 = vector.extract_strided_slice %459 {offsets = [0, 256], sizes = [8, 128], strides = [1, 1]} : vector<8x512xf32> to vector<8x128xf32>
    %473 = math.tanh %472 : vector<8x128xf32>
    %474 = vector.extract_strided_slice %459 {offsets = [0, 384], sizes = [8, 128], strides = [1, 1]} : vector<8x512xf32> to vector<8x128xf32>
    %475 = arith.negf %474 : vector<8x128xf32>
    %476 = math.exp %475 : vector<8x128xf32>
    %cst_92 = arith.constant 1.000000e+00 : f32
    %477 = vector.broadcast %cst_92 : f32 to vector<8x128xf32>
    %478 = arith.addf %477, %476 : vector<8x128xf32>
    %479 = arith.divf %477, %478 : vector<8x128xf32>
    %480 = arith.mulf %471, %423 : vector<8x128xf32>
    %481 = arith.mulf %465, %473 : vector<8x128xf32>
    %482 = arith.addf %480, %481 : vector<8x128xf32>
    %483 = math.tanh %482 : vector<8x128xf32>
    %484 = arith.mulf %479, %483 : vector<8x128xf32>
    %c8_i32_93 = arith.constant 8 : i32
    %c0_94 = arith.constant 0 : index
    %c0_95 = arith.constant 0 : index
    %485 = vector.load %arg6[%c0_94, %c0_95] : memref<128x128xf32, #tpu.memory_space<vmem>>, vector<128x128xf32>
    %cst_96 = arith.constant dense<0.000000e+00> : vector<8x128xf32>
    %486 = tpu.matmul %484, %485, %cst_96 {dimension_numbers = #tpu.dot_dimension_numbers<[1], [0], [0], [1], [0, 0, 1, 1], [], []>} : vector<8x128xf32>, vector<128x128xf32>, vector<8x128xf32> -> vector<8x128xf32>
    %c0_97 = arith.constant 0 : index
    %c0_98 = arith.constant 0 : index
    %487 = vector.load %arg7[%c0_97, %c0_98] : memref<1x128xf32, #tpu.memory_space<vmem>>, vector<1x128xf32>
    %488 = vector.broadcast %487 : vector<1x128xf32> to vector<8x128xf32>
    %489 = arith.addf %486, %488 : vector<8x128xf32>
    %c0_99 = arith.constant 0 : index
    %c0_100 = arith.constant 0 : index
    %490 = vector.load %arg8[%c0_99, %c0_100] : memref<8x128xf32, #tpu.memory_space<vmem>>, vector<8x128xf32>
    tpu.vector_store %arg8[%c0_99, %c0_100], %489 {strides = array<i32>} : memref<8x128xf32, #tpu.memory_space<vmem>>, vector<8x128xf32>,
    return
  }
}

</mosaic_0001>

<llo_original>
// kernel: rnn_forward.1
$region0: #{rnn_forward.1}
  #allocation0 [shape = 'u32[]', space=smem, size = 0x4, offset = 0x4, fixed_abs, tag = 'smem constant byte address 0x4 - core index']
  #allocation1 [shape = 'u32[144,128]{1,0:T(1,128)}', space=vmem, size = 0x12000, scoped, tag = 'internal scratch']
  #allocation2 [shape = 'f32[64,512]{1,0:T(8,128)}', space=vmem, size = 0x20000, scoped, tag = 'scratch operand']
  %s0 = inlined_call_operand.vmem [shape: f32[64,16], index: 0, kind: input, shape index: {}]
  %s1 = inlined_call_operand.vmem [shape: f32[16,512], index: 1, kind: input, shape index: {}]
  %s2 = inlined_call_operand.hbm [shape: f32[128,512], index: 2, kind: input, shape index: {}]
  %s3 = inlined_call_operand.vmem [shape: f32[1,512], index: 3, kind: input, shape index: {}]
  %s4 = inlined_call_operand.hbm [shape: f32[256,512], index: 4, kind: input, shape index: {}]
  %s5 = inlined_call_operand.vmem [shape: f32[1,512], index: 5, kind: input, shape index: {}]
  %s6 = inlined_call_operand.vmem [shape: f32[128,128], index: 6, kind: input, shape index: {}]
  %s7 = inlined_call_operand.vmem [shape: f32[1,128], index: 7, kind: input, shape index: {}]
  %s8 = inlined_call_operand.vmem [shape: f32[8,128], index: 8, kind: output, shape index: {}]
  %s9 = sld [smem:[#allocation0]]
  $region50: #{rnn_forward.1} parent=0
    _
  %s11 = ssub.s32 1, %s9
  %s12 = scalar_select 0, %s11, %s9
  $region1: #{rnn_forward.1} parent=0
    #allocation3 [shape = 'u8[262144]{0}', space=vmem, size = 0x40000, scoped, tag = 'input window, operand 2, single buffered']
    #allocation4 [shape = 's32[1]{0}', space=sflag, size = 0x4, scoped, tag = 'scoped memory for rnn_forward.1']
    #allocation5 [shape = 'u8[524288]{0}', space=vmem, size = 0x80000, scoped, tag = 'input window, operand 4, single buffered']
    #allocation6 [shape = 's32[1]{0}', space=sflag, size = 0x4, scoped, tag = 'scoped memory for rnn_forward.1']
    %13 = vsyncpa [#allocation4], 0
    %14 = vsyncpa [#allocation6], 0
    // Predicated region
    $region2: #{rnn_forward.1} parent=1 // pred_check
      _
    $region3: #{rnn_forward.1} parent=1 // pred_check_branch
      %16 = sbr.rel (0) target = $region5
    $region4: #{rnn_forward.1} parent=1 // pred_region
      _
    $region5: #{rnn_forward.1} parent=1 // pred_fallthru
      _
    // Predicated region
    $region6: #{rnn_forward.1} parent=1 // pred_check
      _
    $region7: #{rnn_forward.1} parent=1 // pred_check_branch
      %18 = sbr.rel (0) target = $region9
    $region8: #{rnn_forward.1} parent=1 // pred_region
      _
    $region9: #{rnn_forward.1} parent=1 // pred_fallthru
      _
    // Predicated region
    $region10: #{rnn_forward.1} parent=1 // pred_check
      _
    $region11: #{rnn_forward.1} parent=1 // pred_check_branch
      %20 = sbr.rel (0) target = $region13
    $region12: #{rnn_forward.1} parent=1 // pred_region
      %s22 = ssub.s32 8192, 8192
      %23 = vsyncadd [#allocation4], %s22
      %s24 = sshll.u32 [#allocation3], 4
      %s25 = int_to_ptr.vmem [resolvable:$true] %s24
      %30 = dma.hbm_to_vmem [thread:$0]  %s2, 8192, %s25, [#allocation4], 512, 512, 32
    $region13: #{rnn_forward.1} parent=1 // pred_fallthru
      _
    // Predicated region
    $region14: #{rnn_forward.1} parent=1 // pred_check
      _
    $region15: #{rnn_forward.1} parent=1 // pred_check_branch
      %32 = sbr.rel (0) target = $region17
    $region16: #{rnn_forward.1} parent=1 // pred_region
      _
    $region17: #{rnn_forward.1} parent=1 // pred_fallthru
      _
    // Predicated region
    $region18: #{rnn_forward.1} parent=1 // pred_check
      _
    $region19: #{rnn_forward.1} parent=1 // pred_check_branch
      %34 = sbr.rel (0) target = $region21
    $region20: #{rnn_forward.1} parent=1 // pred_region
      %s36 = ssub.s32 16384, 16384
      %37 = vsyncadd [#allocation6], %s36
      %s38 = sshll.u32 [#allocation5], 4
      %s39 = int_to_ptr.vmem [resolvable:$true] %s38
      %44 = dma.hbm_to_vmem [thread:$0]  %s4, 16384, %s39, [#allocation6], 512, 512, 32
    $region21: #{rnn_forward.1} parent=1 // pred_fallthru
      _
    // Predicated region
    $region22: #{rnn_forward.1} parent=1 // pred_check
      _
    $region23: #{rnn_forward.1} parent=1 // pred_check_branch
      %46 = sbr.rel (0) target = $region25
    $region24: #{rnn_forward.1} parent=1 // pred_region
      _
    $region25: #{rnn_forward.1} parent=1 // pred_fallthru
      _
    // Predicated region
    $region26: #{rnn_forward.1} parent=1 // pred_check
      _
    $region27: #{rnn_forward.1} parent=1 // pred_check_branch
      %48 = sbr.rel (0) target = $region29
    $region28: #{rnn_forward.1} parent=1 // pred_region
      _
    $region29: #{rnn_forward.1} parent=1 // pred_fallthru
      _
    // Predicated region
    $region30: #{rnn_forward.1} parent=1 // pred_check
      _
    $region31: #{rnn_forward.1} parent=1 // pred_check_branch
      %50 = sbr.rel (0) target = $region33
    $region32: #{rnn_forward.1} parent=1 // pred_region
      _
    $region33: #{rnn_forward.1} parent=1 // pred_fallthru
      _
    // Predicated region
    $region34: #{rnn_forward.1} parent=1 // pred_check
      _
    $region35: #{rnn_forward.1} parent=1 // pred_check_branch
      %52 = sbr.rel (0) target = $region37
    $region36: #{rnn_forward.1} parent=1 // pred_region
      %53 = dma.done [#allocation4], 8192
    $region37: #{rnn_forward.1} parent=1 // pred_fallthru
      _
    // Predicated region
    $region38: #{rnn_forward.1} parent=1 // pred_check
      _
    $region39: #{rnn_forward.1} parent=1 // pred_check_branch
      %55 = sbr.rel (0) target = $region41
    $region40: #{rnn_forward.1} parent=1 // pred_region
      %56 = dma.done [#allocation6], 16384
    $region41: #{rnn_forward.1} parent=1 // pred_fallthru
      _
    %v57 = vld [vmem:[%s0] sm:$0xff]
    %v58 = vld [vmem:[%s0 + $0x8] sm:$0xff]
    %v59 = vld [vmem:[%s0 + $0x10] sm:$0xff]
    %v60 = vld [vmem:[%s0 + $0x18] sm:$0xff]
    %v61 = vld [vmem:[%s0 + $0x20] sm:$0xff]
    %v62 = vld [vmem:[%s0 + $0x28] sm:$0xff]
    %v63 = vld [vmem:[%s0 + $0x30] sm:$0xff]
    %v64 = vld [vmem:[%s0 + $0x38] sm:$0xff]
    %v65 = vld [vmem:[%s1] sm:$0xff]
    %v66 = vld [vmem:[%s1 + $0x8] sm:$0xff]
    %v67 = vld [vmem:[%s1 + $0x10] sm:$0xff]
    %v68 = vld [vmem:[%s1 + $0x18] sm:$0xff]
    %v69 = vld [vmem:[%s1 + $0x20] sm:$0xff]
    %v70 = vld [vmem:[%s1 + $0x28] sm:$0xff]
    %v71 = vld [vmem:[%s1 + $0x30] sm:$0xff]
    %v72 = vld [vmem:[%s1 + $0x38] sm:$0xff]
    %v73 = vld [vmem:[%s3] sm:$0xf]
    %v75 = vlaneseq
    %v76 = vshrl.u32 %v75, 7
    %v77 = vsub.s32 0, %v76
    %v78 = vrot.slane %v73, %v77
    %v79 = vlaneseq
    %v80 = vshrl.u32 %v79, 7
    %v81 = vsub.s32 1, %v80
    %v82 = vrot.slane %v73, %v81
    %v83 = vlaneseq
    %v84 = vshrl.u32 %v83, 7
    %v85 = vsub.s32 2, %v84
    %v86 = vrot.slane %v73, %v85
    %v87 = vlaneseq
    %v88 = vshrl.u32 %v87, 7
    %v89 = vsub.s32 3, %v88
    %v90 = vrot.slane %v73, %v89
    %vm95 = vcmask 130048
    %v97 = vsel %vm95, %v57, 0
    %v100 = vsel %vm95, %v58, 0
    %v103 = vsel %vm95, %v59, 0
    %v106 = vsel %vm95, %v60, 0
    %v109 = vsel %vm95, %v61, 0
    %v112 = vsel %vm95, %v62, 0
    %v115 = vsel %vm95, %v63, 0
    %v118 = vsel %vm95, %v64, 0
    %120 = vmatprep.subr.mxu0 %v66
    %121 = vmatpush1.msra.mxu0 %v65
    %122 = vmatprep.subr.mxu0 %v70
    %123 = vmatpush1.msra.mxu0 %v69
    %124 = vmatprep.subr.mxu0 0.0
    %125 = vmatpush1.msra.mxu0 0.0
    %126 = vmatprep.subr.mxu0 0.0
    %127 = vmatpush1.msra.mxu0 0.0
    %128 = vmatprep.subr.mxu0 0.0
    %129 = vmatpush1.msra.mxu0 0.0
    %130 = vmatprep.subr.mxu0 0.0
    %131 = vmatpush1.msra.mxu0 0.0
    %132 = vmatprep.subr.mxu0 0.0
    %133 = vmatpush1.msra.mxu0 0.0
    %134 = vmatprep.subr.mxu0 0.0
    %135 = vmatpush1.msra.mxu0 0.0
    %136 = vmatprep.subr.mxu0 0.0
    %137 = vmatpush1.msra.mxu0 0.0
    %138 = vmatprep.subr.mxu0 0.0
    %139 = vmatpush1.msra.mxu0 0.0
    %140 = vmatprep.subr.mxu0 0.0
    %141 = vmatpush1.msra.mxu0 0.0
    %142 = vmatprep.subr.mxu0 0.0
    %143 = vmatpush1.msra.mxu0 0.0
    %144 = vmatprep.subr.mxu0 0.0
    %145 = vmatpush1.msra.mxu0 0.0
    %146 = vmatprep.subr.mxu0 0.0
    %147 = vmatpush1.msra.mxu0 0.0
    %148 = vmatprep.subr.mxu0 0.0
    %149 = vmatpush1.msra.mxu0 0.0
    %150 = vmatprep.subr.mxu0 0.0
    %151 = vmatpush1.msra.mxu0 0.0
    %152 = vmatprep.subr.mxu0 0.0
    %153 = vmatpush1.msra.mxu0 0.0
    %154 = vmatprep.subr.mxu0 0.0
    %155 = vmatpush1.msra.mxu0 0.0
    %156 = vmatprep.subr.mxu0 0.0
    %157 = vmatpush1.msra.mxu0 0.0
    %158 = vmatprep.subr.mxu0 0.0
    %159 = vmatpush1.msra.mxu0 0.0
    %160 = vmatprep.subr.mxu0 0.0
    %161 = vmatpush1.msra.mxu0 0.0
    %162 = vmatprep.subr.mxu0 0.0
    %163 = vmatpush1.msra.mxu0 0.0
    %164 = vmatprep.subr.mxu0 0.0
    %165 = vmatpush1.msra.mxu0 0.0
    %166 = vmatprep.subr.mxu0 0.0
    %167 = vmatpush1.msra.mxu0 0.0
    %168 = vmatprep.subr.mxu0 0.0
    %169 = vmatpush1.msra.mxu0 0.0
    %170 = vmatprep.subr.mxu0 0.0
    %171 = vmatpush1.msra.mxu0 0.0
    %172 = vmatprep.subr.mxu0 0.0
    %173 = vmatpush1.msra.mxu0 0.0
    %174 = vmatprep.subr.mxu0 0.0
    %175 = vmatpush1.msra.mxu0 0.0
    %176 = vmatprep.subr.mxu0 0.0
    %177 = vmatpush1.msra.mxu0 0.0
    %178 = vmatprep.subr.mxu0 0.0
    %179 = vmatpush1.msra.mxu0 0.0
    %180 = vmatprep.subr.mxu0 0.0
    %181 = vmatpush1.msra.mxu0 0.0
    %182 = vmatprep.subr.mxu0 0.0
    %183 = vmatpush1.msra.mxu0 0.0
    %184 = vmatprep.mubr.f32.mxu0 0.0
    %185 = vmatmul.mubr.f32.gmra.mrb[0].mxu0 %v97
    %v186 = vpop.f32.mrb[0].mxu0
    %v187 = vadd.f32 %v78, %v186
    %v188 = vpop.f32.mrb[0].mxu0
    %v189 = vadd.f32 %v82, %v188
    %190 = vmatprep.mubr.f32.mxu0 0.0
    %191 = vmatmul.mubr.f32.gmra.mrb[0].mxu0 %v100
    %v192 = vpop.f32.mrb[0].mxu0
    %v193 = vadd.f32 %v78, %v192
    %v194 = vpop.f32.mrb[0].mxu0
    %v195 = vadd.f32 %v82, %v194
    %196 = vmatprep.mubr.f32.mxu0 0.0
    %197 = vmatmul.mubr.f32.gmra.mrb[0].mxu0 %v103
    %v198 = vpop.f32.mrb[0].mxu0
    %v199 = vadd.f32 %v78, %v198
    %v200 = vpop.f32.mrb[0].mxu0
    %v201 = vadd.f32 %v82, %v200
    %202 = vmatprep.mubr.f32.mxu0 0.0
    %203 = vmatmul.mubr.f32.gmra.mrb[0].mxu0 %v106
    %v204 = vpop.f32.mrb[0].mxu0
    %v205 = vadd.f32 %v78, %v204
    %v206 = vpop.f32.mrb[0].mxu0
    %v207 = vadd.f32 %v82, %v206
    %208 = vmatprep.mubr.f32.mxu0 0.0
    %209 = vmatmul.mubr.f32.gmra.mrb[0].mxu0 %v109
    %v210 = vpop.f32.mrb[0].mxu0
    %v211 = vadd.f32 %v78, %v210
    %v212 = vpop.f32.mrb[0].mxu0
    %v213 = vadd.f32 %v82, %v212
    %214 = vmatprep.mubr.f32.mxu0 0.0
    %215 = vmatmul.mubr.f32.gmra.mrb[0].mxu0 %v112
    %v216 = vpop.f32.mrb[0].mxu0
    %v217 = vadd.f32 %v78, %v216
    %v218 = vpop.f32.mrb[0].mxu0
    %v219 = vadd.f32 %v82, %v218
    %220 = vmatprep.mubr.f32.mxu0 0.0
    %221 = vmatmul.mubr.f32.gmra.mrb[0].mxu0 %v115
    %v222 = vpop.f32.mrb[0].mxu0
    %v223 = vadd.f32 %v78, %v222
    %v224 = vpop.f32.mrb[0].mxu0
    %v225 = vadd.f32 %v82, %v224
    %226 = vmatprep.mubr.f32.mxu0 0.0
    %227 = vmatmul.mubr.f32.gmra.mrb[0].mxu0 %v118
    %v228 = vpop.f32.mrb[0].mxu0
    %v229 = vadd.f32 %v78, %v228
    %v230 = vpop.f32.mrb[0].mxu0
    %v231 = vadd.f32 %v82, %v230
    %232 = vdwg.mxu0
    %233 = vmatprep.subr.mxu0 %v68
    %234 = vmatpush1.msra.mxu0 %v67
    %235 = vmatprep.subr.mxu0 %v72
    %236 = vmatpush1.msra.mxu0 %v71
    %237 = vmatprep.subr.mxu0 0.0
    %238 = vmatpush1.msra.mxu0 0.0
    %239 = vmatprep.subr.mxu0 0.0
    %240 = vmatpush1.msra.mxu0 0.0
    %241 = vmatprep.subr.mxu0 0.0
    %242 = vmatpush1.msra.mxu0 0.0
    %243 = vmatprep.subr.mxu0 0.0
    %244 = vmatpush1.msra.mxu0 0.0
    %245 = vmatprep.subr.mxu0 0.0
    %246 = vmatpush1.msra.mxu0 0.0
    %247 = vmatprep.subr.mxu0 0.0
    %248 = vmatpush1.msra.mxu0 0.0
    %249 = vmatprep.subr.mxu0 0.0
    %250 = vmatpush1.msra.mxu0 0.0
    %251 = vmatprep.subr.mxu0 0.0
    %252 = vmatpush1.msra.mxu0 0.0
    %253 = vmatprep.subr.mxu0 0.0
    %254 = vmatpush1.msra.mxu0 0.0
    %255 = vmatprep.subr.mxu0 0.0
    %256 = vmatpush1.msra.mxu0 0.0
    %257 = vmatprep.subr.mxu0 0.0
    %258 = vmatpush1.msra.mxu0 0.0
    %259 = vmatprep.subr.mxu0 0.0
    %260 = vmatpush1.msra.mxu0 0.0
    %261 = vmatprep.subr.mxu0 0.0
    %262 = vmatpush1.msra.mxu0 0.0
    %263 = vmatprep.subr.mxu0 0.0
    %264 = vmatpush1.msra.mxu0 0.0
    %265 = vmatprep.subr.mxu0 0.0
    %266 = vmatpush1.msra.mxu0 0.0
    %267 = vmatprep.subr.mxu0 0.0
    %268 = vmatpush1.msra.mxu0 0.0
    %269 = vmatprep.subr.mxu0 0.0
    %270 = vmatpush1.msra.mxu0 0.0
    %271 = vmatprep.subr.mxu0 0.0
    %272 = vmatpush1.msra.mxu0 0.0
    %273 = vmatprep.subr.mxu0 0.0
    %274 = vmatpush1.msra.mxu0 0.0
    %275 = vmatprep.subr.mxu0 0.0
    %276 = vmatpush1.msra.mxu0 0.0
    %277 = vmatprep.subr.mxu0 0.0
    %278 = vmatpush1.msra.mxu0 0.0
    %279 = vmatprep.subr.mxu0 0.0
    %280 = vmatpush1.msra.mxu0 0.0
    %281 = vmatprep.subr.mxu0 0.0
    %282 = vmatpush1.msra.mxu0 0.0
    %283 = vmatprep.subr.mxu0 0.0
    %284 = vmatpush1.msra.mxu0 0.0
    %285 = vmatprep.subr.mxu0 0.0
    %286 = vmatpush1.msra.mxu0 0.0
    %287 = vmatprep.subr.mxu0 0.0
    %288 = vmatpush1.msra.mxu0 0.0
    %289 = vmatprep.subr.mxu0 0.0
    %290 = vmatpush1.msra.mxu0 0.0
    %291 = vmatprep.subr.mxu0 0.0
    %292 = vmatpush1.msra.mxu0 0.0
    %293 = vmatprep.subr.mxu0 0.0
    %294 = vmatpush1.msra.mxu0 0.0
    %295 = vmatprep.subr.mxu0 0.0
    %296 = vmatpush1.msra.mxu0 0.0
    %297 = vmatprep.mubr.f32.mxu0 0.0
    %298 = vmatmul.mubr.f32.gmra.mrb[0].mxu0 %v97
    %v299 = vpop.f32.mrb[0].mxu0
    %v300 = vadd.f32 %v86, %v299
    %v301 = vpop.f32.mrb[0].mxu0
    %v302 = vadd.f32 %v90, %v301
    %303 = vmatprep.mubr.f32.mxu0 0.0
    %304 = vmatmul.mubr.f32.gmra.mrb[0].mxu0 %v100
    %v305 = vpop.f32.mrb[0].mxu0
    %v306 = vadd.f32 %v86, %v305
    %v307 = vpop.f32.mrb[0].mxu0
    %v308 = vadd.f32 %v90, %v307
    %309 = vmatprep.mubr.f32.mxu0 0.0
    %310 = vmatmul.mubr.f32.gmra.mrb[0].mxu0 %v103
    %v311 = vpop.f32.mrb[0].mxu0
    %v312 = vadd.f32 %v86, %v311
    %v313 = vpop.f32.mrb[0].mxu0
    %v314 = vadd.f32 %v90, %v313
    %315 = vmatprep.mubr.f32.mxu0 0.0
    %316 = vmatmul.mubr.f32.gmra.mrb[0].mxu0 %v106
    %v317 = vpop.f32.mrb[0].mxu0
    %v318 = vadd.f32 %v86, %v317
    %v319 = vpop.f32.mrb[0].mxu0
    %v320 = vadd.f32 %v90, %v319
    %321 = vmatprep.mubr.f32.mxu0 0.0
    %322 = vmatmul.mubr.f32.gmra.mrb[0].mxu0 %v109
    %v323 = vpop.f32.mrb[0].mxu0
    %v324 = vadd.f32 %v86, %v323
    %v325 = vpop.f32.mrb[0].mxu0
    %v326 = vadd.f32 %v90, %v325
    %327 = vmatprep.mubr.f32.mxu0 0.0
    %328 = vmatmul.mubr.f32.gmra.mrb[0].mxu0 %v112
    %v329 = vpop.f32.mrb[0].mxu0
    %v330 = vadd.f32 %v86, %v329
    %v331 = vpop.f32.mrb[0].mxu0
    %v332 = vadd.f32 %v90, %v331
    %333 = vmatprep.mubr.f32.mxu0 0.0
    %334 = vmatmul.mubr.f32.gmra.mrb[0].mxu0 %v115
    %v335 = vpop.f32.mrb[0].mxu0
    %v336 = vadd.f32 %v86, %v335
    %v337 = vpop.f32.mrb[0].mxu0
    %v338 = vadd.f32 %v90, %v337
    %339 = vmatprep.mubr.f32.mxu0 0.0
    %340 = vmatmul.mubr.f32.gmra.mrb[0].mxu0 %v118
    %v341 = vpop.f32.mrb[0].mxu0
    %v342 = vadd.f32 %v86, %v341
    %v343 = vpop.f32.mrb[0].mxu0
    %v344 = vadd.f32 %v90, %v343
    %345 = vdwg.mxu0
    %346 = vst [vmem:[#allocation2] sm:$0xff] %v187
    %347 = vst [vmem:[#allocation2 + $0x8] sm:$0xff] %v189
    %348 = vst [vmem:[#allocation2 + $0x10] sm:$0xff] %v300
    %349 = vst [vmem:[#allocation2 + $0x18] sm:$0xff] %v302
    %350 = vst [vmem:[#allocation2 + $0x20] sm:$0xff] %v193
    %351 = vst [vmem:[#allocation2 + $0x28] sm:$0xff] %v195
    %352 = vst [vmem:[#allocation2 + $0x30] sm:$0xff] %v306
    %353 = vst [vmem:[#allocation2 + $0x38] sm:$0xff] %v308
    %354 = vst [vmem:[#allocation2 + $0x40] sm:$0xff] %v199
    %355 = vst [vmem:[#allocation2 + $0x48] sm:$0xff] %v201
    %356 = vst [vmem:[#allocation2 + $0x50] sm:$0xff] %v312
    %357 = vst [vmem:[#allocation2 + $0x58] sm:$0xff] %v314
    %358 = vst [vmem:[#allocation2 + $0x60] sm:$0xff] %v205
    %359 = vst [vmem:[#allocation2 + $0x68] sm:$0xff] %v207
    %360 = vst [vmem:[#allocation2 + $0x70] sm:$0xff] %v318
    %361 = vst [vmem:[#allocation2 + $0x78] sm:$0xff] %v320
    %362 = vst [vmem:[#allocation2 + $0x80] sm:$0xff] %v211
    %363 = vst [vmem:[#allocation2 + $0x88] sm:$0xff] %v213
    %364 = vst [vmem:[#allocation2 + $0x90] sm:$0xff] %v324
    %365 = vst [vmem:[#allocation2 + $0x98] sm:$0xff] %v326
    %366 = vst [vmem:[#allocation2 + $0xa0] sm:$0xff] %v217
    %367 = vst [vmem:[#allocation2 + $0xa8] sm:$0xff] %v219
    %368 = vst [vmem:[#allocation2 + $0xb0] sm:$0xff] %v330
    %369 = vst [vmem:[#allocation2 + $0xb8] sm:$0xff] %v332
    %370 = vst [vmem:[#allocation2 + $0xc0] sm:$0xff] %v223
    %371 = vst [vmem:[#allocation2 + $0xc8] sm:$0xff] %v225
    %372 = vst [vmem:[#allocation2 + $0xd0] sm:$0xff] %v336
    %373 = vst [vmem:[#allocation2 + $0xd8] sm:$0xff] %v338
    %374 = vst [vmem:[#allocation2 + $0xe0] sm:$0xff] %v229
    %375 = vst [vmem:[#allocation2 + $0xe8] sm:$0xff] %v231
    %376 = vst [vmem:[#allocation2 + $0xf0] sm:$0xff] %v342
    %377 = vst [vmem:[#allocation2 + $0xf8] sm:$0xff] %v344
    %v378 = vld [vmem:[#allocation3] sm:$0xff]
    %v379 = vld [vmem:[#allocation3 + $0x8] sm:$0xff]
    %v380 = vld [vmem:[#allocation3 + $0x10] sm:$0xff]
    %v381 = vld [vmem:[#allocation3 + $0x18] sm:$0xff]
    %v382 = vld [vmem:[#allocation3 + $0x20] sm:$0xff]
    %v383 = vld [vmem:[#allocation3 + $0x28] sm:$0xff]
    %v384 = vld [vmem:[#allocation3 + $0x30] sm:$0xff]
    %v385 = vld [vmem:[#allocation3 + $0x38] sm:$0xff]
    %v386 = vld [vmem:[#allocation3 + $0x40] sm:$0xff]
    %v387 = vld [vmem:[#allocation3 + $0x48] sm:$0xff]
    %v388 = vld [vmem:[#allocation3 + $0x50] sm:$0xff]
    %v389 = vld [vmem:[#allocation3 + $0x58] sm:$0xff]
    %v390 = vld [vmem:[#allocation3 + $0x60] sm:$0xff]
    %v391 = vld [vmem:[#allocation3 + $0x68] sm:$0xff]
    %v392 = vld [vmem:[#allocation3 + $0x70] sm:$0xff]
    %v393 = vld [vmem:[#allocation3 + $0x78] sm:$0xff]
    %v394 = vld [vmem:[#allocation3 + $0x80] sm:$0xff]
    %v395 = vld [vmem:[#allocation3 + $0x88] sm:$0xff]
    %v396 = vld [vmem:[#allocation3 + $0x90] sm:$0xff]
    %v397 = vld [vmem:[#allocation3 + $0x98] sm:$0xff]
    %v398 = vld [vmem:[#allocation3 + $0xa0] sm:$0xff]
    %v399 = vld [vmem:[#allocation3 + $0xa8] sm:$0xff]
    %v400 = vld [vmem:[#allocation3 + $0xb0] sm:$0xff]
    %v401 = vld [vmem:[#allocation3 + $0xb8] sm:$0xff]
    %v402 = vld [vmem:[#allocation3 + $0xc0] sm:$0xff]
    %v403 = vld [vmem:[#allocation3 + $0xc8] sm:$0xff]
    %v404 = vld [vmem:[#allocation3 + $0xd0] sm:$0xff]
    %v405 = vld [vmem:[#allocation3 + $0xd8] sm:$0xff]
    %v406 = vld [vmem:[#allocation3 + $0xe0] sm:$0xff]
    %v407 = vld [vmem:[#allocation3 + $0xe8] sm:$0xff]
    %v408 = vld [vmem:[#allocation3 + $0xf0] sm:$0xff]
    %v409 = vld [vmem:[#allocation3 + $0xf8] sm:$0xff]
    %v410 = vld [vmem:[#allocation3 + $0x100] sm:$0xff]
    %v411 = vld [vmem:[#allocation3 + $0x108] sm:$0xff]
    %v412 = vld [vmem:[#allocation3 + $0x110] sm:$0xff]
    %v413 = vld [vmem:[#allocation3 + $0x118] sm:$0xff]
    %v414 = vld [vmem:[#allocation3 + $0x120] sm:$0xff]
    %v415 = vld [vmem:[#allocation3 + $0x128] sm:$0xff]
    %v416 = vld [vmem:[#allocation3 + $0x130] sm:$0xff]
    %v417 = vld [vmem:[#allocation3 + $0x138] sm:$0xff]
    %v418 = vld [vmem:[#allocation3 + $0x140] sm:$0xff]
    %v419 = vld [vmem:[#allocation3 + $0x148] sm:$0xff]
    %v420 = vld [vmem:[#allocation3 + $0x150] sm:$0xff]
    %v421 = vld [vmem:[#allocation3 + $0x158] sm:$0xff]
    %v422 = vld [vmem:[#allocation3 + $0x160] sm:$0xff]
    %v423 = vld [vmem:[#allocation3 + $0x168] sm:$0xff]
    %v424 = vld [vmem:[#allocation3 + $0x170] sm:$0xff]
    %v425 = vld [vmem:[#allocation3 + $0x178] sm:$0xff]
    %v426 = vld [vmem:[#allocation3 + $0x180] sm:$0xff]
    %v427 = vld [vmem:[#allocation3 + $0x188] sm:$0xff]
    %v428 = vld [vmem:[#allocation3 + $0x190] sm:$0xff]
    %v429 = vld [vmem:[#allocation3 + $0x198] sm:$0xff]
    %v430 = vld [vmem:[#allocation3 + $0x1a0] sm:$0xff]
    %v431 = vld [vmem:[#allocation3 + $0x1a8] sm:$0xff]
    %v432 = vld [vmem:[#allocation3 + $0x1b0] sm:$0xff]
    %v433 = vld [vmem:[#allocation3 + $0x1b8] sm:$0xff]
    %v434 = vld [vmem:[#allocation3 + $0x1c0] sm:$0xff]
    %v435 = vld [vmem:[#allocation3 + $0x1c8] sm:$0xff]
    %v436 = vld [vmem:[#allocation3 + $0x1d0] sm:$0xff]
    %v437 = vld [vmem:[#allocation3 + $0x1d8] sm:$0xff]
    %v438 = vld [vmem:[#allocation3 + $0x1e0] sm:$0xff]
    %v439 = vld [vmem:[#allocation3 + $0x1e8] sm:$0xff]
    %v440 = vld [vmem:[#allocation3 + $0x1f0] sm:$0xff]
    %v441 = vld [vmem:[#allocation3 + $0x1f8] sm:$0xff]
    %v442 = vld [vmem:[#allocation5] sm:$0xff]
    %v443 = vld [vmem:[#allocation5 + $0x8] sm:$0xff]
    %v444 = vld [vmem:[#allocation5 + $0x10] sm:$0xff]
    %v445 = vld [vmem:[#allocation5 + $0x18] sm:$0xff]
    %v446 = vld [vmem:[#allocation5 + $0x20] sm:$0xff]
    %v447 = vld [vmem:[#allocation5 + $0x28] sm:$0xff]
    %v448 = vld [vmem:[#allocation5 + $0x30] sm:$0xff]
    %v449 = vld [vmem:[#allocation5 + $0x38] sm:$0xff]
    %v450 = vld [vmem:[#allocation5 + $0x40] sm:$0xff]
    %v451 = vld [vmem:[#allocation5 + $0x48] sm:$0xff]
    %v452 = vld [vmem:[#allocation5 + $0x50] sm:$0xff]
    %v453 = vld [vmem:[#allocation5 + $0x58] sm:$0xff]
    %v454 = vld [vmem:[#allocation5 + $0x60] sm:$0xff]
    %v455 = vld [vmem:[#allocation5 + $0x68] sm:$0xff]
    %v456 = vld [vmem:[#allocation5 + $0x70] sm:$0xff]
    %v457 = vld [vmem:[#allocation5 + $0x78] sm:$0xff]
    %v458 = vld [vmem:[#allocation5 + $0x80] sm:$0xff]
    %v459 = vld [vmem:[#allocation5 + $0x88] sm:$0xff]
    %v460 = vld [vmem:[#allocation5 + $0x90] sm:$0xff]
    %v461 = vld [vmem:[#allocation5 + $0x98] sm:$0xff]
    %v462 = vld [vmem:[#allocation5 + $0xa0] sm:$0xff]
    %v463 = vld [vmem:[#allocation5 + $0xa8] sm:$0xff]
    %v464 = vld [vmem:[#allocation5 + $0xb0] sm:$0xff]
    %v465 = vld [vmem:[#allocation5 + $0xb8] sm:$0xff]
    %v466 = vld [vmem:[#allocation5 + $0xc0] sm:$0xff]
    %v467 = vld [vmem:[#allocation5 + $0xc8] sm:$0xff]
    %v468 = vld [vmem:[#allocation5 + $0xd0] sm:$0xff]
    %v469 = vld [vmem:[#allocation5 + $0xd8] sm:$0xff]
    %v470 = vld [vmem:[#allocation5 + $0xe0] sm:$0xff]
    %v471 = vld [vmem:[#allocation5 + $0xe8] sm:$0xff]
    %v472 = vld [vmem:[#allocation5 + $0xf0] sm:$0xff]
    %v473 = vld [vmem:[#allocation5 + $0xf8] sm:$0xff]
    %v474 = vld [vmem:[#allocation5 + $0x100] sm:$0xff]
    %v475 = vld [vmem:[#allocation5 + $0x108] sm:$0xff]
    %v476 = vld [vmem:[#allocation5 + $0x110] sm:$0xff]
    %v477 = vld [vmem:[#allocation5 + $0x118] sm:$0xff]
    %v478 = vld [vmem:[#allocation5 + $0x120] sm:$0xff]
    %v479 = vld [vmem:[#allocation5 + $0x128] sm:$0xff]
    %v480 = vld [vmem:[#allocation5 + $0x130] sm:$0xff]
    %v481 = vld [vmem:[#allocation5 + $0x138] sm:$0xff]
    %v482 = vld [vmem:[#allocation5 + $0x140] sm:$0xff]
    %v483 = vld [vmem:[#allocation5 + $0x148] sm:$0xff]
    %v484 = vld [vmem:[#allocation5 + $0x150] sm:$0xff]
    %v485 = vld [vmem:[#allocation5 + $0x158] sm:$0xff]
    %v486 = vld [vmem:[#allocation5 + $0x160] sm:$0xff]
    %v487 = vld [vmem:[#allocation5 + $0x168] sm:$0xff]
    %v488 = vld [vmem:[#allocation5 + $0x170] sm:$0xff]
    %v489 = vld [vmem:[#allocation5 + $0x178] sm:$0xff]
    %v490 = vld [vmem:[#allocation5 + $0x180] sm:$0xff]
    %v491 = vld [vmem:[#allocation5 + $0x188] sm:$0xff]
    %v492 = vld [vmem:[#allocation5 + $0x190] sm:$0xff]
    %v493 = vld [vmem:[#allocation5 + $0x198] sm:$0xff]
    %v494 = vld [vmem:[#allocation5 + $0x1a0] sm:$0xff]
    %v495 = vld [vmem:[#allocation5 + $0x1a8] sm:$0xff]
    %v496 = vld [vmem:[#allocation5 + $0x1b0] sm:$0xff]
    %v497 = vld [vmem:[#allocation5 + $0x1b8] sm:$0xff]
    %v498 = vld [vmem:[#allocation5 + $0x1c0] sm:$0xff]
    %v499 = vld [vmem:[#allocation5 + $0x1c8] sm:$0xff]
    %v500 = vld [vmem:[#allocation5 + $0x1d0] sm:$0xff]
    %v501 = vld [vmem:[#allocation5 + $0x1d8] sm:$0xff]
    %v502 = vld [vmem:[#allocation5 + $0x1e0] sm:$0xff]
    %v503 = vld [vmem:[#allocation5 + $0x1e8] sm:$0xff]
    %v504 = vld [vmem:[#allocation5 + $0x1f0] sm:$0xff]
    %v505 = vld [vmem:[#allocation5 + $0x1f8] sm:$0xff]
    %v506 = vld [vmem:[#allocation5 + $0x200] sm:$0xff]
    %v507 = vld [vmem:[#allocation5 + $0x208] sm:$0xff]
    %v508 = vld [vmem:[#allocation5 + $0x210] sm:$0xff]
    %v509 = vld [vmem:[#allocation5 + $0x218] sm:$0xff]
    %v510 = vld [vmem:[#allocation5 + $0x220] sm:$0xff]
    %v511 = vld [vmem:[#allocation5 + $0x228] sm:$0xff]
    %v512 = vld [vmem:[#allocation5 + $0x230] sm:$0xff]
    %v513 = vld [vmem:[#allocation5 + $0x238] sm:$0xff]
    %v514 = vld [vmem:[#allocation5 + $0x240] sm:$0xff]
    %v515 = vld [vmem:[#allocation5 + $0x248] sm:$0xff]
    %v516 = vld [vmem:[#allocation5 + $0x250] sm:$0xff]
    %v517 = vld [vmem:[#allocation5 + $0x258] sm:$0xff]
    %v518 = vld [vmem:[#allocation5 + $0x260] sm:$0xff]
    %v519 = vld [vmem:[#allocation5 + $0x268] sm:$0xff]
    %v520 = vld [vmem:[#allocation5 + $0x270] sm:$0xff]
    %v521 = vld [vmem:[#allocation5 + $0x278] sm:$0xff]
    %v522 = vld [vmem:[#allocation5 + $0x280] sm:$0xff]
    %v523 = vld [vmem:[#allocation5 + $0x288] sm:$0xff]
    %v524 = vld [vmem:[#allocation5 + $0x290] sm:$0xff]
    %v525 = vld [vmem:[#allocation5 + $0x298] sm:$0xff]
    %v526 = vld [vmem:[#allocation5 + $0x2a0] sm:$0xff]
    %v527 = vld [vmem:[#allocation5 + $0x2a8] sm:$0xff]
    %v528 = vld [vmem:[#allocation5 + $0x2b0] sm:$0xff]
    %v529 = vld [vmem:[#allocation5 + $0x2b8] sm:$0xff]
    %v530 = vld [vmem:[#allocation5 + $0x2c0] sm:$0xff]
    %v531 = vld [vmem:[#allocation5 + $0x2c8] sm:$0xff]
    %v532 = vld [vmem:[#allocation5 + $0x2d0] sm:$0xff]
    %v533 = vld [vmem:[#allocation5 + $0x2d8] sm:$0xff]
    %v534 = vld [vmem:[#allocation5 + $0x2e0] sm:$0xff]
    %v535 = vld [vmem:[#allocation5 + $0x2e8] sm:$0xff]
    %v536 = vld [vmem:[#allocation5 + $0x2f0] sm:$0xff]
    %v537 = vld [vmem:[#allocation5 + $0x2f8] sm:$0xff]
    %v538 = vld [vmem:[#allocation5 + $0x300] sm:$0xff]
    %v539 = vld [vmem:[#allocation5 + $0x308] sm:$0xff]
    %v540 = vld [vmem:[#allocation5 + $0x310] sm:$0xff]
    %v541 = vld [vmem:[#allocation5 + $0x318] sm:$0xff]
    %v542 = vld [vmem:[#allocation5 + $0x320] sm:$0xff]
    %v543 = vld [vmem:[#allocation5 + $0x328] sm:$0xff]
    %v544 = vld [vmem:[#allocation5 + $0x330] sm:$0xff]
    %v545 = vld [vmem:[#allocation5 + $0x338] sm:$0xff]
    %v546 = vld [vmem:[#allocation5 + $0x340] sm:$0xff]
    %v547 = vld [vmem:[#allocation5 + $0x348] sm:$0xff]
    %v548 = vld [vmem:[#allocation5 + $0x350] sm:$0xff]
    %v549 = vld [vmem:[#allocation5 + $0x358] sm:$0xff]
    %v550 = vld [vmem:[#allocation5 + $0x360] sm:$0xff]
    %v551 = vld [vmem:[#allocation5 + $0x368] sm:$0xff]
    %v552 = vld [vmem:[#allocation5 + $0x370] sm:$0xff]
    %v553 = vld [vmem:[#allocation5 + $0x378] sm:$0xff]
    %v554 = vld [vmem:[#allocation5 + $0x380] sm:$0xff]
    %v555 = vld [vmem:[#allocation5 + $0x388] sm:$0xff]
    %v556 = vld [vmem:[#allocation5 + $0x390] sm:$0xff]
    %v557 = vld [vmem:[#allocation5 + $0x398] sm:$0xff]
    %v558 = vld [vmem:[#allocation5 + $0x3a0] sm:$0xff]
    %v559 = vld [vmem:[#allocation5 + $0x3a8] sm:$0xff]
    %v560 = vld [vmem:[#allocation5 + $0x3b0] sm:$0xff]
    %v561 = vld [vmem:[#allocation5 + $0x3b8] sm:$0xff]
    %v562 = vld [vmem:[#allocation5 + $0x3c0] sm:$0xff]
    %v563 = vld [vmem:[#allocation5 + $0x3c8] sm:$0xff]
    %v564 = vld [vmem:[#allocation5 + $0x3d0] sm:$0xff]
    %v565 = vld [vmem:[#allocation5 + $0x3d8] sm:$0xff]
    %v566 = vld [vmem:[#allocation5 + $0x3e0] sm:$0xff]
    %v567 = vld [vmem:[#allocation5 + $0x3e8] sm:$0xff]
    %v568 = vld [vmem:[#allocation5 + $0x3f0] sm:$0xff]
    %v569 = vld [vmem:[#allocation5 + $0x3f8] sm:$0xff]
    %v570 = vld [vmem:[%s5] sm:$0xf]
    %v572 = vlaneseq
    %v573 = vshrl.u32 %v572, 7
    %v574 = vsub.s32 0, %v573
    %v575 = vrot.slane %v570, %v574
    %v576 = vlaneseq
    %v577 = vshrl.u32 %v576, 7
    %v578 = vsub.s32 1, %v577
    %v579 = vrot.slane %v570, %v578
    %v580 = vlaneseq
    %v581 = vshrl.u32 %v580, 7
    %v582 = vsub.s32 2, %v581
    %v583 = vrot.slane %v570, %v582
    %v584 = vlaneseq
    %v585 = vshrl.u32 %v584, 7
    %v586 = vsub.s32 3, %v585
    %v587 = vrot.slane %v570, %v586
    %s592 = smul.u32 0, 4
    %s593 = smul.addr %s592, 8
    %s594 = scalar_lea.vmem [#allocation2], %s593
    %v595 = vld [vmem:[%s594] sm:$0xff]
    %v596 = vld [vmem:[%s594 + $0x8] sm:$0xff]
    %v597 = vld [vmem:[%s594 + $0x10] sm:$0xff]
    %v598 = vld [vmem:[%s594 + $0x18] sm:$0xff]
    %599 = vmatprep.subr.mxu0 %v379
    %600 = vmatpush1.msra.mxu0 %v378
    %601 = vmatprep.subr.mxu0 %v383
    %602 = vmatpush1.msra.mxu0 %v382
    %603 = vmatprep.subr.mxu0 %v387
    %604 = vmatpush1.msra.mxu0 %v386
    %605 = vmatprep.subr.mxu0 %v391
    %606 = vmatpush1.msra.mxu0 %v390
    %607 = vmatprep.subr.mxu0 %v395
    %608 = vmatpush1.msra.mxu0 %v394
    %609 = vmatprep.subr.mxu0 %v399
    %610 = vmatpush1.msra.mxu0 %v398
    %611 = vmatprep.subr.mxu0 %v403
    %612 = vmatpush1.msra.mxu0 %v402
    %613 = vmatprep.subr.mxu0 %v407
    %614 = vmatpush1.msra.mxu0 %v406
    %615 = vmatprep.subr.mxu0 %v411
    %616 = vmatpush1.msra.mxu0 %v410
    %617 = vmatprep.subr.mxu0 %v415
    %618 = vmatpush1.msra.mxu0 %v414
    %619 = vmatprep.subr.mxu0 %v419
    %620 = vmatpush1.msra.mxu0 %v418
    %621 = vmatprep.subr.mxu0 %v423
    %622 = vmatpush1.msra.mxu0 %v422
    %623 = vmatprep.subr.mxu0 %v427
    %624 = vmatpush1.msra.mxu0 %v426
    %625 = vmatprep.subr.mxu0 %v431
    %626 = vmatpush1.msra.mxu0 %v430
    %627 = vmatprep.subr.mxu0 %v435
    %628 = vmatpush1.msra.mxu0 %v434
    %629 = vmatprep.subr.mxu0 %v439
    %630 = vmatpush1.msra.mxu0 %v438
    %631 = vmatprep.subr.mxu0 0.0
    %632 = vmatpush1.msra.mxu0 0.0
    %633 = vmatprep.subr.mxu0 0.0
    %634 = vmatpush1.msra.mxu0 0.0
    %635 = vmatprep.subr.mxu0 0.0
    %636 = vmatpush1.msra.mxu0 0.0
    %637 = vmatprep.subr.mxu0 0.0
    %638 = vmatpush1.msra.mxu0 0.0
    %639 = vmatprep.subr.mxu0 0.0
    %640 = vmatpush1.msra.mxu0 0.0
    %641 = vmatprep.subr.mxu0 0.0
    %642 = vmatpush1.msra.mxu0 0.0
    %643 = vmatprep.subr.mxu0 0.0
    %644 = vmatpush1.msra.mxu0 0.0
    %645 = vmatprep.subr.mxu0 0.0
    %646 = vmatpush1.msra.mxu0 0.0
    %647 = vmatprep.subr.mxu0 0.0
    %648 = vmatpush1.msra.mxu0 0.0
    %649 = vmatprep.subr.mxu0 0.0
    %650 = vmatpush1.msra.mxu0 0.0
    %651 = vmatprep.subr.mxu0 0.0
    %652 = vmatpush1.msra.mxu0 0.0
    %653 = vmatprep.subr.mxu0 0.0
    %654 = vmatpush1.msra.mxu0 0.0
    %655 = vmatprep.subr.mxu0 0.0
    %656 = vmatpush1.msra.mxu0 0.0
    %657 = vmatprep.subr.mxu0 0.0
    %658 = vmatpush1.msra.mxu0 0.0
    %659 = vmatprep.subr.mxu0 0.0
    %660 = vmatpush1.msra.mxu0 0.0
    %661 = vmatprep.subr.mxu0 0.0
    %662 = vmatpush1.msra.mxu0 0.0
    %663 = vmatprep.mubr.f32.mxu0 0.0
    %664 = vmatmul.mubr.f32.gmra.mrb[0].mxu0 0.0
    %v665 = vpop.f32.mrb[0].mxu0
    %v666 = vadd.f32 0.0, %v665
    %v667 = vpop.f32.mrb[0].mxu0
    %v668 = vadd.f32 0.0, %v667
    %669 = vdwg.mxu0
    %670 = vmatprep.subr.mxu0 %v381
    %671 = vmatpush1.msra.mxu0 %v380
    %672 = vmatprep.subr.mxu0 %v385
    %673 = vmatpush1.msra.mxu0 %v384
    %674 = vmatprep.subr.mxu0 %v389
    %675 = vmatpush1.msra.mxu0 %v388
    %676 = vmatprep.subr.mxu0 %v393
    %677 = vmatpush1.msra.mxu0 %v392
    %678 = vmatprep.subr.mxu0 %v397
    %679 = vmatpush1.msra.mxu0 %v396
    %680 = vmatprep.subr.mxu0 %v401
    %681 = vmatpush1.msra.mxu0 %v400
    %682 = vmatprep.subr.mxu0 %v405
    %683 = vmatpush1.msra.mxu0 %v404
    %684 = vmatprep.subr.mxu0 %v409
    %685 = vmatpush1.msra.mxu0 %v408
    %686 = vmatprep.subr.mxu0 %v413
    %687 = vmatpush1.msra.mxu0 %v412
    %688 = vmatprep.subr.mxu0 %v417
    %689 = vmatpush1.msra.mxu0 %v416
    %690 = vmatprep.subr.mxu0 %v421
    %691 = vmatpush1.msra.mxu0 %v420
    %692 = vmatprep.subr.mxu0 %v425
    %693 = vmatpush1.msra.mxu0 %v424
    %694 = vmatprep.subr.mxu0 %v429
    %695 = vmatpush1.msra.mxu0 %v428
    %696 = vmatprep.subr.mxu0 %v433
    %697 = vmatpush1.msra.mxu0 %v432
    %698 = vmatprep.subr.mxu0 %v437
    %699 = vmatpush1.msra.mxu0 %v436
    %700 = vmatprep.subr.mxu0 %v441
    %701 = vmatpush1.msra.mxu0 %v440
    %702 = vmatprep.subr.mxu0 0.0
    %703 = vmatpush1.msra.mxu0 0.0
    %704 = vmatprep.subr.mxu0 0.0
    %705 = vmatpush1.msra.mxu0 0.0
    %706 = vmatprep.subr.mxu0 0.0
    %707 = vmatpush1.msra.mxu0 0.0
    %708 = vmatprep.subr.mxu0 0.0
    %709 = vmatpush1.msra.mxu0 0.0
    %710 = vmatprep.subr.mxu0 0.0
    %711 = vmatpush1.msra.mxu0 0.0
    %712 = vmatprep.subr.mxu0 0.0
    %713 = vmatpush1.msra.mxu0 0.0
    %714 = vmatprep.subr.mxu0 0.0
    %715 = vmatpush1.msra.mxu0 0.0
    %716 = vmatprep.subr.mxu0 0.0
    %717 = vmatpush1.msra.mxu0 0.0
    %718 = vmatprep.subr.mxu0 0.0
    %719 = vmatpush1.msra.mxu0 0.0
    %720 = vmatprep.subr.mxu0 0.0
    %721 = vmatpush1.msra.mxu0 0.0
    %722 = vmatprep.subr.mxu0 0.0
    %723 = vmatpush1.msra.mxu0 0.0
    %724 = vmatprep.subr.mxu0 0.0
    %725 = vmatpush1.msra.mxu0 0.0
    %726 = vmatprep.subr.mxu0 0.0
    %727 = vmatpush1.msra.mxu0 0.0
    %728 = vmatprep.subr.mxu0 0.0
    %729 = vmatpush1.msra.mxu0 0.0
    %730 = vmatprep.subr.mxu0 0.0
    %731 = vmatpush1.msra.mxu0 0.0
    %732 = vmatprep.subr.mxu0 0.0
    %733 = vmatpush1.msra.mxu0 0.0
    %734 = vmatprep.mubr.f32.mxu0 0.0
    %735 = vmatmul.mubr.f32.gmra.mrb[0].mxu0 0.0
    %v736 = vpop.f32.mrb[0].mxu0
    %v737 = vadd.f32 0.0, %v736
    %v738 = vpop.f32.mrb[0].mxu0
    %v739 = vadd.f32 0.0, %v738
    %740 = vdwg.mxu0
    %v741 = vadd.f32 %v595, %v666
    %v742 = vadd.f32 %v596, %v668
    %v743 = vadd.f32 %v597, %v737
    %v744 = vadd.f32 %v598, %v739
    %v745 = vxor.u32 %v741, 2147483648
    %v746 = vmul.f32 %v745, 1.442695
    %v747 = vpow.pop %v746
    %v748 = vadd.f32 %v747, 1.0
    %v749 = vrcp.pop %v748
    %v750 = vmul.f32 1.0, %v749
    %v751 = vxor.u32 %v742, 2147483648
    %v752 = vmul.f32 %v751, 1.442695
    %v753 = vpow.pop %v752
    %v754 = vadd.f32 %v753, 1.0
    %v755 = vrcp.pop %v754
    %v756 = vmul.f32 1.0, %v755
    %v757 = vtanh.pop %v743
    %v758 = vxor.u32 %v744, 2147483648
    %v759 = vmul.f32 %v758, 1.442695
    %v760 = vpow.pop %v759
    %v761 = vadd.f32 %v760, 1.0
    %v762 = vrcp.pop %v761
    %v763 = vmul.f32 1.0, %v762
    %v764 = vmul.f32 %v756, 0.0
    %v765 = vmul.f32 %v750, %v757
    %v766 = vadd.f32 %v764, %v765
    %v767 = vtanh.pop %v766
    %v768 = vmul.f32 %v763, %v767
    %769 = vmatprep.subr.mxu0 %v443
    %770 = vmatpush1.msra.mxu0 %v442
    %771 = vmatprep.subr.mxu0 %v447
    %772 = vmatpush1.msra.mxu0 %v446
    %773 = vmatprep.subr.mxu0 %v451
    %774 = vmatpush1.msra.mxu0 %v450
    %775 = vmatprep.subr.mxu0 %v455
    %776 = vmatpush1.msra.mxu0 %v454
    %777 = vmatprep.subr.mxu0 %v459
    %778 = vmatpush1.msra.mxu0 %v458
    %779 = vmatprep.subr.mxu0 %v463
    %780 = vmatpush1.msra.mxu0 %v462
    %781 = vmatprep.subr.mxu0 %v467
    %782 = vmatpush1.msra.mxu0 %v466
    %783 = vmatprep.subr.mxu0 %v471
    %784 = vmatpush1.msra.mxu0 %v470
    %785 = vmatprep.subr.mxu0 %v475
    %786 = vmatpush1.msra.mxu0 %v474
    %787 = vmatprep.subr.mxu0 %v479
    %788 = vmatpush1.msra.mxu0 %v478
    %789 = vmatprep.subr.mxu0 %v483
    %790 = vmatpush1.msra.mxu0 %v482
    %791 = vmatprep.subr.mxu0 %v487
    %792 = vmatpush1.msra.mxu0 %v486
    %793 = vmatprep.subr.mxu0 %v491
    %794 = vmatpush1.msra.mxu0 %v490
    %795 = vmatprep.subr.mxu0 %v495
    %796 = vmatpush1.msra.mxu0 %v494
    %797 = vmatprep.subr.mxu0 %v499
    %798 = vmatpush1.msra.mxu0 %v498
    %799 = vmatprep.subr.mxu0 %v503
    %800 = vmatpush1.msra.mxu0 %v502
    %801 = vmatprep.subr.mxu0 %v507
    %802 = vmatpush1.msra.mxu0 %v506
    %803 = vmatprep.subr.mxu0 %v511
    %804 = vmatpush1.msra.mxu0 %v510
    %805 = vmatprep.subr.mxu0 %v515
    %806 = vmatpush1.msra.mxu0 %v514
    %807 = vmatprep.subr.mxu0 %v519
    %808 = vmatpush1.msra.mxu0 %v518
    %809 = vmatprep.subr.mxu0 %v523
    %810 = vmatpush1.msra.mxu0 %v522
    %811 = vmatprep.subr.mxu0 %v527
    %812 = vmatpush1.msra.mxu0 %v526
    %813 = vmatprep.subr.mxu0 %v531
    %814 = vmatpush1.msra.mxu0 %v530
    %815 = vmatprep.subr.mxu0 %v535
    %816 = vmatpush1.msra.mxu0 %v534
    %817 = vmatprep.subr.mxu0 %v539
    %818 = vmatpush1.msra.mxu0 %v538
    %819 = vmatprep.subr.mxu0 %v543
    %820 = vmatpush1.msra.mxu0 %v542
    %821 = vmatprep.subr.mxu0 %v547
    %822 = vmatpush1.msra.mxu0 %v546
    %823 = vmatprep.subr.mxu0 %v551
    %824 = vmatpush1.msra.mxu0 %v550
    %825 = vmatprep.subr.mxu0 %v555
    %826 = vmatpush1.msra.mxu0 %v554
    %827 = vmatprep.subr.mxu0 %v559
    %828 = vmatpush1.msra.mxu0 %v558
    %829 = vmatprep.subr.mxu0 %v563
    %830 = vmatpush1.msra.mxu0 %v562
    %831 = vmatprep.subr.mxu0 %v567
    %832 = vmatpush1.msra.mxu0 %v566
    %833 = vmatprep.mubr.f32.mxu0 0.0
    %834 = vmatmul.mubr.f32.gmra.mrb[0].mxu0 %v768
    %v835 = vpop.f32.mrb[0].mxu0
    %v836 = vadd.f32 %v575, %v835
    %v837 = vpop.f32.mrb[0].mxu0
    %v838 = vadd.f32 %v579, %v837
    %839 = vdwg.mxu0
    %840 = vmatprep.subr.mxu0 %v445
    %841 = vmatpush1.msra.mxu0 %v444
    %842 = vmatprep.subr.mxu0 %v449
    %843 = vmatpush1.msra.mxu0 %v448
    %844 = vmatprep.subr.mxu0 %v453
    %845 = vmatpush1.msra.mxu0 %v452
    %846 = vmatprep.subr.mxu0 %v457
    %847 = vmatpush1.msra.mxu0 %v456
    %848 = vmatprep.subr.mxu0 %v461
    %849 = vmatpush1.msra.mxu0 %v460
    %850 = vmatprep.subr.mxu0 %v465
    %851 = vmatpush1.msra.mxu0 %v464
    %852 = vmatprep.subr.mxu0 %v469
    %853 = vmatpush1.msra.mxu0 %v468
    %854 = vmatprep.subr.mxu0 %v473
    %855 = vmatpush1.msra.mxu0 %v472
    %856 = vmatprep.subr.mxu0 %v477
    %857 = vmatpush1.msra.mxu0 %v476
    %858 = vmatprep.subr.mxu0 %v481
    %859 = vmatpush1.msra.mxu0 %v480
    %860 = vmatprep.subr.mxu0 %v485
    %861 = vmatpush1.msra.mxu0 %v484
    %862 = vmatprep.subr.mxu0 %v489
    %863 = vmatpush1.msra.mxu0 %v488
    %864 = vmatprep.subr.mxu0 %v493
    %865 = vmatpush1.msra.mxu0 %v492
    %866 = vmatprep.subr.mxu0 %v497
    %867 = vmatpush1.msra.mxu0 %v496
    %868 = vmatprep.subr.mxu0 %v501
    %869 = vmatpush1.msra.mxu0 %v500
    %870 = vmatprep.subr.mxu0 %v505
    %871 = vmatpush1.msra.mxu0 %v504
    %872 = vmatprep.subr.mxu0 %v509
    %873 = vmatpush1.msra.mxu0 %v508
    %874 = vmatprep.subr.mxu0 %v513
    %875 = vmatpush1.msra.mxu0 %v512
    %876 = vmatprep.subr.mxu0 %v517
    %877 = vmatpush1.msra.mxu0 %v516
    %878 = vmatprep.subr.mxu0 %v521
    %879 = vmatpush1.msra.mxu0 %v520
    %880 = vmatprep.subr.mxu0 %v525
    %881 = vmatpush1.msra.mxu0 %v524
    %882 = vmatprep.subr.mxu0 %v529
    %883 = vmatpush1.msra.mxu0 %v528
    %884 = vmatprep.subr.mxu0 %v533
    %885 = vmatpush1.msra.mxu0 %v532
    %886 = vmatprep.subr.mxu0 %v537
    %887 = vmatpush1.msra.mxu0 %v536
    %888 = vmatprep.subr.mxu0 %v541
    %889 = vmatpush1.msra.mxu0 %v540
    %890 = vmatprep.subr.mxu0 %v545
    %891 = vmatpush1.msra.mxu0 %v544
    %892 = vmatprep.subr.mxu0 %v549
    %893 = vmatpush1.msra.mxu0 %v548
    %894 = vmatprep.subr.mxu0 %v553
    %895 = vmatpush1.msra.mxu0 %v552
    %896 = vmatprep.subr.mxu0 %v557
    %897 = vmatpush1.msra.mxu0 %v556
    %898 = vmatprep.subr.mxu0 %v561
    %899 = vmatpush1.msra.mxu0 %v560
    %900 = vmatprep.subr.mxu0 %v565
    %901 = vmatpush1.msra.mxu0 %v564
    %902 = vmatprep.subr.mxu0 %v569
    %903 = vmatpush1.msra.mxu0 %v568
    %904 = vmatprep.mubr.f32.mxu0 0.0
    %905 = vmatmul.mubr.f32.gmra.mrb[0].mxu0 %v768
    %v906 = vpop.f32.mrb[0].mxu0
    %v907 = vadd.f32 %v583, %v906
    %v908 = vpop.f32.mrb[0].mxu0
    %v909 = vadd.f32 %v587, %v908
    %910 = vdwg.mxu0
    %v911 = vxor.u32 %v836, 2147483648
    %v912 = vmul.f32 %v911, 1.442695
    %v913 = vpow.pop %v912
    %v914 = vadd.f32 %v913, 1.0
    %v915 = vrcp.pop %v914
    %v916 = vmul.f32 1.0, %v915
    %v917 = vxor.u32 %v838, 2147483648
    %v918 = vmul.f32 %v917, 1.442695
    %v919 = vpow.pop %v918
    %v920 = vadd.f32 %v919, 1.0
    %v921 = vrcp.pop %v920
    %v922 = vmul.f32 1.0, %v921
    %v923 = vtanh.pop %v907
    %v924 = vxor.u32 %v909, 2147483648
    %v925 = vmul.f32 %v924, 1.442695
    %v926 = vpow.pop %v925
    %v927 = vadd.f32 %v926, 1.0
    %v928 = vrcp.pop %v927
    %v929 = vmul.f32 1.0, %v928
    %v930 = vmul.f32 %v922, 0.0
    %v931 = vmul.f32 %v916, %v923
    %v932 = vadd.f32 %v930, %v931
    %v933 = vtanh.pop %v932
    %v934 = vmul.f32 %v929, %v933
    %s935 = smul.u32 1, 4
    %s936 = smul.addr %s935, 8
    %s937 = scalar_lea.vmem [#allocation2], %s936
    %v938 = vld [vmem:[%s937] sm:$0xff]
    %v939 = vld [vmem:[%s937 + $0x8] sm:$0xff]
    %v940 = vld [vmem:[%s937 + $0x10] sm:$0xff]
    %v941 = vld [vmem:[%s937 + $0x18] sm:$0xff]
    %942 = vmatprep.subr.mxu0 %v379
    %943 = vmatpush1.msra.mxu0 %v378
    %944 = vmatprep.subr.mxu0 %v383
    %945 = vmatpush1.msra.mxu0 %v382
    %946 = vmatprep.subr.mxu0 %v387
    %947 = vmatpush1.msra.mxu0 %v386
    %948 = vmatprep.subr.mxu0 %v391
    %949 = vmatpush1.msra.mxu0 %v390
    %950 = vmatprep.subr.mxu0 %v395
    %951 = vmatpush1.msra.mxu0 %v394
    %952 = vmatprep.subr.mxu0 %v399
    %953 = vmatpush1.msra.mxu0 %v398
    %954 = vmatprep.subr.mxu0 %v403
    %955 = vmatpush1.msra.mxu0 %v402
    %956 = vmatprep.subr.mxu0 %v407
    %957 = vmatpush1.msra.mxu0 %v406
    %958 = vmatprep.subr.mxu0 %v411
    %959 = vmatpush1.msra.mxu0 %v410
    %960 = vmatprep.subr.mxu0 %v415
    %961 = vmatpush1.msra.mxu0 %v414
    %962 = vmatprep.subr.mxu0 %v419
    %963 = vmatpush1.msra.mxu0 %v418
    %964 = vmatprep.subr.mxu0 %v423
    %965 = vmatpush1.msra.mxu0 %v422
    %966 = vmatprep.subr.mxu0 %v427
    %967 = vmatpush1.msra.mxu0 %v426
    %968 = vmatprep.subr.mxu0 %v431
    %969 = vmatpush1.msra.mxu0 %v430
    %970 = vmatprep.subr.mxu0 %v435
    %971 = vmatpush1.msra.mxu0 %v434
    %972 = vmatprep.subr.mxu0 %v439
    %973 = vmatpush1.msra.mxu0 %v438
    %974 = vmatprep.subr.mxu0 0.0
    %975 = vmatpush1.msra.mxu0 0.0
    %976 = vmatprep.subr.mxu0 0.0
    %977 = vmatpush1.msra.mxu0 0.0
    %978 = vmatprep.subr.mxu0 0.0
    %979 = vmatpush1.msra.mxu0 0.0
    %980 = vmatprep.subr.mxu0 0.0
    %981 = vmatpush1.msra.mxu0 0.0
    %982 = vmatprep.subr.mxu0 0.0
    %983 = vmatpush1.msra.mxu0 0.0
    %984 = vmatprep.subr.mxu0 0.0
    %985 = vmatpush1.msra.mxu0 0.0
    %986 = vmatprep.subr.mxu0 0.0
    %987 = vmatpush1.msra.mxu0 0.0
    %988 = vmatprep.subr.mxu0 0.0
    %989 = vmatpush1.msra.mxu0 0.0
    %990 = vmatprep.subr.mxu0 0.0
    %991 = vmatpush1.msra.mxu0 0.0
    %992 = vmatprep.subr.mxu0 0.0
    %993 = vmatpush1.msra.mxu0 0.0
    %994 = vmatprep.subr.mxu0 0.0
    %995 = vmatpush1.msra.mxu0 0.0
    %996 = vmatprep.subr.mxu0 0.0
    %997 = vmatpush1.msra.mxu0 0.0
    %998 = vmatprep.subr.mxu0 0.0
    %999 = vmatpush1.msra.mxu0 0.0
    %1000 = vmatprep.subr.mxu0 0.0
    %1001 = vmatpush1.msra.mxu0 0.0
    %1002 = vmatprep.subr.mxu0 0.0
    %1003 = vmatpush1.msra.mxu0 0.0
    %1004 = vmatprep.subr.mxu0 0.0
    %1005 = vmatpush1.msra.mxu0 0.0
    %1006 = vmatprep.mubr.f32.mxu0 0.0
    %1007 = vmatmul.mubr.f32.gmra.mrb[0].mxu0 %v768
    %v1008 = vpop.f32.mrb[0].mxu0
    %v1009 = vadd.f32 0.0, %v1008
    %v1010 = vpop.f32.mrb[0].mxu0
    %v1011 = vadd.f32 0.0, %v1010
    %1012 = vdwg.mxu0
    %1013 = vmatprep.subr.mxu0 %v381
    %1014 = vmatpush1.msra.mxu0 %v380
    %1015 = vmatprep.subr.mxu0 %v385
    %1016 = vmatpush1.msra.mxu0 %v384
    %1017 = vmatprep.subr.mxu0 %v389
    %1018 = vmatpush1.msra.mxu0 %v388
    %1019 = vmatprep.subr.mxu0 %v393
    %1020 = vmatpush1.msra.mxu0 %v392
    %1021 = vmatprep.subr.mxu0 %v397
    %1022 = vmatpush1.msra.mxu0 %v396
    %1023 = vmatprep.subr.mxu0 %v401
    %1024 = vmatpush1.msra.mxu0 %v400
    %1025 = vmatprep.subr.mxu0 %v405
    %1026 = vmatpush1.msra.mxu0 %v404
    %1027 = vmatprep.subr.mxu0 %v409
    %1028 = vmatpush1.msra.mxu0 %v408
    %1029 = vmatprep.subr.mxu0 %v413
    %1030 = vmatpush1.msra.mxu0 %v412
    %1031 = vmatprep.subr.mxu0 %v417
    %1032 = vmatpush1.msra.mxu0 %v416
    %1033 = vmatprep.subr.mxu0 %v421
    %1034 = vmatpush1.msra.mxu0 %v420
    %1035 = vmatprep.subr.mxu0 %v425
    %1036 = vmatpush1.msra.mxu0 %v424
    %1037 = vmatprep.subr.mxu0 %v429
    %1038 = vmatpush1.msra.mxu0 %v428
    %1039 = vmatprep.subr.mxu0 %v433
    %1040 = vmatpush1.msra.mxu0 %v432
    %1041 = vmatprep.subr.mxu0 %v437
    %1042 = vmatpush1.msra.mxu0 %v436
    %1043 = vmatprep.subr.mxu0 %v441
    %1044 = vmatpush1.msra.mxu0 %v440
    %1045 = vmatprep.subr.mxu0 0.0
    %1046 = vmatpush1.msra.mxu0 0.0
    %1047 = vmatprep.subr.mxu0 0.0
    %1048 = vmatpush1.msra.mxu0 0.0
    %1049 = vmatprep.subr.mxu0 0.0
    %1050 = vmatpush1.msra.mxu0 0.0
    %1051 = vmatprep.subr.mxu0 0.0
    %1052 = vmatpush1.msra.mxu0 0.0
    %1053 = vmatprep.subr.mxu0 0.0
    %1054 = vmatpush1.msra.mxu0 0.0
    %1055 = vmatprep.subr.mxu0 0.0
    %1056 = vmatpush1.msra.mxu0 0.0
    %1057 = vmatprep.subr.mxu0 0.0
    %1058 = vmatpush1.msra.mxu0 0.0
    %1059 = vmatprep.subr.mxu0 0.0
    %1060 = vmatpush1.msra.mxu0 0.0
    %1061 = vmatprep.subr.mxu0 0.0
    %1062 = vmatpush1.msra.mxu0 0.0
    %1063 = vmatprep.subr.mxu0 0.0
    %1064 = vmatpush1.msra.mxu0 0.0
    %1065 = vmatprep.subr.mxu0 0.0
    %1066 = vmatpush1.msra.mxu0 0.0
    %1067 = vmatprep.subr.mxu0 0.0
    %1068 = vmatpush1.msra.mxu0 0.0
    %1069 = vmatprep.subr.mxu0 0.0
    %1070 = vmatpush1.msra.mxu0 0.0
    %1071 = vmatprep.subr.mxu0 0.0
    %1072 = vmatpush1.msra.mxu0 0.0
    %1073 = vmatprep.subr.mxu0 0.0
    %1074 = vmatpush1.msra.mxu0 0.0
    %1075 = vmatprep.subr.mxu0 0.0
    %1076 = vmatpush1.msra.mxu0 0.0
    %1077 = vmatprep.mubr.f32.mxu0 0.0
    %1078 = vmatmul.mubr.f32.gmra.mrb[0].mxu0 %v768
    %v1079 = vpop.f32.mrb[0].mxu0
    %v1080 = vadd.f32 0.0, %v1079
    %v1081 = vpop.f32.mrb[0].mxu0
    %v1082 = vadd.f32 0.0, %v1081
    %1083 = vdwg.mxu0
    %v1084 = vadd.f32 %v938, %v1009
    %v1085 = vadd.f32 %v939, %v1011
    %v1086 = vadd.f32 %v940, %v1080
    %v1087 = vadd.f32 %v941, %v1082
    %v1088 = vxor.u32 %v1084, 2147483648
    %v1089 = vmul.f32 %v1088, 1.442695
    %v1090 = vpow.pop %v1089
    %v1091 = vadd.f32 %v1090, 1.0
    %v1092 = vrcp.pop %v1091
    %v1093 = vmul.f32 1.0, %v1092
    %v1094 = vxor.u32 %v1085, 2147483648
    %v1095 = vmul.f32 %v1094, 1.442695
    %v1096 = vpow.pop %v1095
    %v1097 = vadd.f32 %v1096, 1.0
    %v1098 = vrcp.pop %v1097
    %v1099 = vmul.f32 1.0, %v1098
    %v1100 = vtanh.pop %v1086
    %v1101 = vxor.u32 %v1087, 2147483648
    %v1102 = vmul.f32 %v1101, 1.442695
    %v1103 = vpow.pop %v1102
    %v1104 = vadd.f32 %v1103, 1.0
    %v1105 = vrcp.pop %v1104
    %v1106 = vmul.f32 1.0, %v1105
    %v1107 = vmul.f32 %v1099, %v766
    %v1108 = vmul.f32 %v1093, %v1100
    %v1109 = vadd.f32 %v1107, %v1108
    %v1110 = vtanh.pop %v1109
    %v1111 = vmul.f32 %v1106, %v1110
    %1112 = vmatprep.subr.mxu0 %v443
    %1113 = vmatpush1.msra.mxu0 %v442
    %1114 = vmatprep.subr.mxu0 %v447
    %1115 = vmatpush1.msra.mxu0 %v446
    %1116 = vmatprep.subr.mxu0 %v451
    %1117 = vmatpush1.msra.mxu0 %v450
    %1118 = vmatprep.subr.mxu0 %v455
    %1119 = vmatpush1.msra.mxu0 %v454
    %1120 = vmatprep.subr.mxu0 %v459
    %1121 = vmatpush1.msra.mxu0 %v458
    %1122 = vmatprep.subr.mxu0 %v463
    %1123 = vmatpush1.msra.mxu0 %v462
    %1124 = vmatprep.subr.mxu0 %v467
    %1125 = vmatpush1.msra.mxu0 %v466
    %1126 = vmatprep.subr.mxu0 %v471
    %1127 = vmatpush1.msra.mxu0 %v470
    %1128 = vmatprep.subr.mxu0 %v475
    %1129 = vmatpush1.msra.mxu0 %v474
    %1130 = vmatprep.subr.mxu0 %v479
    %1131 = vmatpush1.msra.mxu0 %v478
    %1132 = vmatprep.subr.mxu0 %v483
    %1133 = vmatpush1.msra.mxu0 %v482
    %1134 = vmatprep.subr.mxu0 %v487
    %1135 = vmatpush1.msra.mxu0 %v486
    %1136 = vmatprep.subr.mxu0 %v491
    %1137 = vmatpush1.msra.mxu0 %v490
    %1138 = vmatprep.subr.mxu0 %v495
    %1139 = vmatpush1.msra.mxu0 %v494
    %1140 = vmatprep.subr.mxu0 %v499
    %1141 = vmatpush1.msra.mxu0 %v498
    %1142 = vmatprep.subr.mxu0 %v503
    %1143 = vmatpush1.msra.mxu0 %v502
    %1144 = vmatprep.subr.mxu0 %v507
    %1145 = vmatpush1.msra.mxu0 %v506
    %1146 = vmatprep.subr.mxu0 %v511
    %1147 = vmatpush1.msra.mxu0 %v510
    %1148 = vmatprep.subr.mxu0 %v515
    %1149 = vmatpush1.msra.mxu0 %v514
    %1150 = vmatprep.subr.mxu0 %v519
    %1151 = vmatpush1.msra.mxu0 %v518
    %1152 = vmatprep.subr.mxu0 %v523
    %1153 = vmatpush1.msra.mxu0 %v522
    %1154 = vmatprep.subr.mxu0 %v527
    %1155 = vmatpush1.msra.mxu0 %v526
    %1156 = vmatprep.subr.mxu0 %v531
    %1157 = vmatpush1.msra.mxu0 %v530
    %1158 = vmatprep.subr.mxu0 %v535
    %1159 = vmatpush1.msra.mxu0 %v534
    %1160 = vmatprep.subr.mxu0 %v539
    %1161 = vmatpush1.msra.mxu0 %v538
    %1162 = vmatprep.subr.mxu0 %v543
    %1163 = vmatpush1.msra.mxu0 %v542
    %1164 = vmatprep.subr.mxu0 %v547
    %1165 = vmatpush1.msra.mxu0 %v546
    %1166 = vmatprep.subr.mxu0 %v551
    %1167 = vmatpush1.msra.mxu0 %v550
    %1168 = vmatprep.subr.mxu0 %v555
    %1169 = vmatpush1.msra.mxu0 %v554
    %1170 = vmatprep.subr.mxu0 %v559
    %1171 = vmatpush1.msra.mxu0 %v558
    %1172 = vmatprep.subr.mxu0 %v563
    %1173 = vmatpush1.msra.mxu0 %v562
    %1174 = vmatprep.subr.mxu0 %v567
    %1175 = vmatpush1.msra.mxu0 %v566
    %1176 = vmatprep.mubr.f32.mxu0 %v934
    %1177 = vmatmul.mubr.f32.gmra.mrb[0].mxu0 %v1111
    %v1178 = vpop.f32.mrb[0].mxu0
    %v1179 = vadd.f32 %v575, %v1178
    %v1180 = vpop.f32.mrb[0].mxu0
    %v1181 = vadd.f32 %v579, %v1180
    %1182 = vdwg.mxu0
    %1183 = vmatprep.subr.mxu0 %v445
    %1184 = vmatpush1.msra.mxu0 %v444
    %1185 = vmatprep.subr.mxu0 %v449
    %1186 = vmatpush1.msra.mxu0 %v448
    %1187 = vmatprep.subr.mxu0 %v453
    %1188 = vmatpush1.msra.mxu0 %v452
    %1189 = vmatprep.subr.mxu0 %v457
    %1190 = vmatpush1.msra.mxu0 %v456
    %1191 = vmatprep.subr.mxu0 %v461
    %1192 = vmatpush1.msra.mxu0 %v460
    %1193 = vmatprep.subr.mxu0 %v465
    %1194 = vmatpush1.msra.mxu0 %v464
    %1195 = vmatprep.subr.mxu0 %v469
    %1196 = vmatpush1.msra.mxu0 %v468
    %1197 = vmatprep.subr.mxu0 %v473
    %1198 = vmatpush1.msra.mxu0 %v472
    %1199 = vmatprep.subr.mxu0 %v477
    %1200 = vmatpush1.msra.mxu0 %v476
    %1201 = vmatprep.subr.mxu0 %v481
    %1202 = vmatpush1.msra.mxu0 %v480
    %1203 = vmatprep.subr.mxu0 %v485
    %1204 = vmatpush1.msra.mxu0 %v484
    %1205 = vmatprep.subr.mxu0 %v489
    %1206 = vmatpush1.msra.mxu0 %v488
    %1207 = vmatprep.subr.mxu0 %v493
    %1208 = vmatpush1.msra.mxu0 %v492
    %1209 = vmatprep.subr.mxu0 %v497
    %1210 = vmatpush1.msra.mxu0 %v496
    %1211 = vmatprep.subr.mxu0 %v501
    %1212 = vmatpush1.msra.mxu0 %v500
    %1213 = vmatprep.subr.mxu0 %v505
    %1214 = vmatpush1.msra.mxu0 %v504
    %1215 = vmatprep.subr.mxu0 %v509
    %1216 = vmatpush1.msra.mxu0 %v508
    %1217 = vmatprep.subr.mxu0 %v513
    %1218 = vmatpush1.msra.mxu0 %v512
    %1219 = vmatprep.subr.mxu0 %v517
    %1220 = vmatpush1.msra.mxu0 %v516
    %1221 = vmatprep.subr.mxu0 %v521
    %1222 = vmatpush1.msra.mxu0 %v520
    %1223 = vmatprep.subr.mxu0 %v525
    %1224 = vmatpush1.msra.mxu0 %v524
    %1225 = vmatprep.subr.mxu0 %v529
    %1226 = vmatpush1.msra.mxu0 %v528
    %1227 = vmatprep.subr.mxu0 %v533
    %1228 = vmatpush1.msra.mxu0 %v532
    %1229 = vmatprep.subr.mxu0 %v537
    %1230 = vmatpush1.msra.mxu0 %v536
    %1231 = vmatprep.subr.mxu0 %v541
    %1232 = vmatpush1.msra.mxu0 %v540
    %1233 = vmatprep.subr.mxu0 %v545
    %1234 = vmatpush1.msra.mxu0 %v544
    %1235 = vmatprep.subr.mxu0 %v549
    %1236 = vmatpush1.msra.mxu0 %v548
    %1237 = vmatprep.subr.mxu0 %v553
    %1238 = vmatpush1.msra.mxu0 %v552
    %1239 = vmatprep.subr.mxu0 %v557
    %1240 = vmatpush1.msra.mxu0 %v556
    %1241 = vmatprep.subr.mxu0 %v561
    %1242 = vmatpush1.msra.mxu0 %v560
    %1243 = vmatprep.subr.mxu0 %v565
    %1244 = vmatpush1.msra.mxu0 %v564
    %1245 = vmatprep.subr.mxu0 %v569
    %1246 = vmatpush1.msra.mxu0 %v568
    %1247 = vmatprep.mubr.f32.mxu0 %v934
    %1248 = vmatmul.mubr.f32.gmra.mrb[0].mxu0 %v1111
    %v1249 = vpop.f32.mrb[0].mxu0
    %v1250 = vadd.f32 %v583, %v1249
    %v1251 = vpop.f32.mrb[0].mxu0
    %v1252 = vadd.f32 %v587, %v1251
    %1253 = vdwg.mxu0
    %v1254 = vxor.u32 %v1179, 2147483648
    %v1255 = vmul.f32 %v1254, 1.442695
    %v1256 = vpow.pop %v1255
    %v1257 = vadd.f32 %v1256, 1.0
    %v1258 = vrcp.pop %v1257
    %v1259 = vmul.f32 1.0, %v1258
    %v1260 = vxor.u32 %v1181, 2147483648
    %v1261 = vmul.f32 %v1260, 1.442695
    %v1262 = vpow.pop %v1261
    %v1263 = vadd.f32 %v1262, 1.0
    %v1264 = vrcp.pop %v1263
    %v1265 = vmul.f32 1.0, %v1264
    %v1266 = vtanh.pop %v1250
    %v1267 = vxor.u32 %v1252, 2147483648
    %v1268 = vmul.f32 %v1267, 1.442695
    %v1269 = vpow.pop %v1268
    %v1270 = vadd.f32 %v1269, 1.0
    %v1271 = vrcp.pop %v1270
    %v1272 = vmul.f32 1.0, %v1271
    %v1273 = vmul.f32 %v1265, %v932
    %v1274 = vmul.f32 %v1259, %v1266
    %v1275 = vadd.f32 %v1273, %v1274
    %v1276 = vtanh.pop %v1275
    %v1277 = vmul.f32 %v1272, %v1276
    %s1278 = smul.u32 2, 4
    %s1279 = smul.addr %s1278, 8
    %s1280 = scalar_lea.vmem [#allocation2], %s1279
    %v1281 = vld [vmem:[%s1280] sm:$0xff]
    %v1282 = vld [vmem:[%s1280 + $0x8] sm:$0xff]
    %v1283 = vld [vmem:[%s1280 + $0x10] sm:$0xff]
    %v1284 = vld [vmem:[%s1280 + $0x18] sm:$0xff]
    %1285 = vmatprep.subr.mxu0 %v379
    %1286 = vmatpush1.msra.mxu0 %v378
    %1287 = vmatprep.subr.mxu0 %v383
    %1288 = vmatpush1.msra.mxu0 %v382
    %1289 = vmatprep.subr.mxu0 %v387
    %1290 = vmatpush1.msra.mxu0 %v386
    %1291 = vmatprep.subr.mxu0 %v391
    %1292 = vmatpush1.msra.mxu0 %v390
    %1293 = vmatprep.subr.mxu0 %v395
    %1294 = vmatpush1.msra.mxu0 %v394
    %1295 = vmatprep.subr.mxu0 %v399
    %1296 = vmatpush1.msra.mxu0 %v398
    %1297 = vmatprep.subr.mxu0 %v403
    %1298 = vmatpush1.msra.mxu0 %v402
    %1299 = vmatprep.subr.mxu0 %v407
    %1300 = vmatpush1.msra.mxu0 %v406
    %1301 = vmatprep.subr.mxu0 %v411
    %1302 = vmatpush1.msra.mxu0 %v410
    %1303 = vmatprep.subr.mxu0 %v415
    %1304 = vmatpush1.msra.mxu0 %v414
    %1305 = vmatprep.subr.mxu0 %v419
    %1306 = vmatpush1.msra.mxu0 %v418
    %1307 = vmatprep.subr.mxu0 %v423
    %1308 = vmatpush1.msra.mxu0 %v422
    %1309 = vmatprep.subr.mxu0 %v427
    %1310 = vmatpush1.msra.mxu0 %v426
    %1311 = vmatprep.subr.mxu0 %v431
    %1312 = vmatpush1.msra.mxu0 %v430
    %1313 = vmatprep.subr.mxu0 %v435
    %1314 = vmatpush1.msra.mxu0 %v434
    %1315 = vmatprep.subr.mxu0 %v439
    %1316 = vmatpush1.msra.mxu0 %v438
    %1317 = vmatprep.subr.mxu0 0.0
    %1318 = vmatpush1.msra.mxu0 0.0
    %1319 = vmatprep.subr.mxu0 0.0
    %1320 = vmatpush1.msra.mxu0 0.0
    %1321 = vmatprep.subr.mxu0 0.0
    %1322 = vmatpush1.msra.mxu0 0.0
    %1323 = vmatprep.subr.mxu0 0.0
    %1324 = vmatpush1.msra.mxu0 0.0
    %1325 = vmatprep.subr.mxu0 0.0
    %1326 = vmatpush1.msra.mxu0 0.0
    %1327 = vmatprep.subr.mxu0 0.0
    %1328 = vmatpush1.msra.mxu0 0.0
    %1329 = vmatprep.subr.mxu0 0.0
    %1330 = vmatpush1.msra.mxu0 0.0
    %1331 = vmatprep.subr.mxu0 0.0
    %1332 = vmatpush1.msra.mxu0 0.0
    %1333 = vmatprep.subr.mxu0 0.0
    %1334 = vmatpush1.msra.mxu0 0.0
    %1335 = vmatprep.subr.mxu0 0.0
    %1336 = vmatpush1.msra.mxu0 0.0
    %1337 = vmatprep.subr.mxu0 0.0
    %1338 = vmatpush1.msra.mxu0 0.0
    %1339 = vmatprep.subr.mxu0 0.0
    %1340 = vmatpush1.msra.mxu0 0.0
    %1341 = vmatprep.subr.mxu0 0.0
    %1342 = vmatpush1.msra.mxu0 0.0
    %1343 = vmatprep.subr.mxu0 0.0
    %1344 = vmatpush1.msra.mxu0 0.0
    %1345 = vmatprep.subr.mxu0 0.0
    %1346 = vmatpush1.msra.mxu0 0.0
    %1347 = vmatprep.subr.mxu0 0.0
    %1348 = vmatpush1.msra.mxu0 0.0
    %1349 = vmatprep.mubr.f32.mxu0 0.0
    %1350 = vmatmul.mubr.f32.gmra.mrb[0].mxu0 %v1111
    %v1351 = vpop.f32.mrb[0].mxu0
    %v1352 = vadd.f32 0.0, %v1351
    %v1353 = vpop.f32.mrb[0].mxu0
    %v1354 = vadd.f32 0.0, %v1353
    %1355 = vdwg.mxu0
    %1356 = vmatprep.subr.mxu0 %v381
    %1357 = vmatpush1.msra.mxu0 %v380
    %1358 = vmatprep.subr.mxu0 %v385
    %1359 = vmatpush1.msra.mxu0 %v384
    %1360 = vmatprep.subr.mxu0 %v389
    %1361 = vmatpush1.msra.mxu0 %v388
    %1362 = vmatprep.subr.mxu0 %v393
    %1363 = vmatpush1.msra.mxu0 %v392
    %1364 = vmatprep.subr.mxu0 %v397
    %1365 = vmatpush1.msra.mxu0 %v396
    %1366 = vmatprep.subr.mxu0 %v401
    %1367 = vmatpush1.msra.mxu0 %v400
    %1368 = vmatprep.subr.mxu0 %v405
    %1369 = vmatpush1.msra.mxu0 %v404
    %1370 = vmatprep.subr.mxu0 %v409
    %1371 = vmatpush1.msra.mxu0 %v408
    %1372 = vmatprep.subr.mxu0 %v413
    %1373 = vmatpush1.msra.mxu0 %v412
    %1374 = vmatprep.subr.mxu0 %v417
    %1375 = vmatpush1.msra.mxu0 %v416
    %1376 = vmatprep.subr.mxu0 %v421
    %1377 = vmatpush1.msra.mxu0 %v420
    %1378 = vmatprep.subr.mxu0 %v425
    %1379 = vmatpush1.msra.mxu0 %v424
    %1380 = vmatprep.subr.mxu0 %v429
    %1381 = vmatpush1.msra.mxu0 %v428
    %1382 = vmatprep.subr.mxu0 %v433
    %1383 = vmatpush1.msra.mxu0 %v432
    %1384 = vmatprep.subr.mxu0 %v437
    %1385 = vmatpush1.msra.mxu0 %v436
    %1386 = vmatprep.subr.mxu0 %v441
    %1387 = vmatpush1.msra.mxu0 %v440
    %1388 = vmatprep.subr.mxu0 0.0
    %1389 = vmatpush1.msra.mxu0 0.0
    %1390 = vmatprep.subr.mxu0 0.0
    %1391 = vmatpush1.msra.mxu0 0.0
    %1392 = vmatprep.subr.mxu0 0.0
    %1393 = vmatpush1.msra.mxu0 0.0
    %1394 = vmatprep.subr.mxu0 0.0
    %1395 = vmatpush1.msra.mxu0 0.0
    %1396 = vmatprep.subr.mxu0 0.0
    %1397 = vmatpush1.msra.mxu0 0.0
    %1398 = vmatprep.subr.mxu0 0.0
    %1399 = vmatpush1.msra.mxu0 0.0
    %1400 = vmatprep.subr.mxu0 0.0
    %1401 = vmatpush1.msra.mxu0 0.0
    %1402 = vmatprep.subr.mxu0 0.0
    %1403 = vmatpush1.msra.mxu0 0.0
    %1404 = vmatprep.subr.mxu0 0.0
    %1405 = vmatpush1.msra.mxu0 0.0
    %1406 = vmatprep.subr.mxu0 0.0
    %1407 = vmatpush1.msra.mxu0 0.0
    %1408 = vmatprep.subr.mxu0 0.0
    %1409 = vmatpush1.msra.mxu0 0.0
    %1410 = vmatprep.subr.mxu0 0.0
    %1411 = vmatpush1.msra.mxu0 0.0
    %1412 = vmatprep.subr.mxu0 0.0
    %1413 = vmatpush1.msra.mxu0 0.0
    %1414 = vmatprep.subr.mxu0 0.0
    %1415 = vmatpush1.msra.mxu0 0.0
    %1416 = vmatprep.subr.mxu0 0.0
    %1417 = vmatpush1.msra.mxu0 0.0
    %1418 = vmatprep.subr.mxu0 0.0
    %1419 = vmatpush1.msra.mxu0 0.0
    %1420 = vmatprep.mubr.f32.mxu0 0.0
    %1421 = vmatmul.mubr.f32.gmra.mrb[0].mxu0 %v1111
    %v1422 = vpop.f32.mrb[0].mxu0
    %v1423 = vadd.f32 0.0, %v1422
    %v1424 = vpop.f32.mrb[0].mxu0
    %v1425 = vadd.f32 0.0, %v1424
    %1426 = vdwg.mxu0
    %v1427 = vadd.f32 %v1281, %v1352
    %v1428 = vadd.f32 %v1282, %v1354
    %v1429 = vadd.f32 %v1283, %v1423
    %v1430 = vadd.f32 %v1284, %v1425
    %v1431 = vxor.u32 %v1427, 2147483648
    %v1432 = vmul.f32 %v1431, 1.442695
    %v1433 = vpow.pop %v1432
    %v1434 = vadd.f32 %v1433, 1.0
    %v1435 = vrcp.pop %v1434
    %v1436 = vmul.f32 1.0, %v1435
    %v1437 = vxor.u32 %v1428, 2147483648
    %v1438 = vmul.f32 %v1437, 1.442695
    %v1439 = vpow.pop %v1438
    %v1440 = vadd.f32 %v1439, 1.0
    %v1441 = vrcp.pop %v1440
    %v1442 = vmul.f32 1.0, %v1441
    %v1443 = vtanh.pop %v1429
    %v1444 = vxor.u32 %v1430, 2147483648
    %v1445 = vmul.f32 %v1444, 1.442695
    %v1446 = vpow.pop %v1445
    %v1447 = vadd.f32 %v1446, 1.0
    %v1448 = vrcp.pop %v1447
    %v1449 = vmul.f32 1.0, %v1448
    %v1450 = vmul.f32 %v1442, %v1109
    %v1451 = vmul.f32 %v1436, %v1443
    %v1452 = vadd.f32 %v1450, %v1451
    %v1453 = vtanh.pop %v1452
    %v1454 = vmul.f32 %v1449, %v1453
    %1455 = vmatprep.subr.mxu0 %v443
    %1456 = vmatpush1.msra.mxu0 %v442
    %1457 = vmatprep.subr.mxu0 %v447
    %1458 = vmatpush1.msra.mxu0 %v446
    %1459 = vmatprep.subr.mxu0 %v451
    %1460 = vmatpush1.msra.mxu0 %v450
    %1461 = vmatprep.subr.mxu0 %v455
    %1462 = vmatpush1.msra.mxu0 %v454
    %1463 = vmatprep.subr.mxu0 %v459
    %1464 = vmatpush1.msra.mxu0 %v458
    %1465 = vmatprep.subr.mxu0 %v463
    %1466 = vmatpush1.msra.mxu0 %v462
    %1467 = vmatprep.subr.mxu0 %v467
    %1468 = vmatpush1.msra.mxu0 %v466
    %1469 = vmatprep.subr.mxu0 %v471
    %1470 = vmatpush1.msra.mxu0 %v470
    %1471 = vmatprep.subr.mxu0 %v475
    %1472 = vmatpush1.msra.mxu0 %v474
    %1473 = vmatprep.subr.mxu0 %v479
    %1474 = vmatpush1.msra.mxu0 %v478
    %1475 = vmatprep.subr.mxu0 %v483
    %1476 = vmatpush1.msra.mxu0 %v482
    %1477 = vmatprep.subr.mxu0 %v487
    %1478 = vmatpush1.msra.mxu0 %v486
    %1479 = vmatprep.subr.mxu0 %v491
    %1480 = vmatpush1.msra.mxu0 %v490
    %1481 = vmatprep.subr.mxu0 %v495
    %1482 = vmatpush1.msra.mxu0 %v494
    %1483 = vmatprep.subr.mxu0 %v499
    %1484 = vmatpush1.msra.mxu0 %v498
    %1485 = vmatprep.subr.mxu0 %v503
    %1486 = vmatpush1.msra.mxu0 %v502
    %1487 = vmatprep.subr.mxu0 %v507
    %1488 = vmatpush1.msra.mxu0 %v506
    %1489 = vmatprep.subr.mxu0 %v511
    %1490 = vmatpush1.msra.mxu0 %v510
    %1491 = vmatprep.subr.mxu0 %v515
    %1492 = vmatpush1.msra.mxu0 %v514
    %1493 = vmatprep.subr.mxu0 %v519
    %1494 = vmatpush1.msra.mxu0 %v518
    %1495 = vmatprep.subr.mxu0 %v523
    %1496 = vmatpush1.msra.mxu0 %v522
    %1497 = vmatprep.subr.mxu0 %v527
    %1498 = vmatpush1.msra.mxu0 %v526
    %1499 = vmatprep.subr.mxu0 %v531
    %1500 = vmatpush1.msra.mxu0 %v530
    %1501 = vmatprep.subr.mxu0 %v535
    %1502 = vmatpush1.msra.mxu0 %v534
    %1503 = vmatprep.subr.mxu0 %v539
    %1504 = vmatpush1.msra.mxu0 %v538
    %1505 = vmatprep.subr.mxu0 %v543
    %1506 = vmatpush1.msra.mxu0 %v542
    %1507 = vmatprep.subr.mxu0 %v547
    %1508 = vmatpush1.msra.mxu0 %v546
    %1509 = vmatprep.subr.mxu0 %v551
    %1510 = vmatpush1.msra.mxu0 %v550
    %1511 = vmatprep.subr.mxu0 %v555
    %1512 = vmatpush1.msra.mxu0 %v554
    %1513 = vmatprep.subr.mxu0 %v559
    %1514 = vmatpush1.msra.mxu0 %v558
    %1515 = vmatprep.subr.mxu0 %v563
    %1516 = vmatpush1.msra.mxu0 %v562
    %1517 = vmatprep.subr.mxu0 %v567
    %1518 = vmatpush1.msra.mxu0 %v566
    %1519 = vmatprep.mubr.f32.mxu0 %v1277
    %1520 = vmatmul.mubr.f32.gmra.mrb[0].mxu0 %v1454
    %v1521 = vpop.f32.mrb[0].mxu0
    %v1522 = vadd.f32 %v575, %v1521
    %v1523 = vpop.f32.mrb[0].mxu0
    %v1524 = vadd.f32 %v579, %v1523
    %1525 = vdwg.mxu0
    %1526 = vmatprep.subr.mxu0 %v445
    %1527 = vmatpush1.msra.mxu0 %v444
    %1528 = vmatprep.subr.mxu0 %v449
    %1529 = vmatpush1.msra.mxu0 %v448
    %1530 = vmatprep.subr.mxu0 %v453
    %1531 = vmatpush1.msra.mxu0 %v452
    %1532 = vmatprep.subr.mxu0 %v457
    %1533 = vmatpush1.msra.mxu0 %v456
    %1534 = vmatprep.subr.mxu0 %v461
    %1535 = vmatpush1.msra.mxu0 %v460
    %1536 = vmatprep.subr.mxu0 %v465
    %1537 = vmatpush1.msra.mxu0 %v464
    %1538 = vmatprep.subr.mxu0 %v469
    %1539 = vmatpush1.msra.mxu0 %v468
    %1540 = vmatprep.subr.mxu0 %v473
    %1541 = vmatpush1.msra.mxu0 %v472
    %1542 = vmatprep.subr.mxu0 %v477
    %1543 = vmatpush1.msra.mxu0 %v476
    %1544 = vmatprep.subr.mxu0 %v481
    %1545 = vmatpush1.msra.mxu0 %v480
    %1546 = vmatprep.subr.mxu0 %v485
    %1547 = vmatpush1.msra.mxu0 %v484
    %1548 = vmatprep.subr.mxu0 %v489
    %1549 = vmatpush1.msra.mxu0 %v488
    %1550 = vmatprep.subr.mxu0 %v493
    %1551 = vmatpush1.msra.mxu0 %v492
    %1552 = vmatprep.subr.mxu0 %v497
    %1553 = vmatpush1.msra.mxu0 %v496
    %1554 = vmatprep.subr.mxu0 %v501
    %1555 = vmatpush1.msra.mxu0 %v500
    %1556 = vmatprep.subr.mxu0 %v505
    %1557 = vmatpush1.msra.mxu0 %v504
    %1558 = vmatprep.subr.mxu0 %v509
    %1559 = vmatpush1.msra.mxu0 %v508
    %1560 = vmatprep.subr.mxu0 %v513
    %1561 = vmatpush1.msra.mxu0 %v512
    %1562 = vmatprep.subr.mxu0 %v517
    %1563 = vmatpush1.msra.mxu0 %v516
    %1564 = vmatprep.subr.mxu0 %v521
    %1565 = vmatpush1.msra.mxu0 %v520
    %1566 = vmatprep.subr.mxu0 %v525
    %1567 = vmatpush1.msra.mxu0 %v524
    %1568 = vmatprep.subr.mxu0 %v529
    %1569 = vmatpush1.msra.mxu0 %v528
    %1570 = vmatprep.subr.mxu0 %v533
    %1571 = vmatpush1.msra.mxu0 %v532
    %1572 = vmatprep.subr.mxu0 %v537
    %1573 = vmatpush1.msra.mxu0 %v536
    %1574 = vmatprep.subr.mxu0 %v541
    %1575 = vmatpush1.msra.mxu0 %v540
    %1576 = vmatprep.subr.mxu0 %v545
    %1577 = vmatpush1.msra.mxu0 %v544
    %1578 = vmatprep.subr.mxu0 %v549
    %1579 = vmatpush1.msra.mxu0 %v548
    %1580 = vmatprep.subr.mxu0 %v553
    %1581 = vmatpush1.msra.mxu0 %v552
    %1582 = vmatprep.subr.mxu0 %v557
    %1583 = vmatpush1.msra.mxu0 %v556
    %1584 = vmatprep.subr.mxu0 %v561
    %1585 = vmatpush1.msra.mxu0 %v560
    %1586 = vmatprep.subr.mxu0 %v565
    %1587 = vmatpush1.msra.mxu0 %v564
    %1588 = vmatprep.subr.mxu0 %v569
    %1589 = vmatpush1.msra.mxu0 %v568
    %1590 = vmatprep.mubr.f32.mxu0 %v1277
    %1591 = vmatmul.mubr.f32.gmra.mrb[0].mxu0 %v1454
    %v1592 = vpop.f32.mrb[0].mxu0
    %v1593 = vadd.f32 %v583, %v1592
    %v1594 = vpop.f32.mrb[0].mxu0
    %v1595 = vadd.f32 %v587, %v1594
    %1596 = vdwg.mxu0
    %v1597 = vxor.u32 %v1522, 2147483648
    %v1598 = vmul.f32 %v1597, 1.442695
    %v1599 = vpow.pop %v1598
    %v1600 = vadd.f32 %v1599, 1.0
    %v1601 = vrcp.pop %v1600
    %v1602 = vmul.f32 1.0, %v1601
    %v1603 = vxor.u32 %v1524, 2147483648
    %v1604 = vmul.f32 %v1603, 1.442695
    %v1605 = vpow.pop %v1604
    %v1606 = vadd.f32 %v1605, 1.0
    %v1607 = vrcp.pop %v1606
    %v1608 = vmul.f32 1.0, %v1607
    %v1609 = vtanh.pop %v1593
    %v1610 = vxor.u32 %v1595, 2147483648
    %v1611 = vmul.f32 %v1610, 1.442695
    %v1612 = vpow.pop %v1611
    %v1613 = vadd.f32 %v1612, 1.0
    %v1614 = vrcp.pop %v1613
    %v1615 = vmul.f32 1.0, %v1614
    %v1616 = vmul.f32 %v1608, %v1275
    %v1617 = vmul.f32 %v1602, %v1609
    %v1618 = vadd.f32 %v1616, %v1617
    %v1619 = vtanh.pop %v1618
    %v1620 = vmul.f32 %v1615, %v1619
    %s1621 = smul.u32 3, 4
    %s1622 = smul.addr %s1621, 8
    %s1623 = scalar_lea.vmem [#allocation2], %s1622
    %v1624 = vld [vmem:[%s1623] sm:$0xff]
    %v1625 = vld [vmem:[%s1623 + $0x8] sm:$0xff]
    %v1626 = vld [vmem:[%s1623 + $0x10] sm:$0xff]
    %v1627 = vld [vmem:[%s1623 + $0x18] sm:$0xff]
    %1628 = vmatprep.subr.mxu0 %v379
    %1629 = vmatpush1.msra.mxu0 %v378
    %1630 = vmatprep.subr.mxu0 %v383
    %1631 = vmatpush1.msra.mxu0 %v382
    %1632 = vmatprep.subr.mxu0 %v387
    %1633 = vmatpush1.msra.mxu0 %v386
    %1634 = vmatprep.subr.mxu0 %v391
    %1635 = vmatpush1.msra.mxu0 %v390
    %1636 = vmatprep.subr.mxu0 %v395
    %1637 = vmatpush1.msra.mxu0 %v394
    %1638 = vmatprep.subr.mxu0 %v399
    %1639 = vmatpush1.msra.mxu0 %v398
    %1640 = vmatprep.subr.mxu0 %v403
    %1641 = vmatpush1.msra.mxu0 %v402
    %1642 = vmatprep.subr.mxu0 %v407
    %1643 = vmatpush1.msra.mxu0 %v406
    %1644 = vmatprep.subr.mxu0 %v411
    %1645 = vmatpush1.msra.mxu0 %v410
    %1646 = vmatprep.subr.mxu0 %v415
    %1647 = vmatpush1.msra.mxu0 %v414
    %1648 = vmatprep.subr.mxu0 %v419
    %1649 = vmatpush1.msra.mxu0 %v418
    %1650 = vmatprep.subr.mxu0 %v423
    %1651 = vmatpush1.msra.mxu0 %v422
    %1652 = vmatprep.subr.mxu0 %v427
    %1653 = vmatpush1.msra.mxu0 %v426
    %1654 = vmatprep.subr.mxu0 %v431
    %1655 = vmatpush1.msra.mxu0 %v430
    %1656 = vmatprep.subr.mxu0 %v435
    %1657 = vmatpush1.msra.mxu0 %v434
    %1658 = vmatprep.subr.mxu0 %v439
    %1659 = vmatpush1.msra.mxu0 %v438
    %1660 = vmatprep.subr.mxu0 0.0
    %1661 = vmatpush1.msra.mxu0 0.0
    %1662 = vmatprep.subr.mxu0 0.0
    %1663 = vmatpush1.msra.mxu0 0.0
    %1664 = vmatprep.subr.mxu0 0.0
    %1665 = vmatpush1.msra.mxu0 0.0
    %1666 = vmatprep.subr.mxu0 0.0
    %1667 = vmatpush1.msra.mxu0 0.0
    %1668 = vmatprep.subr.mxu0 0.0
    %1669 = vmatpush1.msra.mxu0 0.0
    %1670 = vmatprep.subr.mxu0 0.0
    %1671 = vmatpush1.msra.mxu0 0.0
    %1672 = vmatprep.subr.mxu0 0.0
    %1673 = vmatpush1.msra.mxu0 0.0
    %1674 = vmatprep.subr.mxu0 0.0
    %1675 = vmatpush1.msra.mxu0 0.0
    %1676 = vmatprep.subr.mxu0 0.0
    %1677 = vmatpush1.msra.mxu0 0.0
    %1678 = vmatprep.subr.mxu0 0.0
    %1679 = vmatpush1.msra.mxu0 0.0
    %1680 = vmatprep.subr.mxu0 0.0
    %1681 = vmatpush1.msra.mxu0 0.0
    %1682 = vmatprep.subr.mxu0 0.0
    %1683 = vmatpush1.msra.mxu0 0.0
    %1684 = vmatprep.subr.mxu0 0.0
    %1685 = vmatpush1.msra.mxu0 0.0
    %1686 = vmatprep.subr.mxu0 0.0
    %1687 = vmatpush1.msra.mxu0 0.0
    %1688 = vmatprep.subr.mxu0 0.0
    %1689 = vmatpush1.msra.mxu0 0.0
    %1690 = vmatprep.subr.mxu0 0.0
    %1691 = vmatpush1.msra.mxu0 0.0
    %1692 = vmatprep.mubr.f32.mxu0 0.0
    %1693 = vmatmul.mubr.f32.gmra.mrb[0].mxu0 %v1454
    %v1694 = vpop.f32.mrb[0].mxu0
    %v1695 = vadd.f32 0.0, %v1694
    %v1696 = vpop.f32.mrb[0].mxu0
    %v1697 = vadd.f32 0.0, %v1696
    %1698 = vdwg.mxu0
    %1699 = vmatprep.subr.mxu0 %v381
    %1700 = vmatpush1.msra.mxu0 %v380
    %1701 = vmatprep.subr.mxu0 %v385
    %1702 = vmatpush1.msra.mxu0 %v384
    %1703 = vmatprep.subr.mxu0 %v389
    %1704 = vmatpush1.msra.mxu0 %v388
    %1705 = vmatprep.subr.mxu0 %v393
    %1706 = vmatpush1.msra.mxu0 %v392
    %1707 = vmatprep.subr.mxu0 %v397
    %1708 = vmatpush1.msra.mxu0 %v396
    %1709 = vmatprep.subr.mxu0 %v401
    %1710 = vmatpush1.msra.mxu0 %v400
    %1711 = vmatprep.subr.mxu0 %v405
    %1712 = vmatpush1.msra.mxu0 %v404
    %1713 = vmatprep.subr.mxu0 %v409
    %1714 = vmatpush1.msra.mxu0 %v408
    %1715 = vmatprep.subr.mxu0 %v413
    %1716 = vmatpush1.msra.mxu0 %v412
    %1717 = vmatprep.subr.mxu0 %v417
    %1718 = vmatpush1.msra.mxu0 %v416
    %1719 = vmatprep.subr.mxu0 %v421
    %1720 = vmatpush1.msra.mxu0 %v420
    %1721 = vmatprep.subr.mxu0 %v425
    %1722 = vmatpush1.msra.mxu0 %v424
    %1723 = vmatprep.subr.mxu0 %v429
    %1724 = vmatpush1.msra.mxu0 %v428
    %1725 = vmatprep.subr.mxu0 %v433
    %1726 = vmatpush1.msra.mxu0 %v432
    %1727 = vmatprep.subr.mxu0 %v437
    %1728 = vmatpush1.msra.mxu0 %v436
    %1729 = vmatprep.subr.mxu0 %v441
    %1730 = vmatpush1.msra.mxu0 %v440
    %1731 = vmatprep.subr.mxu0 0.0
    %1732 = vmatpush1.msra.mxu0 0.0
    %1733 = vmatprep.subr.mxu0 0.0
    %1734 = vmatpush1.msra.mxu0 0.0
    %1735 = vmatprep.subr.mxu0 0.0
    %1736 = vmatpush1.msra.mxu0 0.0
    %1737 = vmatprep.subr.mxu0 0.0
    %1738 = vmatpush1.msra.mxu0 0.0
    %1739 = vmatprep.subr.mxu0 0.0
    %1740 = vmatpush1.msra.mxu0 0.0
    %1741 = vmatprep.subr.mxu0 0.0
    %1742 = vmatpush1.msra.mxu0 0.0
    %1743 = vmatprep.subr.mxu0 0.0
    %1744 = vmatpush1.msra.mxu0 0.0
    %1745 = vmatprep.subr.mxu0 0.0
    %1746 = vmatpush1.msra.mxu0 0.0
    %1747 = vmatprep.subr.mxu0 0.0
    %1748 = vmatpush1.msra.mxu0 0.0
    %1749 = vmatprep.subr.mxu0 0.0
    %1750 = vmatpush1.msra.mxu0 0.0
    %1751 = vmatprep.subr.mxu0 0.0
    %1752 = vmatpush1.msra.mxu0 0.0
    %1753 = vmatprep.subr.mxu0 0.0
    %1754 = vmatpush1.msra.mxu0 0.0
    %1755 = vmatprep.subr.mxu0 0.0
    %1756 = vmatpush1.msra.mxu0 0.0
    %1757 = vmatprep.subr.mxu0 0.0
    %1758 = vmatpush1.msra.mxu0 0.0
    %1759 = vmatprep.subr.mxu0 0.0
    %1760 = vmatpush1.msra.mxu0 0.0
    %1761 = vmatprep.subr.mxu0 0.0
    %1762 = vmatpush1.msra.mxu0 0.0
    %1763 = vmatprep.mubr.f32.mxu0 0.0
    %1764 = vmatmul.mubr.f32.gmra.mrb[0].mxu0 %v1454
    %v1765 = vpop.f32.mrb[0].mxu0
    %v1766 = vadd.f32 0.0, %v1765
    %v1767 = vpop.f32.mrb[0].mxu0
    %v1768 = vadd.f32 0.0, %v1767
    %1769 = vdwg.mxu0
    %v1770 = vadd.f32 %v1624, %v1695
    %v1771 = vadd.f32 %v1625, %v1697
    %v1772 = vadd.f32 %v1626, %v1766
    %v1773 = vadd.f32 %v1627, %v1768
    %v1774 = vxor.u32 %v1770, 2147483648
    %v1775 = vmul.f32 %v1774, 1.442695
    %v1776 = vpow.pop %v1775
    %v1777 = vadd.f32 %v1776, 1.0
    %v1778 = vrcp.pop %v1777
    %v1779 = vmul.f32 1.0, %v1778
    %v1780 = vxor.u32 %v1771, 2147483648
    %v1781 = vmul.f32 %v1780, 1.442695
    %v1782 = vpow.pop %v1781
    %v1783 = vadd.f32 %v1782, 1.0
    %v1784 = vrcp.pop %v1783
    %v1785 = vmul.f32 1.0, %v1784
    %v1786 = vtanh.pop %v1772
    %v1787 = vxor.u32 %v1773, 2147483648
    %v1788 = vmul.f32 %v1787, 1.442695
    %v1789 = vpow.pop %v1788
    %v1790 = vadd.f32 %v1789, 1.0
    %v1791 = vrcp.pop %v1790
    %v1792 = vmul.f32 1.0, %v1791
    %v1793 = vmul.f32 %v1785, %v1452
    %v1794 = vmul.f32 %v1779, %v1786
    %v1795 = vadd.f32 %v1793, %v1794
    %v1796 = vtanh.pop %v1795
    %v1797 = vmul.f32 %v1792, %v1796
    %1798 = vmatprep.subr.mxu0 %v443
    %1799 = vmatpush1.msra.mxu0 %v442
    %1800 = vmatprep.subr.mxu0 %v447
    %1801 = vmatpush1.msra.mxu0 %v446
    %1802 = vmatprep.subr.mxu0 %v451
    %1803 = vmatpush1.msra.mxu0 %v450
    %1804 = vmatprep.subr.mxu0 %v455
    %1805 = vmatpush1.msra.mxu0 %v454
    %1806 = vmatprep.subr.mxu0 %v459
    %1807 = vmatpush1.msra.mxu0 %v458
    %1808 = vmatprep.subr.mxu0 %v463
    %1809 = vmatpush1.msra.mxu0 %v462
    %1810 = vmatprep.subr.mxu0 %v467
    %1811 = vmatpush1.msra.mxu0 %v466
    %1812 = vmatprep.subr.mxu0 %v471
    %1813 = vmatpush1.msra.mxu0 %v470
    %1814 = vmatprep.subr.mxu0 %v475
    %1815 = vmatpush1.msra.mxu0 %v474
    %1816 = vmatprep.subr.mxu0 %v479
    %1817 = vmatpush1.msra.mxu0 %v478
    %1818 = vmatprep.subr.mxu0 %v483
    %1819 = vmatpush1.msra.mxu0 %v482
    %1820 = vmatprep.subr.mxu0 %v487
    %1821 = vmatpush1.msra.mxu0 %v486
    %1822 = vmatprep.subr.mxu0 %v491
    %1823 = vmatpush1.msra.mxu0 %v490
    %1824 = vmatprep.subr.mxu0 %v495
    %1825 = vmatpush1.msra.mxu0 %v494
    %1826 = vmatprep.subr.mxu0 %v499
    %1827 = vmatpush1.msra.mxu0 %v498
    %1828 = vmatprep.subr.mxu0 %v503
    %1829 = vmatpush1.msra.mxu0 %v502
    %1830 = vmatprep.subr.mxu0 %v507
    %1831 = vmatpush1.msra.mxu0 %v506
    %1832 = vmatprep.subr.mxu0 %v511
    %1833 = vmatpush1.msra.mxu0 %v510
    %1834 = vmatprep.subr.mxu0 %v515
    %1835 = vmatpush1.msra.mxu0 %v514
    %1836 = vmatprep.subr.mxu0 %v519
    %1837 = vmatpush1.msra.mxu0 %v518
    %1838 = vmatprep.subr.mxu0 %v523
    %1839 = vmatpush1.msra.mxu0 %v522
    %1840 = vmatprep.subr.mxu0 %v527
    %1841 = vmatpush1.msra.mxu0 %v526
    %1842 = vmatprep.subr.mxu0 %v531
    %1843 = vmatpush1.msra.mxu0 %v530
    %1844 = vmatprep.subr.mxu0 %v535
    %1845 = vmatpush1.msra.mxu0 %v534
    %1846 = vmatprep.subr.mxu0 %v539
    %1847 = vmatpush1.msra.mxu0 %v538
    %1848 = vmatprep.subr.mxu0 %v543
    %1849 = vmatpush1.msra.mxu0 %v542
    %1850 = vmatprep.subr.mxu0 %v547
    %1851 = vmatpush1.msra.mxu0 %v546
    %1852 = vmatprep.subr.mxu0 %v551
    %1853 = vmatpush1.msra.mxu0 %v550
    %1854 = vmatprep.subr.mxu0 %v555
    %1855 = vmatpush1.msra.mxu0 %v554
    %1856 = vmatprep.subr.mxu0 %v559
    %1857 = vmatpush1.msra.mxu0 %v558
    %1858 = vmatprep.subr.mxu0 %v563
    %1859 = vmatpush1.msra.mxu0 %v562
    %1860 = vmatprep.subr.mxu0 %v567
    %1861 = vmatpush1.msra.mxu0 %v566
    %1862 = vmatprep.mubr.f32.mxu0 %v1620
    %1863 = vmatmul.mubr.f32.gmra.mrb[0].mxu0 %v1797
    %v1864 = vpop.f32.mrb[0].mxu0
    %v1865 = vadd.f32 %v575, %v1864
    %v1866 = vpop.f32.mrb[0].mxu0
    %v1867 = vadd.f32 %v579, %v1866
    %1868 = vdwg.mxu0
    %1869 = vmatprep.subr.mxu0 %v445
    %1870 = vmatpush1.msra.mxu0 %v444
    %1871 = vmatprep.subr.mxu0 %v449
    %1872 = vmatpush1.msra.mxu0 %v448
    %1873 = vmatprep.subr.mxu0 %v453
    %1874 = vmatpush1.msra.mxu0 %v452
    %1875 = vmatprep.subr.mxu0 %v457
    %1876 = vmatpush1.msra.mxu0 %v456
    %1877 = vmatprep.subr.mxu0 %v461
    %1878 = vmatpush1.msra.mxu0 %v460
    %1879 = vmatprep.subr.mxu0 %v465
    %1880 = vmatpush1.msra.mxu0 %v464
    %1881 = vmatprep.subr.mxu0 %v469
    %1882 = vmatpush1.msra.mxu0 %v468
    %1883 = vmatprep.subr.mxu0 %v473
    %1884 = vmatpush1.msra.mxu0 %v472
    %1885 = vmatprep.subr.mxu0 %v477
    %1886 = vmatpush1.msra.mxu0 %v476
    %1887 = vmatprep.subr.mxu0 %v481
    %1888 = vmatpush1.msra.mxu0 %v480
    %1889 = vmatprep.subr.mxu0 %v485
    %1890 = vmatpush1.msra.mxu0 %v484
    %1891 = vmatprep.subr.mxu0 %v489
    %1892 = vmatpush1.msra.mxu0 %v488
    %1893 = vmatprep.subr.mxu0 %v493
    %1894 = vmatpush1.msra.mxu0 %v492
    %1895 = vmatprep.subr.mxu0 %v497
    %1896 = vmatpush1.msra.mxu0 %v496
    %1897 = vmatprep.subr.mxu0 %v501
    %1898 = vmatpush1.msra.mxu0 %v500
    %1899 = vmatprep.subr.mxu0 %v505
    %1900 = vmatpush1.msra.mxu0 %v504
    %1901 = vmatprep.subr.mxu0 %v509
    %1902 = vmatpush1.msra.mxu0 %v508
    %1903 = vmatprep.subr.mxu0 %v513
    %1904 = vmatpush1.msra.mxu0 %v512
    %1905 = vmatprep.subr.mxu0 %v517
    %1906 = vmatpush1.msra.mxu0 %v516
    %1907 = vmatprep.subr.mxu0 %v521
    %1908 = vmatpush1.msra.mxu0 %v520
    %1909 = vmatprep.subr.mxu0 %v525
    %1910 = vmatpush1.msra.mxu0 %v524
    %1911 = vmatprep.subr.mxu0 %v529
    %1912 = vmatpush1.msra.mxu0 %v528
    %1913 = vmatprep.subr.mxu0 %v533
    %1914 = vmatpush1.msra.mxu0 %v532
    %1915 = vmatprep.subr.mxu0 %v537
    %1916 = vmatpush1.msra.mxu0 %v536
    %1917 = vmatprep.subr.mxu0 %v541
    %1918 = vmatpush1.msra.mxu0 %v540
    %1919 = vmatprep.subr.mxu0 %v545
    %1920 = vmatpush1.msra.mxu0 %v544
    %1921 = vmatprep.subr.mxu0 %v549
    %1922 = vmatpush1.msra.mxu0 %v548
    %1923 = vmatprep.subr.mxu0 %v553
    %1924 = vmatpush1.msra.mxu0 %v552
    %1925 = vmatprep.subr.mxu0 %v557
    %1926 = vmatpush1.msra.mxu0 %v556
    %1927 = vmatprep.subr.mxu0 %v561
    %1928 = vmatpush1.msra.mxu0 %v560
    %1929 = vmatprep.subr.mxu0 %v565
    %1930 = vmatpush1.msra.mxu0 %v564
    %1931 = vmatprep.subr.mxu0 %v569
    %1932 = vmatpush1.msra.mxu0 %v568
    %1933 = vmatprep.mubr.f32.mxu0 %v1620
    %1934 = vmatmul.mubr.f32.gmra.mrb[0].mxu0 %v1797
    %v1935 = vpop.f32.mrb[0].mxu0
    %v1936 = vadd.f32 %v583, %v1935
    %v1937 = vpop.f32.mrb[0].mxu0
    %v1938 = vadd.f32 %v587, %v1937
    %1939 = vdwg.mxu0
    %v1940 = vxor.u32 %v1865, 2147483648
    %v1941 = vmul.f32 %v1940, 1.442695
    %v1942 = vpow.pop %v1941
    %v1943 = vadd.f32 %v1942, 1.0
    %v1944 = vrcp.pop %v1943
    %v1945 = vmul.f32 1.0, %v1944
    %v1946 = vxor.u32 %v1867, 2147483648
    %v1947 = vmul.f32 %v1946, 1.442695
    %v1948 = vpow.pop %v1947
    %v1949 = vadd.f32 %v1948, 1.0
    %v1950 = vrcp.pop %v1949
    %v1951 = vmul.f32 1.0, %v1950
    %v1952 = vtanh.pop %v1936
    %v1953 = vxor.u32 %v1938, 2147483648
    %v1954 = vmul.f32 %v1953, 1.442695
    %v1955 = vpow.pop %v1954
    %v1956 = vadd.f32 %v1955, 1.0
    %v1957 = vrcp.pop %v1956
    %v1958 = vmul.f32 1.0, %v1957
    %v1959 = vmul.f32 %v1951, %v1618
    %v1960 = vmul.f32 %v1945, %v1952
    %v1961 = vadd.f32 %v1959, %v1960
    %v1962 = vtanh.pop %v1961
    %v1963 = vmul.f32 %v1958, %v1962
    %s1964 = smul.u32 4, 4
    %s1965 = smul.addr %s1964, 8
    %s1966 = scalar_lea.vmem [#allocation2], %s1965
    %v1967 = vld [vmem:[%s1966] sm:$0xff]
    %v1968 = vld [vmem:[%s1966 + $0x8] sm:$0xff]
    %v1969 = vld [vmem:[%s1966 + $0x10] sm:$0xff]
    %v1970 = vld [vmem:[%s1966 + $0x18] sm:$0xff]
    %1971 = vmatprep.subr.mxu0 %v379
    %1972 = vmatpush1.msra.mxu0 %v378
    %1973 = vmatprep.subr.mxu0 %v383
    %1974 = vmatpush1.msra.mxu0 %v382
    %1975 = vmatprep.subr.mxu0 %v387
    %1976 = vmatpush1.msra.mxu0 %v386
    %1977 = vmatprep.subr.mxu0 %v391
    %1978 = vmatpush1.msra.mxu0 %v390
    %1979 = vmatprep.subr.mxu0 %v395
    %1980 = vmatpush1.msra.mxu0 %v394
    %1981 = vmatprep.subr.mxu0 %v399
    %1982 = vmatpush1.msra.mxu0 %v398
    %1983 = vmatprep.subr.mxu0 %v403
    %1984 = vmatpush1.msra.mxu0 %v402
    %1985 = vmatprep.subr.mxu0 %v407
    %1986 = vmatpush1.msra.mxu0 %v406
    %1987 = vmatprep.subr.mxu0 %v411
    %1988 = vmatpush1.msra.mxu0 %v410
    %1989 = vmatprep.subr.mxu0 %v415
    %1990 = vmatpush1.msra.mxu0 %v414
    %1991 = vmatprep.subr.mxu0 %v419
    %1992 = vmatpush1.msra.mxu0 %v418
    %1993 = vmatprep.subr.mxu0 %v423
    %1994 = vmatpush1.msra.mxu0 %v422
    %1995 = vmatprep.subr.mxu0 %v427
    %1996 = vmatpush1.msra.mxu0 %v426
    %1997 = vmatprep.subr.mxu0 %v431
    %1998 = vmatpush1.msra.mxu0 %v430
    %1999 = vmatprep.subr.mxu0 %v435
    %2000 = vmatpush1.msra.mxu0 %v434
    %2001 = vmatprep.subr.mxu0 %v439
    %2002 = vmatpush1.msra.mxu0 %v438
    %2003 = vmatprep.subr.mxu0 0.0
    %2004 = vmatpush1.msra.mxu0 0.0
    %2005 = vmatprep.subr.mxu0 0.0
    %2006 = vmatpush1.msra.mxu0 0.0
    %2007 = vmatprep.subr.mxu0 0.0
    %2008 = vmatpush1.msra.mxu0 0.0
    %2009 = vmatprep.subr.mxu0 0.0
    %2010 = vmatpush1.msra.mxu0 0.0
    %2011 = vmatprep.subr.mxu0 0.0
    %2012 = vmatpush1.msra.mxu0 0.0
    %2013 = vmatprep.subr.mxu0 0.0
    %2014 = vmatpush1.msra.mxu0 0.0
    %2015 = vmatprep.subr.mxu0 0.0
    %2016 = vmatpush1.msra.mxu0 0.0
    %2017 = vmatprep.subr.mxu0 0.0
    %2018 = vmatpush1.msra.mxu0 0.0
    %2019 = vmatprep.subr.mxu0 0.0
    %2020 = vmatpush1.msra.mxu0 0.0
    %2021 = vmatprep.subr.mxu0 0.0
    %2022 = vmatpush1.msra.mxu0 0.0
    %2023 = vmatprep.subr.mxu0 0.0
    %2024 = vmatpush1.msra.mxu0 0.0
    %2025 = vmatprep.subr.mxu0 0.0
    %2026 = vmatpush1.msra.mxu0 0.0
    %2027 = vmatprep.subr.mxu0 0.0
    %2028 = vmatpush1.msra.mxu0 0.0
    %2029 = vmatprep.subr.mxu0 0.0
    %2030 = vmatpush1.msra.mxu0 0.0
    %2031 = vmatprep.subr.mxu0 0.0
    %2032 = vmatpush1.msra.mxu0 0.0
    %2033 = vmatprep.subr.mxu0 0.0
    %2034 = vmatpush1.msra.mxu0 0.0
    %2035 = vmatprep.mubr.f32.mxu0 0.0
    %2036 = vmatmul.mubr.f32.gmra.mrb[0].mxu0 %v1797
    %v2037 = vpop.f32.mrb[0].mxu0
    %v2038 = vadd.f32 0.0, %v2037
    %v2039 = vpop.f32.mrb[0].mxu0
    %v2040 = vadd.f32 0.0, %v2039
    %2041 = vdwg.mxu0
    %2042 = vmatprep.subr.mxu0 %v381
    %2043 = vmatpush1.msra.mxu0 %v380
    %2044 = vmatprep.subr.mxu0 %v385
    %2045 = vmatpush1.msra.mxu0 %v384
    %2046 = vmatprep.subr.mxu0 %v389
    %2047 = vmatpush1.msra.mxu0 %v388
    %2048 = vmatprep.subr.mxu0 %v393
    %2049 = vmatpush1.msra.mxu0 %v392
    %2050 = vmatprep.subr.mxu0 %v397
    %2051 = vmatpush1.msra.mxu0 %v396
    %2052 = vmatprep.subr.mxu0 %v401
    %2053 = vmatpush1.msra.mxu0 %v400
    %2054 = vmatprep.subr.mxu0 %v405
    %2055 = vmatpush1.msra.mxu0 %v404
    %2056 = vmatprep.subr.mxu0 %v409
    %2057 = vmatpush1.msra.mxu0 %v408
    %2058 = vmatprep.subr.mxu0 %v413
    %2059 = vmatpush1.msra.mxu0 %v412
    %2060 = vmatprep.subr.mxu0 %v417
    %2061 = vmatpush1.msra.mxu0 %v416
    %2062 = vmatprep.subr.mxu0 %v421
    %2063 = vmatpush1.msra.mxu0 %v420
    %2064 = vmatprep.subr.mxu0 %v425
    %2065 = vmatpush1.msra.mxu0 %v424
    %2066 = vmatprep.subr.mxu0 %v429
    %2067 = vmatpush1.msra.mxu0 %v428
    %2068 = vmatprep.subr.mxu0 %v433
    %2069 = vmatpush1.msra.mxu0 %v432
    %2070 = vmatprep.subr.mxu0 %v437
    %2071 = vmatpush1.msra.mxu0 %v436
    %2072 = vmatprep.subr.mxu0 %v441
    %2073 = vmatpush1.msra.mxu0 %v440
    %2074 = vmatprep.subr.mxu0 0.0
    %2075 = vmatpush1.msra.mxu0 0.0
    %2076 = vmatprep.subr.mxu0 0.0
    %2077 = vmatpush1.msra.mxu0 0.0
    %2078 = vmatprep.subr.mxu0 0.0
    %2079 = vmatpush1.msra.mxu0 0.0
    %2080 = vmatprep.subr.mxu0 0.0
    %2081 = vmatpush1.msra.mxu0 0.0
    %2082 = vmatprep.subr.mxu0 0.0
    %2083 = vmatpush1.msra.mxu0 0.0
    %2084 = vmatprep.subr.mxu0 0.0
    %2085 = vmatpush1.msra.mxu0 0.0
    %2086 = vmatprep.subr.mxu0 0.0
    %2087 = vmatpush1.msra.mxu0 0.0
    %2088 = vmatprep.subr.mxu0 0.0
    %2089 = vmatpush1.msra.mxu0 0.0
    %2090 = vmatprep.subr.mxu0 0.0
    %2091 = vmatpush1.msra.mxu0 0.0
    %2092 = vmatprep.subr.mxu0 0.0
    %2093 = vmatpush1.msra.mxu0 0.0
    %2094 = vmatprep.subr.mxu0 0.0
    %2095 = vmatpush1.msra.mxu0 0.0
    %2096 = vmatprep.subr.mxu0 0.0
    %2097 = vmatpush1.msra.mxu0 0.0
    %2098 = vmatprep.subr.mxu0 0.0
    %2099 = vmatpush1.msra.mxu0 0.0
    %2100 = vmatprep.subr.mxu0 0.0
    %2101 = vmatpush1.msra.mxu0 0.0
    %2102 = vmatprep.subr.mxu0 0.0
    %2103 = vmatpush1.msra.mxu0 0.0
    %2104 = vmatprep.subr.mxu0 0.0
    %2105 = vmatpush1.msra.mxu0 0.0
    %2106 = vmatprep.mubr.f32.mxu0 0.0
    %2107 = vmatmul.mubr.f32.gmra.mrb[0].mxu0 %v1797
    %v2108 = vpop.f32.mrb[0].mxu0
    %v2109 = vadd.f32 0.0, %v2108
    %v2110 = vpop.f32.mrb[0].mxu0
    %v2111 = vadd.f32 0.0, %v2110
    %2112 = vdwg.mxu0
    %v2113 = vadd.f32 %v1967, %v2038
    %v2114 = vadd.f32 %v1968, %v2040
    %v2115 = vadd.f32 %v1969, %v2109
    %v2116 = vadd.f32 %v1970, %v2111
    %v2117 = vxor.u32 %v2113, 2147483648
    %v2118 = vmul.f32 %v2117, 1.442695
    %v2119 = vpow.pop %v2118
    %v2120 = vadd.f32 %v2119, 1.0
    %v2121 = vrcp.pop %v2120
    %v2122 = vmul.f32 1.0, %v2121
    %v2123 = vxor.u32 %v2114, 2147483648
    %v2124 = vmul.f32 %v2123, 1.442695
    %v2125 = vpow.pop %v2124
    %v2126 = vadd.f32 %v2125, 1.0
    %v2127 = vrcp.pop %v2126
    %v2128 = vmul.f32 1.0, %v2127
    %v2129 = vtanh.pop %v2115
    %v2130 = vxor.u32 %v2116, 2147483648
    %v2131 = vmul.f32 %v2130, 1.442695
    %v2132 = vpow.pop %v2131
    %v2133 = vadd.f32 %v2132, 1.0
    %v2134 = vrcp.pop %v2133
    %v2135 = vmul.f32 1.0, %v2134
    %v2136 = vmul.f32 %v2128, %v1795
    %v2137 = vmul.f32 %v2122, %v2129
    %v2138 = vadd.f32 %v2136, %v2137
    %v2139 = vtanh.pop %v2138
    %v2140 = vmul.f32 %v2135, %v2139
    %2141 = vmatprep.subr.mxu0 %v443
    %2142 = vmatpush1.msra.mxu0 %v442
    %2143 = vmatprep.subr.mxu0 %v447
    %2144 = vmatpush1.msra.mxu0 %v446
    %2145 = vmatprep.subr.mxu0 %v451
    %2146 = vmatpush1.msra.mxu0 %v450
    %2147 = vmatprep.subr.mxu0 %v455
    %2148 = vmatpush1.msra.mxu0 %v454
    %2149 = vmatprep.subr.mxu0 %v459
    %2150 = vmatpush1.msra.mxu0 %v458
    %2151 = vmatprep.subr.mxu0 %v463
    %2152 = vmatpush1.msra.mxu0 %v462
    %2153 = vmatprep.subr.mxu0 %v467
    %2154 = vmatpush1.msra.mxu0 %v466
    %2155 = vmatprep.subr.mxu0 %v471
    %2156 = vmatpush1.msra.mxu0 %v470
    %2157 = vmatprep.subr.mxu0 %v475
    %2158 = vmatpush1.msra.mxu0 %v474
    %2159 = vmatprep.subr.mxu0 %v479
    %2160 = vmatpush1.msra.mxu0 %v478
    %2161 = vmatprep.subr.mxu0 %v483
    %2162 = vmatpush1.msra.mxu0 %v482
    %2163 = vmatprep.subr.mxu0 %v487
    %2164 = vmatpush1.msra.mxu0 %v486
    %2165 = vmatprep.subr.mxu0 %v491
    %2166 = vmatpush1.msra.mxu0 %v490
    %2167 = vmatprep.subr.mxu0 %v495
    %2168 = vmatpush1.msra.mxu0 %v494
    %2169 = vmatprep.subr.mxu0 %v499
    %2170 = vmatpush1.msra.mxu0 %v498
    %2171 = vmatprep.subr.mxu0 %v503
    %2172 = vmatpush1.msra.mxu0 %v502
    %2173 = vmatprep.subr.mxu0 %v507
    %2174 = vmatpush1.msra.mxu0 %v506
    %2175 = vmatprep.subr.mxu0 %v511
    %2176 = vmatpush1.msra.mxu0 %v510
    %2177 = vmatprep.subr.mxu0 %v515
    %2178 = vmatpush1.msra.mxu0 %v514
    %2179 = vmatprep.subr.mxu0 %v519
    %2180 = vmatpush1.msra.mxu0 %v518
    %2181 = vmatprep.subr.mxu0 %v523
    %2182 = vmatpush1.msra.mxu0 %v522
    %2183 = vmatprep.subr.mxu0 %v527
    %2184 = vmatpush1.msra.mxu0 %v526
    %2185 = vmatprep.subr.mxu0 %v531
    %2186 = vmatpush1.msra.mxu0 %v530
    %2187 = vmatprep.subr.mxu0 %v535
    %2188 = vmatpush1.msra.mxu0 %v534
    %2189 = vmatprep.subr.mxu0 %v539
    %2190 = vmatpush1.msra.mxu0 %v538
    %2191 = vmatprep.subr.mxu0 %v543
    %2192 = vmatpush1.msra.mxu0 %v542
    %2193 = vmatprep.subr.mxu0 %v547
    %2194 = vmatpush1.msra.mxu0 %v546
    %2195 = vmatprep.subr.mxu0 %v551
    %2196 = vmatpush1.msra.mxu0 %v550
    %2197 = vmatprep.subr.mxu0 %v555
    %2198 = vmatpush1.msra.mxu0 %v554
    %2199 = vmatprep.subr.mxu0 %v559
    %2200 = vmatpush1.msra.mxu0 %v558
    %2201 = vmatprep.subr.mxu0 %v563
    %2202 = vmatpush1.msra.mxu0 %v562
    %2203 = vmatprep.subr.mxu0 %v567
    %2204 = vmatpush1.msra.mxu0 %v566
    %2205 = vmatprep.mubr.f32.mxu0 %v1963
    %2206 = vmatmul.mubr.f32.gmra.mrb[0].mxu0 %v2140
    %v2207 = vpop.f32.mrb[0].mxu0
    %v2208 = vadd.f32 %v575, %v2207
    %v2209 = vpop.f32.mrb[0].mxu0
    %v2210 = vadd.f32 %v579, %v2209
    %2211 = vdwg.mxu0
    %2212 = vmatprep.subr.mxu0 %v445
    %2213 = vmatpush1.msra.mxu0 %v444
    %2214 = vmatprep.subr.mxu0 %v449
    %2215 = vmatpush1.msra.mxu0 %v448
    %2216 = vmatprep.subr.mxu0 %v453
    %2217 = vmatpush1.msra.mxu0 %v452
    %2218 = vmatprep.subr.mxu0 %v457
    %2219 = vmatpush1.msra.mxu0 %v456
    %2220 = vmatprep.subr.mxu0 %v461
    %2221 = vmatpush1.msra.mxu0 %v460
    %2222 = vmatprep.subr.mxu0 %v465
    %2223 = vmatpush1.msra.mxu0 %v464
    %2224 = vmatprep.subr.mxu0 %v469
    %2225 = vmatpush1.msra.mxu0 %v468
    %2226 = vmatprep.subr.mxu0 %v473
    %2227 = vmatpush1.msra.mxu0 %v472
    %2228 = vmatprep.subr.mxu0 %v477
    %2229 = vmatpush1.msra.mxu0 %v476
    %2230 = vmatprep.subr.mxu0 %v481
    %2231 = vmatpush1.msra.mxu0 %v480
    %2232 = vmatprep.subr.mxu0 %v485
    %2233 = vmatpush1.msra.mxu0 %v484
    %2234 = vmatprep.subr.mxu0 %v489
    %2235 = vmatpush1.msra.mxu0 %v488
    %2236 = vmatprep.subr.mxu0 %v493
    %2237 = vmatpush1.msra.mxu0 %v492
    %2238 = vmatprep.subr.mxu0 %v497
    %2239 = vmatpush1.msra.mxu0 %v496
    %2240 = vmatprep.subr.mxu0 %v501
    %2241 = vmatpush1.msra.mxu0 %v500
    %2242 = vmatprep.subr.mxu0 %v505
    %2243 = vmatpush1.msra.mxu0 %v504
    %2244 = vmatprep.subr.mxu0 %v509
    %2245 = vmatpush1.msra.mxu0 %v508
    %2246 = vmatprep.subr.mxu0 %v513
    %2247 = vmatpush1.msra.mxu0 %v512
    %2248 = vmatprep.subr.mxu0 %v517
    %2249 = vmatpush1.msra.mxu0 %v516
    %2250 = vmatprep.subr.mxu0 %v521
    %2251 = vmatpush1.msra.mxu0 %v520
    %2252 = vmatprep.subr.mxu0 %v525
    %2253 = vmatpush1.msra.mxu0 %v524
    %2254 = vmatprep.subr.mxu0 %v529
    %2255 = vmatpush1.msra.mxu0 %v528
    %2256 = vmatprep.subr.mxu0 %v533
    %2257 = vmatpush1.msra.mxu0 %v532
    %2258 = vmatprep.subr.mxu0 %v537
    %2259 = vmatpush1.msra.mxu0 %v536
    %2260 = vmatprep.subr.mxu0 %v541
    %2261 = vmatpush1.msra.mxu0 %v540
    %2262 = vmatprep.subr.mxu0 %v545
    %2263 = vmatpush1.msra.mxu0 %v544
    %2264 = vmatprep.subr.mxu0 %v549
    %2265 = vmatpush1.msra.mxu0 %v548
    %2266 = vmatprep.subr.mxu0 %v553
    %2267 = vmatpush1.msra.mxu0 %v552
    %2268 = vmatprep.subr.mxu0 %v557
    %2269 = vmatpush1.msra.mxu0 %v556
    %2270 = vmatprep.subr.mxu0 %v561
    %2271 = vmatpush1.msra.mxu0 %v560
    %2272 = vmatprep.subr.mxu0 %v565
    %2273 = vmatpush1.msra.mxu0 %v564
    %2274 = vmatprep.subr.mxu0 %v569
    %2275 = vmatpush1.msra.mxu0 %v568
    %2276 = vmatprep.mubr.f32.mxu0 %v1963
    %2277 = vmatmul.mubr.f32.gmra.mrb[0].mxu0 %v2140
    %v2278 = vpop.f32.mrb[0].mxu0
    %v2279 = vadd.f32 %v583, %v2278
    %v2280 = vpop.f32.mrb[0].mxu0
    %v2281 = vadd.f32 %v587, %v2280
    %2282 = vdwg.mxu0
    %v2283 = vxor.u32 %v2208, 2147483648
    %v2284 = vmul.f32 %v2283, 1.442695
    %v2285 = vpow.pop %v2284
    %v2286 = vadd.f32 %v2285, 1.0
    %v2287 = vrcp.pop %v2286
    %v2288 = vmul.f32 1.0, %v2287
    %v2289 = vxor.u32 %v2210, 2147483648
    %v2290 = vmul.f32 %v2289, 1.442695
    %v2291 = vpow.pop %v2290
    %v2292 = vadd.f32 %v2291, 1.0
    %v2293 = vrcp.pop %v2292
    %v2294 = vmul.f32 1.0, %v2293
    %v2295 = vtanh.pop %v2279
    %v2296 = vxor.u32 %v2281, 2147483648
    %v2297 = vmul.f32 %v2296, 1.442695
    %v2298 = vpow.pop %v2297
    %v2299 = vadd.f32 %v2298, 1.0
    %v2300 = vrcp.pop %v2299
    %v2301 = vmul.f32 1.0, %v2300
    %v2302 = vmul.f32 %v2294, %v1961
    %v2303 = vmul.f32 %v2288, %v2295
    %v2304 = vadd.f32 %v2302, %v2303
    %v2305 = vtanh.pop %v2304
    %v2306 = vmul.f32 %v2301, %v2305
    %s2307 = smul.u32 5, 4
    %s2308 = smul.addr %s2307, 8
    %s2309 = scalar_lea.vmem [#allocation2], %s2308
    %v2310 = vld [vmem:[%s2309] sm:$0xff]
    %v2311 = vld [vmem:[%s2309 + $0x8] sm:$0xff]
    %v2312 = vld [vmem:[%s2309 + $0x10] sm:$0xff]
    %v2313 = vld [vmem:[%s2309 + $0x18] sm:$0xff]
    %2314 = vmatprep.subr.mxu0 %v379
    %2315 = vmatpush1.msra.mxu0 %v378
    %2316 = vmatprep.subr.mxu0 %v383
    %2317 = vmatpush1.msra.mxu0 %v382
    %2318 = vmatprep.subr.mxu0 %v387
    %2319 = vmatpush1.msra.mxu0 %v386
    %2320 = vmatprep.subr.mxu0 %v391
    %2321 = vmatpush1.msra.mxu0 %v390
    %2322 = vmatprep.subr.mxu0 %v395
    %2323 = vmatpush1.msra.mxu0 %v394
    %2324 = vmatprep.subr.mxu0 %v399
    %2325 = vmatpush1.msra.mxu0 %v398
    %2326 = vmatprep.subr.mxu0 %v403
    %2327 = vmatpush1.msra.mxu0 %v402
    %2328 = vmatprep.subr.mxu0 %v407
    %2329 = vmatpush1.msra.mxu0 %v406
    %2330 = vmatprep.subr.mxu0 %v411
    %2331 = vmatpush1.msra.mxu0 %v410
    %2332 = vmatprep.subr.mxu0 %v415
    %2333 = vmatpush1.msra.mxu0 %v414
    %2334 = vmatprep.subr.mxu0 %v419
    %2335 = vmatpush1.msra.mxu0 %v418
    %2336 = vmatprep.subr.mxu0 %v423
    %2337 = vmatpush1.msra.mxu0 %v422
    %2338 = vmatprep.subr.mxu0 %v427
    %2339 = vmatpush1.msra.mxu0 %v426
    %2340 = vmatprep.subr.mxu0 %v431
    %2341 = vmatpush1.msra.mxu0 %v430
    %2342 = vmatprep.subr.mxu0 %v435
    %2343 = vmatpush1.msra.mxu0 %v434
    %2344 = vmatprep.subr.mxu0 %v439
    %2345 = vmatpush1.msra.mxu0 %v438
    %2346 = vmatprep.subr.mxu0 0.0
    %2347 = vmatpush1.msra.mxu0 0.0
    %2348 = vmatprep.subr.mxu0 0.0
    %2349 = vmatpush1.msra.mxu0 0.0
    %2350 = vmatprep.subr.mxu0 0.0
    %2351 = vmatpush1.msra.mxu0 0.0
    %2352 = vmatprep.subr.mxu0 0.0
    %2353 = vmatpush1.msra.mxu0 0.0
    %2354 = vmatprep.subr.mxu0 0.0
    %2355 = vmatpush1.msra.mxu0 0.0
    %2356 = vmatprep.subr.mxu0 0.0
    %2357 = vmatpush1.msra.mxu0 0.0
    %2358 = vmatprep.subr.mxu0 0.0
    %2359 = vmatpush1.msra.mxu0 0.0
    %2360 = vmatprep.subr.mxu0 0.0
    %2361 = vmatpush1.msra.mxu0 0.0
    %2362 = vmatprep.subr.mxu0 0.0
    %2363 = vmatpush1.msra.mxu0 0.0
    %2364 = vmatprep.subr.mxu0 0.0
    %2365 = vmatpush1.msra.mxu0 0.0
    %2366 = vmatprep.subr.mxu0 0.0
    %2367 = vmatpush1.msra.mxu0 0.0
    %2368 = vmatprep.subr.mxu0 0.0
    %2369 = vmatpush1.msra.mxu0 0.0
    %2370 = vmatprep.subr.mxu0 0.0
    %2371 = vmatpush1.msra.mxu0 0.0
    %2372 = vmatprep.subr.mxu0 0.0
    %2373 = vmatpush1.msra.mxu0 0.0
    %2374 = vmatprep.subr.mxu0 0.0
    %2375 = vmatpush1.msra.mxu0 0.0
    %2376 = vmatprep.subr.mxu0 0.0
    %2377 = vmatpush1.msra.mxu0 0.0
    %2378 = vmatprep.mubr.f32.mxu0 0.0
    %2379 = vmatmul.mubr.f32.gmra.mrb[0].mxu0 %v2140
    %v2380 = vpop.f32.mrb[0].mxu0
    %v2381 = vadd.f32 0.0, %v2380
    %v2382 = vpop.f32.mrb[0].mxu0
    %v2383 = vadd.f32 0.0, %v2382
    %2384 = vdwg.mxu0
    %2385 = vmatprep.subr.mxu0 %v381
    %2386 = vmatpush1.msra.mxu0 %v380
    %2387 = vmatprep.subr.mxu0 %v385
    %2388 = vmatpush1.msra.mxu0 %v384
    %2389 = vmatprep.subr.mxu0 %v389
    %2390 = vmatpush1.msra.mxu0 %v388
    %2391 = vmatprep.subr.mxu0 %v393
    %2392 = vmatpush1.msra.mxu0 %v392
    %2393 = vmatprep.subr.mxu0 %v397
    %2394 = vmatpush1.msra.mxu0 %v396
    %2395 = vmatprep.subr.mxu0 %v401
    %2396 = vmatpush1.msra.mxu0 %v400
    %2397 = vmatprep.subr.mxu0 %v405
    %2398 = vmatpush1.msra.mxu0 %v404
    %2399 = vmatprep.subr.mxu0 %v409
    %2400 = vmatpush1.msra.mxu0 %v408
    %2401 = vmatprep.subr.mxu0 %v413
    %2402 = vmatpush1.msra.mxu0 %v412
    %2403 = vmatprep.subr.mxu0 %v417
    %2404 = vmatpush1.msra.mxu0 %v416
    %2405 = vmatprep.subr.mxu0 %v421
    %2406 = vmatpush1.msra.mxu0 %v420
    %2407 = vmatprep.subr.mxu0 %v425
    %2408 = vmatpush1.msra.mxu0 %v424
    %2409 = vmatprep.subr.mxu0 %v429
    %2410 = vmatpush1.msra.mxu0 %v428
    %2411 = vmatprep.subr.mxu0 %v433
    %2412 = vmatpush1.msra.mxu0 %v432
    %2413 = vmatprep.subr.mxu0 %v437
    %2414 = vmatpush1.msra.mxu0 %v436
    %2415 = vmatprep.subr.mxu0 %v441
    %2416 = vmatpush1.msra.mxu0 %v440
    %2417 = vmatprep.subr.mxu0 0.0
    %2418 = vmatpush1.msra.mxu0 0.0
    %2419 = vmatprep.subr.mxu0 0.0
    %2420 = vmatpush1.msra.mxu0 0.0
    %2421 = vmatprep.subr.mxu0 0.0
    %2422 = vmatpush1.msra.mxu0 0.0
    %2423 = vmatprep.subr.mxu0 0.0
    %2424 = vmatpush1.msra.mxu0 0.0
    %2425 = vmatprep.subr.mxu0 0.0
    %2426 = vmatpush1.msra.mxu0 0.0
    %2427 = vmatprep.subr.mxu0 0.0
    %2428 = vmatpush1.msra.mxu0 0.0
    %2429 = vmatprep.subr.mxu0 0.0
    %2430 = vmatpush1.msra.mxu0 0.0
    %2431 = vmatprep.subr.mxu0 0.0
    %2432 = vmatpush1.msra.mxu0 0.0
    %2433 = vmatprep.subr.mxu0 0.0
    %2434 = vmatpush1.msra.mxu0 0.0
    %2435 = vmatprep.subr.mxu0 0.0
    %2436 = vmatpush1.msra.mxu0 0.0
    %2437 = vmatprep.subr.mxu0 0.0
    %2438 = vmatpush1.msra.mxu0 0.0
    %2439 = vmatprep.subr.mxu0 0.0
    %2440 = vmatpush1.msra.mxu0 0.0
    %2441 = vmatprep.subr.mxu0 0.0
    %2442 = vmatpush1.msra.mxu0 0.0
    %2443 = vmatprep.subr.mxu0 0.0
    %2444 = vmatpush1.msra.mxu0 0.0
    %2445 = vmatprep.subr.mxu0 0.0
    %2446 = vmatpush1.msra.mxu0 0.0
    %2447 = vmatprep.subr.mxu0 0.0
    %2448 = vmatpush1.msra.mxu0 0.0
    %2449 = vmatprep.mubr.f32.mxu0 0.0
    %2450 = vmatmul.mubr.f32.gmra.mrb[0].mxu0 %v2140
    %v2451 = vpop.f32.mrb[0].mxu0
    %v2452 = vadd.f32 0.0, %v2451
    %v2453 = vpop.f32.mrb[0].mxu0
    %v2454 = vadd.f32 0.0, %v2453
    %2455 = vdwg.mxu0
    %v2456 = vadd.f32 %v2310, %v2381
    %v2457 = vadd.f32 %v2311, %v2383
    %v2458 = vadd.f32 %v2312, %v2452
    %v2459 = vadd.f32 %v2313, %v2454
    %v2460 = vxor.u32 %v2456, 2147483648
    %v2461 = vmul.f32 %v2460, 1.442695
    %v2462 = vpow.pop %v2461
    %v2463 = vadd.f32 %v2462, 1.0
    %v2464 = vrcp.pop %v2463
    %v2465 = vmul.f32 1.0, %v2464
    %v2466 = vxor.u32 %v2457, 2147483648
    %v2467 = vmul.f32 %v2466, 1.442695
    %v2468 = vpow.pop %v2467
    %v2469 = vadd.f32 %v2468, 1.0
    %v2470 = vrcp.pop %v2469
    %v2471 = vmul.f32 1.0, %v2470
    %v2472 = vtanh.pop %v2458
    %v2473 = vxor.u32 %v2459, 2147483648
    %v2474 = vmul.f32 %v2473, 1.442695
    %v2475 = vpow.pop %v2474
    %v2476 = vadd.f32 %v2475, 1.0
    %v2477 = vrcp.pop %v2476
    %v2478 = vmul.f32 1.0, %v2477
    %v2479 = vmul.f32 %v2471, %v2138
    %v2480 = vmul.f32 %v2465, %v2472
    %v2481 = vadd.f32 %v2479, %v2480
    %v2482 = vtanh.pop %v2481
    %v2483 = vmul.f32 %v2478, %v2482
    %2484 = vmatprep.subr.mxu0 %v443
    %2485 = vmatpush1.msra.mxu0 %v442
    %2486 = vmatprep.subr.mxu0 %v447
    %2487 = vmatpush1.msra.mxu0 %v446
    %2488 = vmatprep.subr.mxu0 %v451
    %2489 = vmatpush1.msra.mxu0 %v450
    %2490 = vmatprep.subr.mxu0 %v455
    %2491 = vmatpush1.msra.mxu0 %v454
    %2492 = vmatprep.subr.mxu0 %v459
    %2493 = vmatpush1.msra.mxu0 %v458
    %2494 = vmatprep.subr.mxu0 %v463
    %2495 = vmatpush1.msra.mxu0 %v462
    %2496 = vmatprep.subr.mxu0 %v467
    %2497 = vmatpush1.msra.mxu0 %v466
    %2498 = vmatprep.subr.mxu0 %v471
    %2499 = vmatpush1.msra.mxu0 %v470
    %2500 = vmatprep.subr.mxu0 %v475
    %2501 = vmatpush1.msra.mxu0 %v474
    %2502 = vmatprep.subr.mxu0 %v479
    %2503 = vmatpush1.msra.mxu0 %v478
    %2504 = vmatprep.subr.mxu0 %v483
    %2505 = vmatpush1.msra.mxu0 %v482
    %2506 = vmatprep.subr.mxu0 %v487
    %2507 = vmatpush1.msra.mxu0 %v486
    %2508 = vmatprep.subr.mxu0 %v491
    %2509 = vmatpush1.msra.mxu0 %v490
    %2510 = vmatprep.subr.mxu0 %v495
    %2511 = vmatpush1.msra.mxu0 %v494
    %2512 = vmatprep.subr.mxu0 %v499
    %2513 = vmatpush1.msra.mxu0 %v498
    %2514 = vmatprep.subr.mxu0 %v503
    %2515 = vmatpush1.msra.mxu0 %v502
    %2516 = vmatprep.subr.mxu0 %v507
    %2517 = vmatpush1.msra.mxu0 %v506
    %2518 = vmatprep.subr.mxu0 %v511
    %2519 = vmatpush1.msra.mxu0 %v510
    %2520 = vmatprep.subr.mxu0 %v515
    %2521 = vmatpush1.msra.mxu0 %v514
    %2522 = vmatprep.subr.mxu0 %v519
    %2523 = vmatpush1.msra.mxu0 %v518
    %2524 = vmatprep.subr.mxu0 %v523
    %2525 = vmatpush1.msra.mxu0 %v522
    %2526 = vmatprep.subr.mxu0 %v527
    %2527 = vmatpush1.msra.mxu0 %v526
    %2528 = vmatprep.subr.mxu0 %v531
    %2529 = vmatpush1.msra.mxu0 %v530
    %2530 = vmatprep.subr.mxu0 %v535
    %2531 = vmatpush1.msra.mxu0 %v534
    %2532 = vmatprep.subr.mxu0 %v539
    %2533 = vmatpush1.msra.mxu0 %v538
    %2534 = vmatprep.subr.mxu0 %v543
    %2535 = vmatpush1.msra.mxu0 %v542
    %2536 = vmatprep.subr.mxu0 %v547
    %2537 = vmatpush1.msra.mxu0 %v546
    %2538 = vmatprep.subr.mxu0 %v551
    %2539 = vmatpush1.msra.mxu0 %v550
    %2540 = vmatprep.subr.mxu0 %v555
    %2541 = vmatpush1.msra.mxu0 %v554
    %2542 = vmatprep.subr.mxu0 %v559
    %2543 = vmatpush1.msra.mxu0 %v558
    %2544 = vmatprep.subr.mxu0 %v563
    %2545 = vmatpush1.msra.mxu0 %v562
    %2546 = vmatprep.subr.mxu0 %v567
    %2547 = vmatpush1.msra.mxu0 %v566
    %2548 = vmatprep.mubr.f32.mxu0 %v2306
    %2549 = vmatmul.mubr.f32.gmra.mrb[0].mxu0 %v2483
    %v2550 = vpop.f32.mrb[0].mxu0
    %v2551 = vadd.f32 %v575, %v2550
    %v2552 = vpop.f32.mrb[0].mxu0
    %v2553 = vadd.f32 %v579, %v2552
    %2554 = vdwg.mxu0
    %2555 = vmatprep.subr.mxu0 %v445
    %2556 = vmatpush1.msra.mxu0 %v444
    %2557 = vmatprep.subr.mxu0 %v449
    %2558 = vmatpush1.msra.mxu0 %v448
    %2559 = vmatprep.subr.mxu0 %v453
    %2560 = vmatpush1.msra.mxu0 %v452
    %2561 = vmatprep.subr.mxu0 %v457
    %2562 = vmatpush1.msra.mxu0 %v456
    %2563 = vmatprep.subr.mxu0 %v461
    %2564 = vmatpush1.msra.mxu0 %v460
    %2565 = vmatprep.subr.mxu0 %v465
    %2566 = vmatpush1.msra.mxu0 %v464
    %2567 = vmatprep.subr.mxu0 %v469
    %2568 = vmatpush1.msra.mxu0 %v468
    %2569 = vmatprep.subr.mxu0 %v473
    %2570 = vmatpush1.msra.mxu0 %v472
    %2571 = vmatprep.subr.mxu0 %v477
    %2572 = vmatpush1.msra.mxu0 %v476
    %2573 = vmatprep.subr.mxu0 %v481
    %2574 = vmatpush1.msra.mxu0 %v480
    %2575 = vmatprep.subr.mxu0 %v485
    %2576 = vmatpush1.msra.mxu0 %v484
    %2577 = vmatprep.subr.mxu0 %v489
    %2578 = vmatpush1.msra.mxu0 %v488
    %2579 = vmatprep.subr.mxu0 %v493
    %2580 = vmatpush1.msra.mxu0 %v492
    %2581 = vmatprep.subr.mxu0 %v497
    %2582 = vmatpush1.msra.mxu0 %v496
    %2583 = vmatprep.subr.mxu0 %v501
    %2584 = vmatpush1.msra.mxu0 %v500
    %2585 = vmatprep.subr.mxu0 %v505
    %2586 = vmatpush1.msra.mxu0 %v504
    %2587 = vmatprep.subr.mxu0 %v509
    %2588 = vmatpush1.msra.mxu0 %v508
    %2589 = vmatprep.subr.mxu0 %v513
    %2590 = vmatpush1.msra.mxu0 %v512
    %2591 = vmatprep.subr.mxu0 %v517
    %2592 = vmatpush1.msra.mxu0 %v516
    %2593 = vmatprep.subr.mxu0 %v521
    %2594 = vmatpush1.msra.mxu0 %v520
    %2595 = vmatprep.subr.mxu0 %v525
    %2596 = vmatpush1.msra.mxu0 %v524
    %2597 = vmatprep.subr.mxu0 %v529
    %2598 = vmatpush1.msra.mxu0 %v528
    %2599 = vmatprep.subr.mxu0 %v533
    %2600 = vmatpush1.msra.mxu0 %v532
    %2601 = vmatprep.subr.mxu0 %v537
    %2602 = vmatpush1.msra.mxu0 %v536
    %2603 = vmatprep.subr.mxu0 %v541
    %2604 = vmatpush1.msra.mxu0 %v540
    %2605 = vmatprep.subr.mxu0 %v545
    %2606 = vmatpush1.msra.mxu0 %v544
    %2607 = vmatprep.subr.mxu0 %v549
    %2608 = vmatpush1.msra.mxu0 %v548
    %2609 = vmatprep.subr.mxu0 %v553
    %2610 = vmatpush1.msra.mxu0 %v552
    %2611 = vmatprep.subr.mxu0 %v557
    %2612 = vmatpush1.msra.mxu0 %v556
    %2613 = vmatprep.subr.mxu0 %v561
    %2614 = vmatpush1.msra.mxu0 %v560
    %2615 = vmatprep.subr.mxu0 %v565
    %2616 = vmatpush1.msra.mxu0 %v564
    %2617 = vmatprep.subr.mxu0 %v569
    %2618 = vmatpush1.msra.mxu0 %v568
    %2619 = vmatprep.mubr.f32.mxu0 %v2306
    %2620 = vmatmul.mubr.f32.gmra.mrb[0].mxu0 %v2483
    %v2621 = vpop.f32.mrb[0].mxu0
    %v2622 = vadd.f32 %v583, %v2621
    %v2623 = vpop.f32.mrb[0].mxu0
    %v2624 = vadd.f32 %v587, %v2623
    %2625 = vdwg.mxu0
    %v2626 = vxor.u32 %v2551, 2147483648
    %v2627 = vmul.f32 %v2626, 1.442695
    %v2628 = vpow.pop %v2627
    %v2629 = vadd.f32 %v2628, 1.0
    %v2630 = vrcp.pop %v2629
    %v2631 = vmul.f32 1.0, %v2630
    %v2632 = vxor.u32 %v2553, 2147483648
    %v2633 = vmul.f32 %v2632, 1.442695
    %v2634 = vpow.pop %v2633
    %v2635 = vadd.f32 %v2634, 1.0
    %v2636 = vrcp.pop %v2635
    %v2637 = vmul.f32 1.0, %v2636
    %v2638 = vtanh.pop %v2622
    %v2639 = vxor.u32 %v2624, 2147483648
    %v2640 = vmul.f32 %v2639, 1.442695
    %v2641 = vpow.pop %v2640
    %v2642 = vadd.f32 %v2641, 1.0
    %v2643 = vrcp.pop %v2642
    %v2644 = vmul.f32 1.0, %v2643
    %v2645 = vmul.f32 %v2637, %v2304
    %v2646 = vmul.f32 %v2631, %v2638
    %v2647 = vadd.f32 %v2645, %v2646
    %v2648 = vtanh.pop %v2647
    %v2649 = vmul.f32 %v2644, %v2648
    %s2650 = smul.u32 6, 4
    %s2651 = smul.addr %s2650, 8
    %s2652 = scalar_lea.vmem [#allocation2], %s2651
    %v2653 = vld [vmem:[%s2652] sm:$0xff]
    %v2654 = vld [vmem:[%s2652 + $0x8] sm:$0xff]
    %v2655 = vld [vmem:[%s2652 + $0x10] sm:$0xff]
    %v2656 = vld [vmem:[%s2652 + $0x18] sm:$0xff]
    %2657 = vmatprep.subr.mxu0 %v379
    %2658 = vmatpush1.msra.mxu0 %v378
    %2659 = vmatprep.subr.mxu0 %v383
    %2660 = vmatpush1.msra.mxu0 %v382
    %2661 = vmatprep.subr.mxu0 %v387
    %2662 = vmatpush1.msra.mxu0 %v386
    %2663 = vmatprep.subr.mxu0 %v391
    %2664 = vmatpush1.msra.mxu0 %v390
    %2665 = vmatprep.subr.mxu0 %v395
    %2666 = vmatpush1.msra.mxu0 %v394
    %2667 = vmatprep.subr.mxu0 %v399
    %2668 = vmatpush1.msra.mxu0 %v398
    %2669 = vmatprep.subr.mxu0 %v403
    %2670 = vmatpush1.msra.mxu0 %v402
    %2671 = vmatprep.subr.mxu0 %v407
    %2672 = vmatpush1.msra.mxu0 %v406
    %2673 = vmatprep.subr.mxu0 %v411
    %2674 = vmatpush1.msra.mxu0 %v410
    %2675 = vmatprep.subr.mxu0 %v415
    %2676 = vmatpush1.msra.mxu0 %v414
    %2677 = vmatprep.subr.mxu0 %v419
    %2678 = vmatpush1.msra.mxu0 %v418
    %2679 = vmatprep.subr.mxu0 %v423
    %2680 = vmatpush1.msra.mxu0 %v422
    %2681 = vmatprep.subr.mxu0 %v427
    %2682 = vmatpush1.msra.mxu0 %v426
    %2683 = vmatprep.subr.mxu0 %v431
    %2684 = vmatpush1.msra.mxu0 %v430
    %2685 = vmatprep.subr.mxu0 %v435
    %2686 = vmatpush1.msra.mxu0 %v434
    %2687 = vmatprep.subr.mxu0 %v439
    %2688 = vmatpush1.msra.mxu0 %v438
    %2689 = vmatprep.subr.mxu0 0.0
    %2690 = vmatpush1.msra.mxu0 0.0
    %2691 = vmatprep.subr.mxu0 0.0
    %2692 = vmatpush1.msra.mxu0 0.0
    %2693 = vmatprep.subr.mxu0 0.0
    %2694 = vmatpush1.msra.mxu0 0.0
    %2695 = vmatprep.subr.mxu0 0.0
    %2696 = vmatpush1.msra.mxu0 0.0
    %2697 = vmatprep.subr.mxu0 0.0
    %2698 = vmatpush1.msra.mxu0 0.0
    %2699 = vmatprep.subr.mxu0 0.0
    %2700 = vmatpush1.msra.mxu0 0.0
    %2701 = vmatprep.subr.mxu0 0.0
    %2702 = vmatpush1.msra.mxu0 0.0
    %2703 = vmatprep.subr.mxu0 0.0
    %2704 = vmatpush1.msra.mxu0 0.0
    %2705 = vmatprep.subr.mxu0 0.0
    %2706 = vmatpush1.msra.mxu0 0.0
    %2707 = vmatprep.subr.mxu0 0.0
    %2708 = vmatpush1.msra.mxu0 0.0
    %2709 = vmatprep.subr.mxu0 0.0
    %2710 = vmatpush1.msra.mxu0 0.0
    %2711 = vmatprep.subr.mxu0 0.0
    %2712 = vmatpush1.msra.mxu0 0.0
    %2713 = vmatprep.subr.mxu0 0.0
    %2714 = vmatpush1.msra.mxu0 0.0
    %2715 = vmatprep.subr.mxu0 0.0
    %2716 = vmatpush1.msra.mxu0 0.0
    %2717 = vmatprep.subr.mxu0 0.0
    %2718 = vmatpush1.msra.mxu0 0.0
    %2719 = vmatprep.subr.mxu0 0.0
    %2720 = vmatpush1.msra.mxu0 0.0
    %2721 = vmatprep.mubr.f32.mxu0 0.0
    %2722 = vmatmul.mubr.f32.gmra.mrb[0].mxu0 %v2483
    %v2723 = vpop.f32.mrb[0].mxu0
    %v2724 = vadd.f32 0.0, %v2723
    %v2725 = vpop.f32.mrb[0].mxu0
    %v2726 = vadd.f32 0.0, %v2725
    %2727 = vdwg.mxu0
    %2728 = vmatprep.subr.mxu0 %v381
    %2729 = vmatpush1.msra.mxu0 %v380
    %2730 = vmatprep.subr.mxu0 %v385
    %2731 = vmatpush1.msra.mxu0 %v384
    %2732 = vmatprep.subr.mxu0 %v389
    %2733 = vmatpush1.msra.mxu0 %v388
    %2734 = vmatprep.subr.mxu0 %v393
    %2735 = vmatpush1.msra.mxu0 %v392
    %2736 = vmatprep.subr.mxu0 %v397
    %2737 = vmatpush1.msra.mxu0 %v396
    %2738 = vmatprep.subr.mxu0 %v401
    %2739 = vmatpush1.msra.mxu0 %v400
    %2740 = vmatprep.subr.mxu0 %v405
    %2741 = vmatpush1.msra.mxu0 %v404
    %2742 = vmatprep.subr.mxu0 %v409
    %2743 = vmatpush1.msra.mxu0 %v408
    %2744 = vmatprep.subr.mxu0 %v413
    %2745 = vmatpush1.msra.mxu0 %v412
    %2746 = vmatprep.subr.mxu0 %v417
    %2747 = vmatpush1.msra.mxu0 %v416
    %2748 = vmatprep.subr.mxu0 %v421
    %2749 = vmatpush1.msra.mxu0 %v420
    %2750 = vmatprep.subr.mxu0 %v425
    %2751 = vmatpush1.msra.mxu0 %v424
    %2752 = vmatprep.subr.mxu0 %v429
    %2753 = vmatpush1.msra.mxu0 %v428
    %2754 = vmatprep.subr.mxu0 %v433
    %2755 = vmatpush1.msra.mxu0 %v432
    %2756 = vmatprep.subr.mxu0 %v437
    %2757 = vmatpush1.msra.mxu0 %v436
    %2758 = vmatprep.subr.mxu0 %v441
    %2759 = vmatpush1.msra.mxu0 %v440
    %2760 = vmatprep.subr.mxu0 0.0
    %2761 = vmatpush1.msra.mxu0 0.0
    %2762 = vmatprep.subr.mxu0 0.0
    %2763 = vmatpush1.msra.mxu0 0.0
    %2764 = vmatprep.subr.mxu0 0.0
    %2765 = vmatpush1.msra.mxu0 0.0
    %2766 = vmatprep.subr.mxu0 0.0
    %2767 = vmatpush1.msra.mxu0 0.0
    %2768 = vmatprep.subr.mxu0 0.0
    %2769 = vmatpush1.msra.mxu0 0.0
    %2770 = vmatprep.subr.mxu0 0.0
    %2771 = vmatpush1.msra.mxu0 0.0
    %2772 = vmatprep.subr.mxu0 0.0
    %2773 = vmatpush1.msra.mxu0 0.0
    %2774 = vmatprep.subr.mxu0 0.0
    %2775 = vmatpush1.msra.mxu0 0.0
    %2776 = vmatprep.subr.mxu0 0.0
    %2777 = vmatpush1.msra.mxu0 0.0
    %2778 = vmatprep.subr.mxu0 0.0
    %2779 = vmatpush1.msra.mxu0 0.0
    %2780 = vmatprep.subr.mxu0 0.0
    %2781 = vmatpush1.msra.mxu0 0.0
    %2782 = vmatprep.subr.mxu0 0.0
    %2783 = vmatpush1.msra.mxu0 0.0
    %2784 = vmatprep.subr.mxu0 0.0
    %2785 = vmatpush1.msra.mxu0 0.0
    %2786 = vmatprep.subr.mxu0 0.0
    %2787 = vmatpush1.msra.mxu0 0.0
    %2788 = vmatprep.subr.mxu0 0.0
    %2789 = vmatpush1.msra.mxu0 0.0
    %2790 = vmatprep.subr.mxu0 0.0
    %2791 = vmatpush1.msra.mxu0 0.0
    %2792 = vmatprep.mubr.f32.mxu0 0.0
    %2793 = vmatmul.mubr.f32.gmra.mrb[0].mxu0 %v2483
    %v2794 = vpop.f32.mrb[0].mxu0
    %v2795 = vadd.f32 0.0, %v2794
    %v2796 = vpop.f32.mrb[0].mxu0
    %v2797 = vadd.f32 0.0, %v2796
    %2798 = vdwg.mxu0
    %v2799 = vadd.f32 %v2653, %v2724
    %v2800 = vadd.f32 %v2654, %v2726
    %v2801 = vadd.f32 %v2655, %v2795
    %v2802 = vadd.f32 %v2656, %v2797
    %v2803 = vxor.u32 %v2799, 2147483648
    %v2804 = vmul.f32 %v2803, 1.442695
    %v2805 = vpow.pop %v2804
    %v2806 = vadd.f32 %v2805, 1.0
    %v2807 = vrcp.pop %v2806
    %v2808 = vmul.f32 1.0, %v2807
    %v2809 = vxor.u32 %v2800, 2147483648
    %v2810 = vmul.f32 %v2809, 1.442695
    %v2811 = vpow.pop %v2810
    %v2812 = vadd.f32 %v2811, 1.0
    %v2813 = vrcp.pop %v2812
    %v2814 = vmul.f32 1.0, %v2813
    %v2815 = vtanh.pop %v2801
    %v2816 = vxor.u32 %v2802, 2147483648
    %v2817 = vmul.f32 %v2816, 1.442695
    %v2818 = vpow.pop %v2817
    %v2819 = vadd.f32 %v2818, 1.0
    %v2820 = vrcp.pop %v2819
    %v2821 = vmul.f32 1.0, %v2820
    %v2822 = vmul.f32 %v2814, %v2481
    %v2823 = vmul.f32 %v2808, %v2815
    %v2824 = vadd.f32 %v2822, %v2823
    %v2825 = vtanh.pop %v2824
    %v2826 = vmul.f32 %v2821, %v2825
    %2827 = vmatprep.subr.mxu0 %v443
    %2828 = vmatpush1.msra.mxu0 %v442
    %2829 = vmatprep.subr.mxu0 %v447
    %2830 = vmatpush1.msra.mxu0 %v446
    %2831 = vmatprep.subr.mxu0 %v451
    %2832 = vmatpush1.msra.mxu0 %v450
    %2833 = vmatprep.subr.mxu0 %v455
    %2834 = vmatpush1.msra.mxu0 %v454
    %2835 = vmatprep.subr.mxu0 %v459
    %2836 = vmatpush1.msra.mxu0 %v458
    %2837 = vmatprep.subr.mxu0 %v463
    %2838 = vmatpush1.msra.mxu0 %v462
    %2839 = vmatprep.subr.mxu0 %v467
    %2840 = vmatpush1.msra.mxu0 %v466
    %2841 = vmatprep.subr.mxu0 %v471
    %2842 = vmatpush1.msra.mxu0 %v470
    %2843 = vmatprep.subr.mxu0 %v475
    %2844 = vmatpush1.msra.mxu0 %v474
    %2845 = vmatprep.subr.mxu0 %v479
    %2846 = vmatpush1.msra.mxu0 %v478
    %2847 = vmatprep.subr.mxu0 %v483
    %2848 = vmatpush1.msra.mxu0 %v482
    %2849 = vmatprep.subr.mxu0 %v487
    %2850 = vmatpush1.msra.mxu0 %v486
    %2851 = vmatprep.subr.mxu0 %v491
    %2852 = vmatpush1.msra.mxu0 %v490
    %2853 = vmatprep.subr.mxu0 %v495
    %2854 = vmatpush1.msra.mxu0 %v494
    %2855 = vmatprep.subr.mxu0 %v499
    %2856 = vmatpush1.msra.mxu0 %v498
    %2857 = vmatprep.subr.mxu0 %v503
    %2858 = vmatpush1.msra.mxu0 %v502
    %2859 = vmatprep.subr.mxu0 %v507
    %2860 = vmatpush1.msra.mxu0 %v506
    %2861 = vmatprep.subr.mxu0 %v511
    %2862 = vmatpush1.msra.mxu0 %v510
    %2863 = vmatprep.subr.mxu0 %v515
    %2864 = vmatpush1.msra.mxu0 %v514
    %2865 = vmatprep.subr.mxu0 %v519
    %2866 = vmatpush1.msra.mxu0 %v518
    %2867 = vmatprep.subr.mxu0 %v523
    %2868 = vmatpush1.msra.mxu0 %v522
    %2869 = vmatprep.subr.mxu0 %v527
    %2870 = vmatpush1.msra.mxu0 %v526
    %2871 = vmatprep.subr.mxu0 %v531
    %2872 = vmatpush1.msra.mxu0 %v530
    %2873 = vmatprep.subr.mxu0 %v535
    %2874 = vmatpush1.msra.mxu0 %v534
    %2875 = vmatprep.subr.mxu0 %v539
    %2876 = vmatpush1.msra.mxu0 %v538
    %2877 = vmatprep.subr.mxu0 %v543
    %2878 = vmatpush1.msra.mxu0 %v542
    %2879 = vmatprep.subr.mxu0 %v547
    %2880 = vmatpush1.msra.mxu0 %v546
    %2881 = vmatprep.subr.mxu0 %v551
    %2882 = vmatpush1.msra.mxu0 %v550
    %2883 = vmatprep.subr.mxu0 %v555
    %2884 = vmatpush1.msra.mxu0 %v554
    %2885 = vmatprep.subr.mxu0 %v559
    %2886 = vmatpush1.msra.mxu0 %v558
    %2887 = vmatprep.subr.mxu0 %v563
    %2888 = vmatpush1.msra.mxu0 %v562
    %2889 = vmatprep.subr.mxu0 %v567
    %2890 = vmatpush1.msra.mxu0 %v566
    %2891 = vmatprep.mubr.f32.mxu0 %v2649
    %2892 = vmatmul.mubr.f32.gmra.mrb[0].mxu0 %v2826
    %v2893 = vpop.f32.mrb[0].mxu0
    %v2894 = vadd.f32 %v575, %v2893
    %v2895 = vpop.f32.mrb[0].mxu0
    %v2896 = vadd.f32 %v579, %v2895
    %2897 = vdwg.mxu0
    %2898 = vmatprep.subr.mxu0 %v445
    %2899 = vmatpush1.msra.mxu0 %v444
    %2900 = vmatprep.subr.mxu0 %v449
    %2901 = vmatpush1.msra.mxu0 %v448
    %2902 = vmatprep.subr.mxu0 %v453
    %2903 = vmatpush1.msra.mxu0 %v452
    %2904 = vmatprep.subr.mxu0 %v457
    %2905 = vmatpush1.msra.mxu0 %v456
    %2906 = vmatprep.subr.mxu0 %v461
    %2907 = vmatpush1.msra.mxu0 %v460
    %2908 = vmatprep.subr.mxu0 %v465
    %2909 = vmatpush1.msra.mxu0 %v464
    %2910 = vmatprep.subr.mxu0 %v469
    %2911 = vmatpush1.msra.mxu0 %v468
    %2912 = vmatprep.subr.mxu0 %v473
    %2913 = vmatpush1.msra.mxu0 %v472
    %2914 = vmatprep.subr.mxu0 %v477
    %2915 = vmatpush1.msra.mxu0 %v476
    %2916 = vmatprep.subr.mxu0 %v481
    %2917 = vmatpush1.msra.mxu0 %v480
    %2918 = vmatprep.subr.mxu0 %v485
    %2919 = vmatpush1.msra.mxu0 %v484
    %2920 = vmatprep.subr.mxu0 %v489
    %2921 = vmatpush1.msra.mxu0 %v488
    %2922 = vmatprep.subr.mxu0 %v493
    %2923 = vmatpush1.msra.mxu0 %v492
    %2924 = vmatprep.subr.mxu0 %v497
    %2925 = vmatpush1.msra.mxu0 %v496
    %2926 = vmatprep.subr.mxu0 %v501
    %2927 = vmatpush1.msra.mxu0 %v500
    %2928 = vmatprep.subr.mxu0 %v505
    %2929 = vmatpush1.msra.mxu0 %v504
    %2930 = vmatprep.subr.mxu0 %v509
    %2931 = vmatpush1.msra.mxu0 %v508
    %2932 = vmatprep.subr.mxu0 %v513
    %2933 = vmatpush1.msra.mxu0 %v512
    %2934 = vmatprep.subr.mxu0 %v517
    %2935 = vmatpush1.msra.mxu0 %v516
    %2936 = vmatprep.subr.mxu0 %v521
    %2937 = vmatpush1.msra.mxu0 %v520
    %2938 = vmatprep.subr.mxu0 %v525
    %2939 = vmatpush1.msra.mxu0 %v524
    %2940 = vmatprep.subr.mxu0 %v529
    %2941 = vmatpush1.msra.mxu0 %v528
    %2942 = vmatprep.subr.mxu0 %v533
    %2943 = vmatpush1.msra.mxu0 %v532
    %2944 = vmatprep.subr.mxu0 %v537
    %2945 = vmatpush1.msra.mxu0 %v536
    %2946 = vmatprep.subr.mxu0 %v541
    %2947 = vmatpush1.msra.mxu0 %v540
    %2948 = vmatprep.subr.mxu0 %v545
    %2949 = vmatpush1.msra.mxu0 %v544
    %2950 = vmatprep.subr.mxu0 %v549
    %2951 = vmatpush1.msra.mxu0 %v548
    %2952 = vmatprep.subr.mxu0 %v553
    %2953 = vmatpush1.msra.mxu0 %v552
    %2954 = vmatprep.subr.mxu0 %v557
    %2955 = vmatpush1.msra.mxu0 %v556
    %2956 = vmatprep.subr.mxu0 %v561
    %2957 = vmatpush1.msra.mxu0 %v560
    %2958 = vmatprep.subr.mxu0 %v565
    %2959 = vmatpush1.msra.mxu0 %v564
    %2960 = vmatprep.subr.mxu0 %v569
    %2961 = vmatpush1.msra.mxu0 %v568
    %2962 = vmatprep.mubr.f32.mxu0 %v2649
    %2963 = vmatmul.mubr.f32.gmra.mrb[0].mxu0 %v2826
    %v2964 = vpop.f32.mrb[0].mxu0
    %v2965 = vadd.f32 %v583, %v2964
    %v2966 = vpop.f32.mrb[0].mxu0
    %v2967 = vadd.f32 %v587, %v2966
    %2968 = vdwg.mxu0
    %v2969 = vxor.u32 %v2894, 2147483648
    %v2970 = vmul.f32 %v2969, 1.442695
    %v2971 = vpow.pop %v2970
    %v2972 = vadd.f32 %v2971, 1.0
    %v2973 = vrcp.pop %v2972
    %v2974 = vmul.f32 1.0, %v2973
    %v2975 = vxor.u32 %v2896, 2147483648
    %v2976 = vmul.f32 %v2975, 1.442695
    %v2977 = vpow.pop %v2976
    %v2978 = vadd.f32 %v2977, 1.0
    %v2979 = vrcp.pop %v2978
    %v2980 = vmul.f32 1.0, %v2979
    %v2981 = vtanh.pop %v2965
    %v2982 = vxor.u32 %v2967, 2147483648
    %v2983 = vmul.f32 %v2982, 1.442695
    %v2984 = vpow.pop %v2983
    %v2985 = vadd.f32 %v2984, 1.0
    %v2986 = vrcp.pop %v2985
    %v2987 = vmul.f32 1.0, %v2986
    %v2988 = vmul.f32 %v2980, %v2647
    %v2989 = vmul.f32 %v2974, %v2981
    %v2990 = vadd.f32 %v2988, %v2989
    %v2991 = vtanh.pop %v2990
    %v2992 = vmul.f32 %v2987, %v2991
    %s2993 = smul.u32 7, 4
    %s2994 = smul.addr %s2993, 8
    %s2995 = scalar_lea.vmem [#allocation2], %s2994
    %v2996 = vld [vmem:[%s2995] sm:$0xff]
    %v2997 = vld [vmem:[%s2995 + $0x8] sm:$0xff]
    %v2998 = vld [vmem:[%s2995 + $0x10] sm:$0xff]
    %v2999 = vld [vmem:[%s2995 + $0x18] sm:$0xff]
    %3000 = vmatprep.subr.mxu0 %v379
    %3001 = vmatpush1.msra.mxu0 %v378
    %3002 = vmatprep.subr.mxu0 %v383
    %3003 = vmatpush1.msra.mxu0 %v382
    %3004 = vmatprep.subr.mxu0 %v387
    %3005 = vmatpush1.msra.mxu0 %v386
    %3006 = vmatprep.subr.mxu0 %v391
    %3007 = vmatpush1.msra.mxu0 %v390
    %3008 = vmatprep.subr.mxu0 %v395
    %3009 = vmatpush1.msra.mxu0 %v394
    %3010 = vmatprep.subr.mxu0 %v399
    %3011 = vmatpush1.msra.mxu0 %v398
    %3012 = vmatprep.subr.mxu0 %v403
    %3013 = vmatpush1.msra.mxu0 %v402
    %3014 = vmatprep.subr.mxu0 %v407
    %3015 = vmatpush1.msra.mxu0 %v406
    %3016 = vmatprep.subr.mxu0 %v411
    %3017 = vmatpush1.msra.mxu0 %v410
    %3018 = vmatprep.subr.mxu0 %v415
    %3019 = vmatpush1.msra.mxu0 %v414
    %3020 = vmatprep.subr.mxu0 %v419
    %3021 = vmatpush1.msra.mxu0 %v418
    %3022 = vmatprep.subr.mxu0 %v423
    %3023 = vmatpush1.msra.mxu0 %v422
    %3024 = vmatprep.subr.mxu0 %v427
    %3025 = vmatpush1.msra.mxu0 %v426
    %3026 = vmatprep.subr.mxu0 %v431
    %3027 = vmatpush1.msra.mxu0 %v430
    %3028 = vmatprep.subr.mxu0 %v435
    %3029 = vmatpush1.msra.mxu0 %v434
    %3030 = vmatprep.subr.mxu0 %v439
    %3031 = vmatpush1.msra.mxu0 %v438
    %3032 = vmatprep.subr.mxu0 0.0
    %3033 = vmatpush1.msra.mxu0 0.0
    %3034 = vmatprep.subr.mxu0 0.0
    %3035 = vmatpush1.msra.mxu0 0.0
    %3036 = vmatprep.subr.mxu0 0.0
    %3037 = vmatpush1.msra.mxu0 0.0
    %3038 = vmatprep.subr.mxu0 0.0
    %3039 = vmatpush1.msra.mxu0 0.0
    %3040 = vmatprep.subr.mxu0 0.0
    %3041 = vmatpush1.msra.mxu0 0.0
    %3042 = vmatprep.subr.mxu0 0.0
    %3043 = vmatpush1.msra.mxu0 0.0
    %3044 = vmatprep.subr.mxu0 0.0
    %3045 = vmatpush1.msra.mxu0 0.0
    %3046 = vmatprep.subr.mxu0 0.0
    %3047 = vmatpush1.msra.mxu0 0.0
    %3048 = vmatprep.subr.mxu0 0.0
    %3049 = vmatpush1.msra.mxu0 0.0
    %3050 = vmatprep.subr.mxu0 0.0
    %3051 = vmatpush1.msra.mxu0 0.0
    %3052 = vmatprep.subr.mxu0 0.0
    %3053 = vmatpush1.msra.mxu0 0.0
    %3054 = vmatprep.subr.mxu0 0.0
    %3055 = vmatpush1.msra.mxu0 0.0
    %3056 = vmatprep.subr.mxu0 0.0
    %3057 = vmatpush1.msra.mxu0 0.0
    %3058 = vmatprep.subr.mxu0 0.0
    %3059 = vmatpush1.msra.mxu0 0.0
    %3060 = vmatprep.subr.mxu0 0.0
    %3061 = vmatpush1.msra.mxu0 0.0
    %3062 = vmatprep.subr.mxu0 0.0
    %3063 = vmatpush1.msra.mxu0 0.0
    %3064 = vmatprep.mubr.f32.mxu0 0.0
    %3065 = vmatmul.mubr.f32.gmra.mrb[0].mxu0 %v2826
    %v3066 = vpop.f32.mrb[0].mxu0
    %v3067 = vadd.f32 0.0, %v3066
    %v3068 = vpop.f32.mrb[0].mxu0
    %v3069 = vadd.f32 0.0, %v3068
    %3070 = vdwg.mxu0
    %3071 = vmatprep.subr.mxu0 %v381
    %3072 = vmatpush1.msra.mxu0 %v380
    %3073 = vmatprep.subr.mxu0 %v385
    %3074 = vmatpush1.msra.mxu0 %v384
    %3075 = vmatprep.subr.mxu0 %v389
    %3076 = vmatpush1.msra.mxu0 %v388
    %3077 = vmatprep.subr.mxu0 %v393
    %3078 = vmatpush1.msra.mxu0 %v392
    %3079 = vmatprep.subr.mxu0 %v397
    %3080 = vmatpush1.msra.mxu0 %v396
    %3081 = vmatprep.subr.mxu0 %v401
    %3082 = vmatpush1.msra.mxu0 %v400
    %3083 = vmatprep.subr.mxu0 %v405
    %3084 = vmatpush1.msra.mxu0 %v404
    %3085 = vmatprep.subr.mxu0 %v409
    %3086 = vmatpush1.msra.mxu0 %v408
    %3087 = vmatprep.subr.mxu0 %v413
    %3088 = vmatpush1.msra.mxu0 %v412
    %3089 = vmatprep.subr.mxu0 %v417
    %3090 = vmatpush1.msra.mxu0 %v416
    %3091 = vmatprep.subr.mxu0 %v421
    %3092 = vmatpush1.msra.mxu0 %v420
    %3093 = vmatprep.subr.mxu0 %v425
    %3094 = vmatpush1.msra.mxu0 %v424
    %3095 = vmatprep.subr.mxu0 %v429
    %3096 = vmatpush1.msra.mxu0 %v428
    %3097 = vmatprep.subr.mxu0 %v433
    %3098 = vmatpush1.msra.mxu0 %v432
    %3099 = vmatprep.subr.mxu0 %v437
    %3100 = vmatpush1.msra.mxu0 %v436
    %3101 = vmatprep.subr.mxu0 %v441
    %3102 = vmatpush1.msra.mxu0 %v440
    %3103 = vmatprep.subr.mxu0 0.0
    %3104 = vmatpush1.msra.mxu0 0.0
    %3105 = vmatprep.subr.mxu0 0.0
    %3106 = vmatpush1.msra.mxu0 0.0
    %3107 = vmatprep.subr.mxu0 0.0
    %3108 = vmatpush1.msra.mxu0 0.0
    %3109 = vmatprep.subr.mxu0 0.0
    %3110 = vmatpush1.msra.mxu0 0.0
    %3111 = vmatprep.subr.mxu0 0.0
    %3112 = vmatpush1.msra.mxu0 0.0
    %3113 = vmatprep.subr.mxu0 0.0
    %3114 = vmatpush1.msra.mxu0 0.0
    %3115 = vmatprep.subr.mxu0 0.0
    %3116 = vmatpush1.msra.mxu0 0.0
    %3117 = vmatprep.subr.mxu0 0.0
    %3118 = vmatpush1.msra.mxu0 0.0
    %3119 = vmatprep.subr.mxu0 0.0
    %3120 = vmatpush1.msra.mxu0 0.0
    %3121 = vmatprep.subr.mxu0 0.0
    %3122 = vmatpush1.msra.mxu0 0.0
    %3123 = vmatprep.subr.mxu0 0.0
    %3124 = vmatpush1.msra.mxu0 0.0
    %3125 = vmatprep.subr.mxu0 0.0
    %3126 = vmatpush1.msra.mxu0 0.0
    %3127 = vmatprep.subr.mxu0 0.0
    %3128 = vmatpush1.msra.mxu0 0.0
    %3129 = vmatprep.subr.mxu0 0.0
    %3130 = vmatpush1.msra.mxu0 0.0
    %3131 = vmatprep.subr.mxu0 0.0
    %3132 = vmatpush1.msra.mxu0 0.0
    %3133 = vmatprep.subr.mxu0 0.0
    %3134 = vmatpush1.msra.mxu0 0.0
    %3135 = vmatprep.mubr.f32.mxu0 0.0
    %3136 = vmatmul.mubr.f32.gmra.mrb[0].mxu0 %v2826
    %v3137 = vpop.f32.mrb[0].mxu0
    %v3138 = vadd.f32 0.0, %v3137
    %v3139 = vpop.f32.mrb[0].mxu0
    %v3140 = vadd.f32 0.0, %v3139
    %3141 = vdwg.mxu0
    %v3142 = vadd.f32 %v2996, %v3067
    %v3143 = vadd.f32 %v2997, %v3069
    %v3144 = vadd.f32 %v2998, %v3138
    %v3145 = vadd.f32 %v2999, %v3140
    %v3146 = vxor.u32 %v3142, 2147483648
    %v3147 = vmul.f32 %v3146, 1.442695
    %v3148 = vpow.pop %v3147
    %v3149 = vadd.f32 %v3148, 1.0
    %v3150 = vrcp.pop %v3149
    %v3151 = vmul.f32 1.0, %v3150
    %v3152 = vxor.u32 %v3143, 2147483648
    %v3153 = vmul.f32 %v3152, 1.442695
    %v3154 = vpow.pop %v3153
    %v3155 = vadd.f32 %v3154, 1.0
    %v3156 = vrcp.pop %v3155
    %v3157 = vmul.f32 1.0, %v3156
    %v3158 = vtanh.pop %v3144
    %v3159 = vxor.u32 %v3145, 2147483648
    %v3160 = vmul.f32 %v3159, 1.442695
    %v3161 = vpow.pop %v3160
    %v3162 = vadd.f32 %v3161, 1.0
    %v3163 = vrcp.pop %v3162
    %v3164 = vmul.f32 1.0, %v3163
    %v3165 = vmul.f32 %v3157, %v2824
    %v3166 = vmul.f32 %v3151, %v3158
    %v3167 = vadd.f32 %v3165, %v3166
    %v3168 = vtanh.pop %v3167
    %v3169 = vmul.f32 %v3164, %v3168
    %3170 = vmatprep.subr.mxu0 %v443
    %3171 = vmatpush1.msra.mxu0 %v442
    %3172 = vmatprep.subr.mxu0 %v447
    %3173 = vmatpush1.msra.mxu0 %v446
    %3174 = vmatprep.subr.mxu0 %v451
    %3175 = vmatpush1.msra.mxu0 %v450
    %3176 = vmatprep.subr.mxu0 %v455
    %3177 = vmatpush1.msra.mxu0 %v454
    %3178 = vmatprep.subr.mxu0 %v459
    %3179 = vmatpush1.msra.mxu0 %v458
    %3180 = vmatprep.subr.mxu0 %v463
    %3181 = vmatpush1.msra.mxu0 %v462
    %3182 = vmatprep.subr.mxu0 %v467
    %3183 = vmatpush1.msra.mxu0 %v466
    %3184 = vmatprep.subr.mxu0 %v471
    %3185 = vmatpush1.msra.mxu0 %v470
    %3186 = vmatprep.subr.mxu0 %v475
    %3187 = vmatpush1.msra.mxu0 %v474
    %3188 = vmatprep.subr.mxu0 %v479
    %3189 = vmatpush1.msra.mxu0 %v478
    %3190 = vmatprep.subr.mxu0 %v483
    %3191 = vmatpush1.msra.mxu0 %v482
    %3192 = vmatprep.subr.mxu0 %v487
    %3193 = vmatpush1.msra.mxu0 %v486
    %3194 = vmatprep.subr.mxu0 %v491
    %3195 = vmatpush1.msra.mxu0 %v490
    %3196 = vmatprep.subr.mxu0 %v495
    %3197 = vmatpush1.msra.mxu0 %v494
    %3198 = vmatprep.subr.mxu0 %v499
    %3199 = vmatpush1.msra.mxu0 %v498
    %3200 = vmatprep.subr.mxu0 %v503
    %3201 = vmatpush1.msra.mxu0 %v502
    %3202 = vmatprep.subr.mxu0 %v507
    %3203 = vmatpush1.msra.mxu0 %v506
    %3204 = vmatprep.subr.mxu0 %v511
    %3205 = vmatpush1.msra.mxu0 %v510
    %3206 = vmatprep.subr.mxu0 %v515
    %3207 = vmatpush1.msra.mxu0 %v514
    %3208 = vmatprep.subr.mxu0 %v519
    %3209 = vmatpush1.msra.mxu0 %v518
    %3210 = vmatprep.subr.mxu0 %v523
    %3211 = vmatpush1.msra.mxu0 %v522
    %3212 = vmatprep.subr.mxu0 %v527
    %3213 = vmatpush1.msra.mxu0 %v526
    %3214 = vmatprep.subr.mxu0 %v531
    %3215 = vmatpush1.msra.mxu0 %v530
    %3216 = vmatprep.subr.mxu0 %v535
    %3217 = vmatpush1.msra.mxu0 %v534
    %3218 = vmatprep.subr.mxu0 %v539
    %3219 = vmatpush1.msra.mxu0 %v538
    %3220 = vmatprep.subr.mxu0 %v543
    %3221 = vmatpush1.msra.mxu0 %v542
    %3222 = vmatprep.subr.mxu0 %v547
    %3223 = vmatpush1.msra.mxu0 %v546
    %3224 = vmatprep.subr.mxu0 %v551
    %3225 = vmatpush1.msra.mxu0 %v550
    %3226 = vmatprep.subr.mxu0 %v555
    %3227 = vmatpush1.msra.mxu0 %v554
    %3228 = vmatprep.subr.mxu0 %v559
    %3229 = vmatpush1.msra.mxu0 %v558
    %3230 = vmatprep.subr.mxu0 %v563
    %3231 = vmatpush1.msra.mxu0 %v562
    %3232 = vmatprep.subr.mxu0 %v567
    %3233 = vmatpush1.msra.mxu0 %v566
    %3234 = vmatprep.mubr.f32.mxu0 %v2992
    %3235 = vmatmul.mubr.f32.gmra.mrb[0].mxu0 %v3169
    %v3236 = vpop.f32.mrb[0].mxu0
    %v3237 = vadd.f32 %v575, %v3236
    %v3238 = vpop.f32.mrb[0].mxu0
    %v3239 = vadd.f32 %v579, %v3238
    %3240 = vdwg.mxu0
    %3241 = vmatprep.subr.mxu0 %v445
    %3242 = vmatpush1.msra.mxu0 %v444
    %3243 = vmatprep.subr.mxu0 %v449
    %3244 = vmatpush1.msra.mxu0 %v448
    %3245 = vmatprep.subr.mxu0 %v453
    %3246 = vmatpush1.msra.mxu0 %v452
    %3247 = vmatprep.subr.mxu0 %v457
    %3248 = vmatpush1.msra.mxu0 %v456
    %3249 = vmatprep.subr.mxu0 %v461
    %3250 = vmatpush1.msra.mxu0 %v460
    %3251 = vmatprep.subr.mxu0 %v465
    %3252 = vmatpush1.msra.mxu0 %v464
    %3253 = vmatprep.subr.mxu0 %v469
    %3254 = vmatpush1.msra.mxu0 %v468
    %3255 = vmatprep.subr.mxu0 %v473
    %3256 = vmatpush1.msra.mxu0 %v472
    %3257 = vmatprep.subr.mxu0 %v477
    %3258 = vmatpush1.msra.mxu0 %v476
    %3259 = vmatprep.subr.mxu0 %v481
    %3260 = vmatpush1.msra.mxu0 %v480
    %3261 = vmatprep.subr.mxu0 %v485
    %3262 = vmatpush1.msra.mxu0 %v484
    %3263 = vmatprep.subr.mxu0 %v489
    %3264 = vmatpush1.msra.mxu0 %v488
    %3265 = vmatprep.subr.mxu0 %v493
    %3266 = vmatpush1.msra.mxu0 %v492
    %3267 = vmatprep.subr.mxu0 %v497
    %3268 = vmatpush1.msra.mxu0 %v496
    %3269 = vmatprep.subr.mxu0 %v501
    %3270 = vmatpush1.msra.mxu0 %v500
    %3271 = vmatprep.subr.mxu0 %v505
    %3272 = vmatpush1.msra.mxu0 %v504
    %3273 = vmatprep.subr.mxu0 %v509
    %3274 = vmatpush1.msra.mxu0 %v508
    %3275 = vmatprep.subr.mxu0 %v513
    %3276 = vmatpush1.msra.mxu0 %v512
    %3277 = vmatprep.subr.mxu0 %v517
    %3278 = vmatpush1.msra.mxu0 %v516
    %3279 = vmatprep.subr.mxu0 %v521
    %3280 = vmatpush1.msra.mxu0 %v520
    %3281 = vmatprep.subr.mxu0 %v525
    %3282 = vmatpush1.msra.mxu0 %v524
    %3283 = vmatprep.subr.mxu0 %v529
    %3284 = vmatpush1.msra.mxu0 %v528
    %3285 = vmatprep.subr.mxu0 %v533
    %3286 = vmatpush1.msra.mxu0 %v532
    %3287 = vmatprep.subr.mxu0 %v537
    %3288 = vmatpush1.msra.mxu0 %v536
    %3289 = vmatprep.subr.mxu0 %v541
    %3290 = vmatpush1.msra.mxu0 %v540
    %3291 = vmatprep.subr.mxu0 %v545
    %3292 = vmatpush1.msra.mxu0 %v544
    %3293 = vmatprep.subr.mxu0 %v549
    %3294 = vmatpush1.msra.mxu0 %v548
    %3295 = vmatprep.subr.mxu0 %v553
    %3296 = vmatpush1.msra.mxu0 %v552
    %3297 = vmatprep.subr.mxu0 %v557
    %3298 = vmatpush1.msra.mxu0 %v556
    %3299 = vmatprep.subr.mxu0 %v561
    %3300 = vmatpush1.msra.mxu0 %v560
    %3301 = vmatprep.subr.mxu0 %v565
    %3302 = vmatpush1.msra.mxu0 %v564
    %3303 = vmatprep.subr.mxu0 %v569
    %3304 = vmatpush1.msra.mxu0 %v568
    %3305 = vmatprep.mubr.f32.mxu0 %v2992
    %3306 = vmatmul.mubr.f32.gmra.mrb[0].mxu0 %v3169
    %v3307 = vpop.f32.mrb[0].mxu0
    %v3308 = vadd.f32 %v583, %v3307
    %v3309 = vpop.f32.mrb[0].mxu0
    %v3310 = vadd.f32 %v587, %v3309
    %3311 = vdwg.mxu0
    %v3312 = vxor.u32 %v3237, 2147483648
    %v3313 = vmul.f32 %v3312, 1.442695
    %v3314 = vpow.pop %v3313
    %v3315 = vadd.f32 %v3314, 1.0
    %v3316 = vrcp.pop %v3315
    %v3317 = vmul.f32 1.0, %v3316
    %v3318 = vxor.u32 %v3239, 2147483648
    %v3319 = vmul.f32 %v3318, 1.442695
    %v3320 = vpow.pop %v3319
    %v3321 = vadd.f32 %v3320, 1.0
    %v3322 = vrcp.pop %v3321
    %v3323 = vmul.f32 1.0, %v3322
    %v3324 = vtanh.pop %v3308
    %v3325 = vxor.u32 %v3310, 2147483648
    %v3326 = vmul.f32 %v3325, 1.442695
    %v3327 = vpow.pop %v3326
    %v3328 = vadd.f32 %v3327, 1.0
    %v3329 = vrcp.pop %v3328
    %v3330 = vmul.f32 1.0, %v3329
    %v3331 = vmul.f32 %v3323, %v2990
    %v3332 = vmul.f32 %v3317, %v3324
    %v3333 = vadd.f32 %v3331, %v3332
    %v3334 = vtanh.pop %v3333
    %v3335 = vmul.f32 %v3330, %v3334
    %v3336 = vld [vmem:[%s6] sm:$0xff]
    %v3337 = vld [vmem:[%s6 + $0x8] sm:$0xff]
    %v3338 = vld [vmem:[%s6 + $0x10] sm:$0xff]
    %v3339 = vld [vmem:[%s6 + $0x18] sm:$0xff]
    %v3340 = vld [vmem:[%s6 + $0x20] sm:$0xff]
    %v3341 = vld [vmem:[%s6 + $0x28] sm:$0xff]
    %v3342 = vld [vmem:[%s6 + $0x30] sm:$0xff]
    %v3343 = vld [vmem:[%s6 + $0x38] sm:$0xff]
    %v3344 = vld [vmem:[%s6 + $0x40] sm:$0xff]
    %v3345 = vld [vmem:[%s6 + $0x48] sm:$0xff]
    %v3346 = vld [vmem:[%s6 + $0x50] sm:$0xff]
    %v3347 = vld [vmem:[%s6 + $0x58] sm:$0xff]
    %v3348 = vld [vmem:[%s6 + $0x60] sm:$0xff]
    %v3349 = vld [vmem:[%s6 + $0x68] sm:$0xff]
    %v3350 = vld [vmem:[%s6 + $0x70] sm:$0xff]
    %v3351 = vld [vmem:[%s6 + $0x78] sm:$0xff]
    %v3352 = vld [vmem:[%s7] sm:$0x1]
    %v3354 = vlaneseq
    %v3355 = vshrl.u32 %v3354, 7
    %v3356 = vsub.s32 0, %v3355
    %v3357 = vrot.slane %v3352, %v3356
    %3359 = vmatprep.subr.mxu0 0.0
    %3360 = vmatpush1.msra.mxu0 %v3336
    %3361 = vmatprep.subr.mxu0 0.0
    %3362 = vmatpush1.msra.mxu0 %v3337
    %3363 = vmatprep.subr.mxu0 0.0
    %3364 = vmatpush1.msra.mxu0 %v3338
    %3365 = vmatprep.subr.mxu0 0.0
    %3366 = vmatpush1.msra.mxu0 %v3339
    %3367 = vmatprep.subr.mxu0 0.0
    %3368 = vmatpush1.msra.mxu0 %v3340
    %3369 = vmatprep.subr.mxu0 0.0
    %3370 = vmatpush1.msra.mxu0 %v3341
    %3371 = vmatprep.subr.mxu0 0.0
    %3372 = vmatpush1.msra.mxu0 %v3342
    %3373 = vmatprep.subr.mxu0 0.0
    %3374 = vmatpush1.msra.mxu0 %v3343
    %3375 = vmatprep.subr.mxu0 0.0
    %3376 = vmatpush1.msra.mxu0 %v3344
    %3377 = vmatprep.subr.mxu0 0.0
    %3378 = vmatpush1.msra.mxu0 %v3345
    %3379 = vmatprep.subr.mxu0 0.0
    %3380 = vmatpush1.msra.mxu0 %v3346
    %3381 = vmatprep.subr.mxu0 0.0
    %3382 = vmatpush1.msra.mxu0 %v3347
    %3383 = vmatprep.subr.mxu0 0.0
    %3384 = vmatpush1.msra.mxu0 %v3348
    %3385 = vmatprep.subr.mxu0 0.0
    %3386 = vmatpush1.msra.mxu0 %v3349
    %3387 = vmatprep.subr.mxu0 0.0
    %3388 = vmatpush1.msra.mxu0 %v3350
    %3389 = vmatprep.subr.mxu0 0.0
    %3390 = vmatpush1.msra.mxu0 %v3351
    %3391 = vmatprep.subr.mxu0 0.0
    %3392 = vmatpush1.msra.mxu0 0.0
    %3393 = vmatprep.subr.mxu0 0.0
    %3394 = vmatpush1.msra.mxu0 0.0
    %3395 = vmatprep.subr.mxu0 0.0
    %3396 = vmatpush1.msra.mxu0 0.0
    %3397 = vmatprep.subr.mxu0 0.0
    %3398 = vmatpush1.msra.mxu0 0.0
    %3399 = vmatprep.subr.mxu0 0.0
    %3400 = vmatpush1.msra.mxu0 0.0
    %3401 = vmatprep.subr.mxu0 0.0
    %3402 = vmatpush1.msra.mxu0 0.0
    %3403 = vmatprep.subr.mxu0 0.0
    %3404 = vmatpush1.msra.mxu0 0.0
    %3405 = vmatprep.subr.mxu0 0.0
    %3406 = vmatpush1.msra.mxu0 0.0
    %3407 = vmatprep.subr.mxu0 0.0
    %3408 = vmatpush1.msra.mxu0 0.0
    %3409 = vmatprep.subr.mxu0 0.0
    %3410 = vmatpush1.msra.mxu0 0.0
    %3411 = vmatprep.subr.mxu0 0.0
    %3412 = vmatpush1.msra.mxu0 0.0
    %3413 = vmatprep.subr.mxu0 0.0
    %3414 = vmatpush1.msra.mxu0 0.0
    %3415 = vmatprep.subr.mxu0 0.0
    %3416 = vmatpush1.msra.mxu0 0.0
    %3417 = vmatprep.subr.mxu0 0.0
    %3418 = vmatpush1.msra.mxu0 0.0
    %3419 = vmatprep.subr.mxu0 0.0
    %3420 = vmatpush1.msra.mxu0 0.0
    %3421 = vmatprep.subr.mxu0 0.0
    %3422 = vmatpush1.msra.mxu0 0.0
    %3423 = vmatprep.mubr.f32.mxu0 0.0
    %3424 = vmatmul.mubr.f32.gmra.mrb[0].mxu0 %v3335
    %v3425 = vpop.f32.mrb[0].mxu0
    %v3426 = vadd.f32 %v3357, %v3425
    %v3427 = vpop.f32.mrb[0].mxu0
    %3428 = vdwg.mxu0
    %3429 = vst [vmem:[%s8] sm:$0xff] %v3426
    // Predicated region
    $region42: #{rnn_forward.1} parent=1 // pred_check
      _
    $region43: #{rnn_forward.1} parent=1 // pred_check_branch
      %3431 = sbr.rel (0) target = $region45
    $region44: #{rnn_forward.1} parent=1 // pred_region
      _
    $region45: #{rnn_forward.1} parent=1 // pred_fallthru
      _
    // Predicated region
    $region46: #{rnn_forward.1} parent=1 // pred_check
      _
    $region47: #{rnn_forward.1} parent=1 // pred_check_branch
      %3433 = sbr.rel (0) target = $region49
    $region48: #{rnn_forward.1} parent=1 // pred_region
      _
    $region49: #{rnn_forward.1} parent=1 // pred_fallthru
      _
    %3434 = vsyncpa [#allocation4], 1
    %3435 = vsyncpa [#allocation6], 1

</llo_original>
